<compile_context>
chip_gen: v7x
topology: tpu7x:2x2x1
jax: 0.10.0
libtpu: 0.0.40
codegen_flags: <defaults>
</compile_context>

<pallas_src>
import functools

import jax
import jax.numpy as jnp
from jax.experimental import pallas as pl
from jax.experimental.pallas import tpu as pltpu


def _dc_grad_kernel(xr_ref, xi_ref, yr_ref, yi_ref,
                    cwT_ref, swT_ref, chT_ref, shT_ref, cw_ref, sw_ref,
                    gr_ref, gi_ref):
    """One K-tile of: forward separable NUFFT, k-space residual, adjoint separable NUFFT."""
    f32 = jnp.float32

    @pl.when(pl.program_id(0) == 0)
    def _init():
        gr_ref[...] = jnp.zeros_like(gr_ref)
        gi_ref[...] = jnp.zeros_like(gi_ref)

    xr = xr_ref[...]                      # (MH, W)  bf16, VMEM-resident across the K grid
    xi = xi_ref[...]
    cwT = cwT_ref[...]                    # (W, Kt)  bf16   cos(om1[k]*rw[w]) transposed
    swT = swT_ref[...]                    # (W, Kt)  bf16

    # ---- forward NUFFT, stage 1: contract W on the MXU (LHS has M*H rows) ----
    tr = (jnp.dot(xr, cwT, preferred_element_type=f32)
          + jnp.dot(xi, swT, preferred_element_type=f32))        # (MH, Kt)
    ti = (jnp.dot(xi, cwT, preferred_element_type=f32)
          - jnp.dot(xr, swT, preferred_element_type=f32))

    MH, Kt = tr.shape
    H = chT_ref.shape[0]                  # static
    M = MH // H
    chT = chT_ref[...]                    # (H, Kt)  f32    cos(om0[k]*rh[h]) transposed
    shT = shT_ref[...]                    # (H, Kt)  f32

    # ---- forward NUFFT, stage 2: combine e^{-i om0 rh}, reduce over H (VPU + sublane reduce)
    # (MH, Kt) -> (M, H, Kt) is layout-trivial when H % 8 == 0 (typical MRI grids).
    tr3 = tr.reshape(M, H, Kt)
    ti3 = ti.reshape(M, H, Kt)
    kr = jnp.sum(chT[None] * tr3 + shT[None] * ti3, axis=1)      # (M, Kt)
    ki = jnp.sum(chT[None] * ti3 - shT[None] * tr3, axis=1)

    # ---- k-space residual for this frequency tile ----
    rr = kr - yr_ref[...]                 # (M, Kt)
    ri = ki - yi_ref[...]

    # ---- adjoint NUFFT, stage 1: broadcast multiply by e^{+i om0 rh} (VPU) ----
    ur = (rr[:, None, :] * chT[None] - ri[:, None, :] * shT[None]).reshape(MH, Kt)
    ui = (rr[:, None, :] * shT[None] + ri[:, None, :] * chT[None]).reshape(MH, Kt)
    ur = ur.astype(jnp.bfloat16)
    ui = ui.astype(jnp.bfloat16)

    cw = cw_ref[...]                      # (Kt, W)  bf16   cos(om1[k]*rw[w])
    sw = sw_ref[...]                      # (Kt, W)  bf16

    # ---- adjoint NUFFT, stage 2: contract Kt on the MXU, accumulate into resident f32 out
    gr_ref[...] += (jnp.dot(ur, cw, preferred_element_type=f32)
                    - jnp.dot(ui, sw, preferred_element_type=f32))
    gi_ref[...] += (jnp.dot(ur, sw, preferred_element_type=f32)
                    + jnp.dot(ui, cw, preferred_element_type=f32))


@functools.partial(jax.jit, static_argnames=("im_size", "kt"))
def p2pcse_dc_gradient(x_data, omega, y_data, *, im_size, kt=256):
    """JAX wrapper mirroring P2PCSEDataConsistencyModule.forward(x, y).

    x_data : complex64 (B, C, H, W)   -- x.data  (NCHW image)
    omega  : float32   (2, K)         -- x.omega (k-space trajectory, radians/sample)
    y_data : complex64 (B, C, K)      -- y.data
    returns: 1-tuple (grad,), grad complex64 of shape (B, C, H, W)
    """
    B, C, H, W = x_data.shape
    assert (H, W) == tuple(im_size)
    K = omega.shape[1]
    M = B * C
    MH = M * H

    # K-tile size: multiple of 256 (native MXU push width on v6e/v7x; also fine on v5e).
    kt = max(256, (int(kt) // 256) * 256)
    Kp = ((K + kt - 1) // kt) * kt                 # pad K to a multiple of kt
    nsteps = Kp // kt

    # ---- separable phase factors (f32 transcendentals; cast to bf16 only AFTER cos/sin) ----
    om0 = omega[0].astype(jnp.float32)
    om1 = omega[1].astype(jnp.float32)
    rh = jnp.arange(H, dtype=jnp.float32) - H // 2     # centered grid coords
    rw = jnp.arange(W, dtype=jnp.float32) - W // 2
    ph_h = om0[:, None] * rh[None, :]                  # (K, H)
    ph_w = om1[:, None] * rw[None, :]                  # (K, W)
    ch, sh = jnp.cos(ph_h), jnp.sin(ph_h)
    cw, sw = jnp.cos(ph_w), jnp.sin(ph_w)

    padk = Kp - K
    if padk:                                           # zeroed factors => padded k contributes 0
        zH = jnp.zeros((padk, H), jnp.float32)
        zW = jnp.zeros((padk, W), jnp.float32)
        ch = jnp.concatenate([ch, zH]); sh = jnp.concatenate([sh, zH])
        cw = jnp.concatenate([cw, zW]); sw = jnp.concatenate([sw, zW])

    cwT = cw.T.astype(jnp.bfloat16)                    # (W, Kp)  forward-matmul RHS
    swT = sw.T.astype(jnp.bfloat16)
    chT = ch.T.astype(jnp.float32)                     # (H, Kp)  VPU combine factors
    shT = sh.T.astype(jnp.float32)
    cwb = cw.astype(jnp.bfloat16)                      # (Kp, W)  adjoint-matmul RHS
    swb = sw.astype(jnp.bfloat16)

    # ---- flatten complex image / k-space to real planes ----
    xr = jnp.real(x_data).reshape(MH, W).astype(jnp.bfloat16)
    xi = jnp.imag(x_data).reshape(MH, W).astype(jnp.bfloat16)
    yr = jnp.real(y_data).reshape(M, K).astype(jnp.float32)
    yi = jnp.imag(y_data).reshape(M, K).astype(jnp.float32)
    if padk:
        zy = jnp.zeros((M, padk), jnp.float32)
        yr = jnp.concatenate([yr, zy], axis=1)
        yi = jnp.concatenate([yi, zy], axis=1)

    # ---- specs: x & grad accumulators resident, everything else streamed over K tiles ----
    x_spec = pl.BlockSpec((MH, W), lambda k: (0, 0))
    y_spec = pl.BlockSpec((M, kt), lambda k: (0, k))
    wT_spec = pl.BlockSpec((W, kt), lambda k: (0, k))
    hT_spec = pl.BlockSpec((H, kt), lambda k: (0, k))
    w_spec = pl.BlockSpec((kt, W), lambda k: (k, 0))
    out_spec = pl.BlockSpec((MH, W), lambda k: (0, 0))

    # ---- VMEM budget & cost hint ----
    b16, b32 = 2, 4
    resident = 2 * MH * W * b16 + 2 * MH * W * b32                       # x + grad accumulators
    per_step = 2 * (2 * M * kt * b32                                     # y tiles (double-buffered)
                    + 2 * W * kt * b16 + 2 * H * kt * b32 + 2 * kt * W * b16)
    temps = 10 * MH * kt * b32                                           # tr/ti/ur/ui etc. (generous)
    vmem_limit = int(min(max((resident + per_step + temps) * 3 // 2, 32 * 2**20), 100 * 2**20))

    cost = pl.CostEstimate(
        flops=int(16 * MH * W * Kp + 16 * MH * Kp),
        transcendentals=0,
        bytes_accessed=int(2 * MH * W * b16 + 2 * M * Kp * b32
                           + (4 * W * b16 + 2 * H * b32) * Kp
                           + 2 * MH * W * b32),
    )

    gr, gi = pl.pallas_call(
        _dc_grad_kernel,
        out_shape=(jax.ShapeDtypeStruct((MH, W), jnp.float32),
                   jax.ShapeDtypeStruct((MH, W), jnp.float32)),
        grid=(nsteps,),
        in_specs=[x_spec, x_spec, y_spec, y_spec,
                  wT_spec, wT_spec, hT_spec, hT_spec, w_spec, w_spec],
        out_specs=(out_spec, out_spec),
        compiler_params=pltpu.CompilerParams(
            dimension_semantics=("arbitrary",),       # K axis is a reduction (revisited output)
            vmem_limit_bytes=vmem_limit),
        cost_estimate=cost,
    )(xr, xi, yr, yi, cwT, swT, chT, shT, cwb, swb)

    grad = (gr + 1j * gi).astype(jnp.complex64).reshape(B, C, H, W)
    return (grad,)   # mirror the tuple returned by torch.autograd.grad


def _reference(x_data, omega, y_data):
    """Pure-JAX reference: A^H(A x - y) with the same exact-DFT NUFFT (non-separable form)."""
    B, C, H, W = x_data.shape
    rh = jnp.arange(H, dtype=jnp.float32) - H // 2
    rw = jnp.arange(W, dtype=jnp.float32) - W // 2
    r0 = jnp.repeat(rh, W)
    r1 = jnp.tile(rw, H)
    phase = omega[0][:, None] * r0[None, :] + omega[1][:, None] * r1[None, :]   # (K, N)
    E = jnp.exp(-1j * phase.astype(jnp.complex64))                              # (K, N)
    xf = x_data.reshape(B * C, H * W)
    kx = xf @ E.T                                                               # (M, K)
    res = kx - y_data.reshape(B * C, -1)
    g = res @ jnp.conj(E)                                                       # (M, N)
    return g.reshape(B, C, H, W)


if __name__ == "__main__":
    # Small deterministic shapes consistent with the module's forward:
    # image x.data (B, C, H, W) complex, trajectory x.omega (2, K), k-space y.data (B, C, K).
    B, C, H, W, K = 2, 4, 16, 16, 512
    key = jax.random.PRNGKey(0)
    k1, k2, k3, k4, k5 = jax.random.split(key, 5)

    x_data = (jax.random.normal(k1, (B, C, H, W), jnp.float32)
              + 1j * jax.random.normal(k2, (B, C, H, W), jnp.float32)).astype(jnp.complex64)
    omega = jax.random.uniform(k3, (2, K), jnp.float32, minval=-jnp.pi, maxval=jnp.pi)
    y_data = (jax.random.normal(k4, (B, C, K), jnp.float32)
              + 1j * jax.random.normal(k5, (B, C, K), jnp.float32)).astype(jnp.complex64)

    (grad,) = p2pcse_dc_gradient(x_data, omega, y_data, im_size=(H, W))
    grad = jax.block_until_ready(grad)

    ref = _reference(x_data, omega, y_data)
    assert grad.shape == (B, C, H, W) and grad.dtype == jnp.complex64
    rel_err = jnp.linalg.norm(grad - ref) / jnp.linalg.norm(ref)
    # bf16 matmul operands (f32 accumulation) -> ~0.5% relative error expected.
    assert float(rel_err) < 2e-2, f"mismatch vs pure-JAX reference: rel_err={float(rel_err)}"

    print("KERNEL_OK")
</pallas_src>

<mosaic_0001>
module attributes {stable_mosaic.version = 11 : i64} {
  func.func @_dc_grad_kernel(%arg0: i32, %arg1: memref<128x16xbf16, #tpu.memory_space<vmem>>, %arg2: memref<128x16xbf16, #tpu.memory_space<vmem>>, %arg3: memref<8x256xf32, #tpu.memory_space<vmem>>, %arg4: memref<8x256xf32, #tpu.memory_space<vmem>>, %arg5: memref<16x256xbf16, #tpu.memory_space<vmem>>, %arg6: memref<16x256xbf16, #tpu.memory_space<vmem>>, %arg7: memref<16x256xf32, #tpu.memory_space<vmem>>, %arg8: memref<16x256xf32, #tpu.memory_space<vmem>>, %arg9: memref<256x16xbf16, #tpu.memory_space<vmem>>, %arg10: memref<256x16xbf16, #tpu.memory_space<vmem>>, %arg11: memref<128x16xf32, #tpu.memory_space<vmem>>, %arg12: memref<128x16xf32, #tpu.memory_space<vmem>>) attributes {dimension_semantics = [#tpu.dimension_semantics<arbitrary>], iteration_bounds = array<i64: 2>, scalar_prefetch = 0 : i64, scratch_operands = 0 : i64, tpu.core_type = #tpu.core_type<tc>, window_params = [{pipeline_mode = #tpu.pipeline_mode<synchronous>, transform_indices = @transform_0, window_bounds = array<i64: 128, 16>}, {pipeline_mode = #tpu.pipeline_mode<synchronous>, transform_indices = @transform_1, window_bounds = array<i64: 128, 16>}, {transform_indices = @transform_2, window_bounds = array<i64: 8, 256>}, {transform_indices = @transform_3, window_bounds = array<i64: 8, 256>}, {transform_indices = @transform_4, window_bounds = array<i64: 16, 256>}, {transform_indices = @transform_5, window_bounds = array<i64: 16, 256>}, {transform_indices = @transform_6, window_bounds = array<i64: 16, 256>}, {transform_indices = @transform_7, window_bounds = array<i64: 16, 256>}, {transform_indices = @transform_8, window_bounds = array<i64: 256, 16>}, {transform_indices = @transform_9, window_bounds = array<i64: 256, 16>}, {pipeline_mode = #tpu.pipeline_mode<synchronous>, transform_indices = @transform_10, window_bounds = array<i64: 128, 16>}, {pipeline_mode = #tpu.pipeline_mode<synchronous>, transform_indices = @transform_11, window_bounds = array<i64: 128, 16>}]} {
    %c0_i32 = arith.constant 0 : i32
    %0 = arith.cmpi eq, %arg0, %c0_i32 : i32
    %1 = arith.extui %0 : i1 to i32
    %c0_i32_0 = arith.constant 0 : i32
    %2 = arith.cmpi ne, %1, %c0_i32_0 : i32
    scf.if %2 {
      %cst_37 = arith.constant 0.000000e+00 : f32
      %77 = vector.broadcast %cst_37 : f32 to vector<128x16xf32>
      %c0_38 = arith.constant 0 : index
      %c0_39 = arith.constant 0 : index
      %78 = vector.load %arg11[%c0_38, %c0_39] : memref<128x16xf32, #tpu.memory_space<vmem>>, vector<128x16xf32>
      tpu.vector_store %arg11[%c0_38, %c0_39], %77 {strides = array<i32>} : memref<128x16xf32, #tpu.memory_space<vmem>>, vector<128x16xf32>,
      %cst_40 = arith.constant 0.000000e+00 : f32
      %79 = vector.broadcast %cst_40 : f32 to vector<128x16xf32>
      %c0_41 = arith.constant 0 : index
      %c0_42 = arith.constant 0 : index
      %80 = vector.load %arg12[%c0_41, %c0_42] : memref<128x16xf32, #tpu.memory_space<vmem>>, vector<128x16xf32>
      tpu.vector_store %arg12[%c0_41, %c0_42], %79 {strides = array<i32>} : memref<128x16xf32, #tpu.memory_space<vmem>>, vector<128x16xf32>,
    } else {
    }
    %c0 = arith.constant 0 : index
    %c0_1 = arith.constant 0 : index
    %3 = vector.load %arg1[%c0, %c0_1] : memref<128x16xbf16, #tpu.memory_space<vmem>>, vector<128x16xbf16>
    %c0_2 = arith.constant 0 : index
    %c0_3 = arith.constant 0 : index
    %4 = vector.load %arg2[%c0_2, %c0_3] : memref<128x16xbf16, #tpu.memory_space<vmem>>, vector<128x16xbf16>
    %c0_4 = arith.constant 0 : index
    %c0_5 = arith.constant 0 : index
    %5 = vector.load %arg5[%c0_4, %c0_5] : memref<16x256xbf16, #tpu.memory_space<vmem>>, vector<16x256xbf16>
    %c0_6 = arith.constant 0 : index
    %c0_7 = arith.constant 0 : index
    %6 = vector.load %arg6[%c0_6, %c0_7] : memref<16x256xbf16, #tpu.memory_space<vmem>>, vector<16x256xbf16>
    %cst = arith.constant dense<0.000000e+00> : vector<128x256xf32>
    %7 = tpu.matmul %3, %5, %cst {dimension_numbers = #tpu.dot_dimension_numbers<[1], [0], [0], [1], [0, 0, 1, 1], [], []>} : vector<128x16xbf16>, vector<16x256xbf16>, vector<128x256xf32> -> vector<128x256xf32>
    %cst_8 = arith.constant dense<0.000000e+00> : vector<128x256xf32>
    %8 = tpu.matmul %4, %6, %cst_8 {dimension_numbers = #tpu.dot_dimension_numbers<[1], [0], [0], [1], [0, 0, 1, 1], [], []>} : vector<128x16xbf16>, vector<16x256xbf16>, vector<128x256xf32> -> vector<128x256xf32>
    %9 = arith.addf %7, %8 : vector<128x256xf32>
    %cst_9 = arith.constant dense<0.000000e+00> : vector<128x256xf32>
    %10 = tpu.matmul %4, %5, %cst_9 {dimension_numbers = #tpu.dot_dimension_numbers<[1], [0], [0], [1], [0, 0, 1, 1], [], []>} : vector<128x16xbf16>, vector<16x256xbf16>, vector<128x256xf32> -> vector<128x256xf32>
    %cst_10 = arith.constant dense<0.000000e+00> : vector<128x256xf32>
    %11 = tpu.matmul %3, %6, %cst_10 {dimension_numbers = #tpu.dot_dimension_numbers<[1], [0], [0], [1], [0, 0, 1, 1], [], []>} : vector<128x16xbf16>, vector<16x256xbf16>, vector<128x256xf32> -> vector<128x256xf32>
    %12 = arith.subf %10, %11 : vector<128x256xf32>
    %c0_11 = arith.constant 0 : index
    %c0_12 = arith.constant 0 : index
    %13 = vector.load %arg7[%c0_11, %c0_12] : memref<16x256xf32, #tpu.memory_space<vmem>>, vector<16x256xf32>
    %c0_13 = arith.constant 0 : index
    %c0_14 = arith.constant 0 : index
    %14 = vector.load %arg8[%c0_13, %c0_14] : memref<16x256xf32, #tpu.memory_space<vmem>>, vector<16x256xf32>
    %15 = vector.shape_cast %9 : vector<128x256xf32> to vector<8x16x256xf32>
    %16 = vector.shape_cast %12 : vector<128x256xf32> to vector<8x16x256xf32>
    %17 = vector.shape_cast %13 : vector<16x256xf32> to vector<1x16x256xf32>
    %18 = vector.broadcast %17 : vector<1x16x256xf32> to vector<8x16x256xf32>
    %19 = arith.mulf %18, %15 : vector<8x16x256xf32>
    %20 = vector.shape_cast %14 : vector<16x256xf32> to vector<1x16x256xf32>
    %21 = vector.broadcast %20 : vector<1x16x256xf32> to vector<8x16x256xf32>
    %22 = arith.mulf %21, %16 : vector<8x16x256xf32>
    %23 = arith.addf %19, %22 : vector<8x16x256xf32>
    %cst_15 = arith.constant dense<0.000000e+00> : vector<8x256xf32>
    %24 = vector.multi_reduction <add>, %23, %cst_15 [1] : vector<8x16x256xf32> to vector<8x256xf32>
    %25 = vector.shape_cast %13 : vector<16x256xf32> to vector<1x16x256xf32>
    %26 = vector.broadcast %25 : vector<1x16x256xf32> to vector<8x16x256xf32>
    %27 = arith.mulf %26, %16 : vector<8x16x256xf32>
    %28 = vector.shape_cast %14 : vector<16x256xf32> to vector<1x16x256xf32>
    %29 = vector.broadcast %28 : vector<1x16x256xf32> to vector<8x16x256xf32>
    %30 = arith.mulf %29, %15 : vector<8x16x256xf32>
    %31 = arith.subf %27, %30 : vector<8x16x256xf32>
    %cst_16 = arith.constant dense<0.000000e+00> : vector<8x256xf32>
    %32 = vector.multi_reduction <add>, %31, %cst_16 [1] : vector<8x16x256xf32> to vector<8x256xf32>
    %c0_17 = arith.constant 0 : index
    %c0_18 = arith.constant 0 : index
    %33 = vector.load %arg3[%c0_17, %c0_18] : memref<8x256xf32, #tpu.memory_space<vmem>>, vector<8x256xf32>
    %34 = arith.subf %24, %33 : vector<8x256xf32>
    %c0_19 = arith.constant 0 : index
    %c0_20 = arith.constant 0 : index
    %35 = vector.load %arg4[%c0_19, %c0_20] : memref<8x256xf32, #tpu.memory_space<vmem>>, vector<8x256xf32>
    %36 = arith.subf %32, %35 : vector<8x256xf32>
    %37 = vector.shape_cast %34 : vector<8x256xf32> to vector<8x1x256xf32>
    %38 = vector.shape_cast %13 : vector<16x256xf32> to vector<1x16x256xf32>
    %39 = vector.broadcast %37 : vector<8x1x256xf32> to vector<8x16x256xf32>
    %40 = vector.broadcast %38 : vector<1x16x256xf32> to vector<8x16x256xf32>
    %41 = arith.mulf %39, %40 : vector<8x16x256xf32>
    %42 = vector.shape_cast %36 : vector<8x256xf32> to vector<8x1x256xf32>
    %43 = vector.shape_cast %14 : vector<16x256xf32> to vector<1x16x256xf32>
    %44 = vector.broadcast %42 : vector<8x1x256xf32> to vector<8x16x256xf32>
    %45 = vector.broadcast %43 : vector<1x16x256xf32> to vector<8x16x256xf32>
    %46 = arith.mulf %44, %45 : vector<8x16x256xf32>
    %47 = arith.subf %41, %46 : vector<8x16x256xf32>
    %48 = vector.shape_cast %47 : vector<8x16x256xf32> to vector<128x256xf32>
    %49 = vector.shape_cast %34 : vector<8x256xf32> to vector<8x1x256xf32>
    %50 = vector.shape_cast %14 : vector<16x256xf32> to vector<1x16x256xf32>
    %51 = vector.broadcast %49 : vector<8x1x256xf32> to vector<8x16x256xf32>
    %52 = vector.broadcast %50 : vector<1x16x256xf32> to vector<8x16x256xf32>
    %53 = arith.mulf %51, %52 : vector<8x16x256xf32>
    %54 = vector.shape_cast %36 : vector<8x256xf32> to vector<8x1x256xf32>
    %55 = vector.shape_cast %13 : vector<16x256xf32> to vector<1x16x256xf32>
    %56 = vector.broadcast %54 : vector<8x1x256xf32> to vector<8x16x256xf32>
    %57 = vector.broadcast %55 : vector<1x16x256xf32> to vector<8x16x256xf32>
    %58 = arith.mulf %56, %57 : vector<8x16x256xf32>
    %59 = arith.addf %53, %58 : vector<8x16x256xf32>
    %60 = vector.shape_cast %59 : vector<8x16x256xf32> to vector<128x256xf32>
    %61 = arith.truncf %48 : vector<128x256xf32> to vector<128x256xbf16>
    %62 = arith.truncf %60 : vector<128x256xf32> to vector<128x256xbf16>
    %c0_21 = arith.constant 0 : index
    %c0_22 = arith.constant 0 : index
    %63 = vector.load %arg9[%c0_21, %c0_22] : memref<256x16xbf16, #tpu.memory_space<vmem>>, vector<256x16xbf16>
    %c0_23 = arith.constant 0 : index
    %c0_24 = arith.constant 0 : index
    %64 = vector.load %arg10[%c0_23, %c0_24] : memref<256x16xbf16, #tpu.memory_space<vmem>>, vector<256x16xbf16>
    %c0_25 = arith.constant 0 : index
    %c0_26 = arith.constant 0 : index
    %65 = vector.load %arg11[%c0_25, %c0_26] : memref<128x16xf32, #tpu.memory_space<vmem>>, vector<128x16xf32>
    %cst_27 = arith.constant dense<0.000000e+00> : vector<128x16xf32>
    %66 = tpu.matmul %61, %63, %cst_27 {dimension_numbers = #tpu.dot_dimension_numbers<[1], [0], [0], [1], [0, 0, 1, 1], [], []>} : vector<128x256xbf16>, vector<256x16xbf16>, vector<128x16xf32> -> vector<128x16xf32>
    %cst_28 = arith.constant dense<0.000000e+00> : vector<128x16xf32>
    %67 = tpu.matmul %62, %64, %cst_28 {dimension_numbers = #tpu.dot_dimension_numbers<[1], [0], [0], [1], [0, 0, 1, 1], [], []>} : vector<128x256xbf16>, vector<256x16xbf16>, vector<128x16xf32> -> vector<128x16xf32>
    %68 = arith.subf %66, %67 : vector<128x16xf32>
    %69 = arith.addf %65, %68 : vector<128x16xf32>
    %c0_29 = arith.constant 0 : index
    %c0_30 = arith.constant 0 : index
    %70 = vector.load %arg11[%c0_29, %c0_30] : memref<128x16xf32, #tpu.memory_space<vmem>>, vector<128x16xf32>
    tpu.vector_store %arg11[%c0_29, %c0_30], %69 {strides = array<i32>} : memref<128x16xf32, #tpu.memory_space<vmem>>, vector<128x16xf32>,
    %c0_31 = arith.constant 0 : index
    %c0_32 = arith.constant 0 : index
    %71 = vector.load %arg12[%c0_31, %c0_32] : memref<128x16xf32, #tpu.memory_space<vmem>>, vector<128x16xf32>
    %cst_33 = arith.constant dense<0.000000e+00> : vector<128x16xf32>
    %72 = tpu.matmul %61, %64, %cst_33 {dimension_numbers = #tpu.dot_dimension_numbers<[1], [0], [0], [1], [0, 0, 1, 1], [], []>} : vector<128x256xbf16>, vector<256x16xbf16>, vector<128x16xf32> -> vector<128x16xf32>
    %cst_34 = arith.constant dense<0.000000e+00> : vector<128x16xf32>
    %73 = tpu.matmul %62, %63, %cst_34 {dimension_numbers = #tpu.dot_dimension_numbers<[1], [0], [0], [1], [0, 0, 1, 1], [], []>} : vector<128x256xbf16>, vector<256x16xbf16>, vector<128x16xf32> -> vector<128x16xf32>
    %74 = arith.addf %72, %73 : vector<128x16xf32>
    %75 = arith.addf %71, %74 : vector<128x16xf32>
    %c0_35 = arith.constant 0 : index
    %c0_36 = arith.constant 0 : index
    %76 = vector.load %arg12[%c0_35, %c0_36] : memref<128x16xf32, #tpu.memory_space<vmem>>, vector<128x16xf32>
    tpu.vector_store %arg12[%c0_35, %c0_36], %75 {strides = array<i32>} : memref<128x16xf32, #tpu.memory_space<vmem>>, vector<128x16xf32>,
    return
  }
  func.func @transform_0(%arg0: i32) -> (i32, i32) {
    %c0_i32 = arith.constant 0 : i32
    %c0_i32_0 = arith.constant 0 : i32
    %c0_i32_1 = arith.constant 0 : i32
    return %c0_i32, %c0_i32_0 : i32, i32
  }
  func.func @transform_1(%arg0: i32) -> (i32, i32) {
    %c0_i32 = arith.constant 0 : i32
    %c0_i32_0 = arith.constant 0 : i32
    %c0_i32_1 = arith.constant 0 : i32
    return %c0_i32, %c0_i32_0 : i32, i32
  }
  func.func @transform_2(%arg0: i32) -> (i32, i32) {
    %c0_i32 = arith.constant 0 : i32
    %c0_i32_0 = arith.constant 0 : i32
    return %c0_i32, %arg0 : i32, i32
  }
  func.func @transform_3(%arg0: i32) -> (i32, i32) {
    %c0_i32 = arith.constant 0 : i32
    %c0_i32_0 = arith.constant 0 : i32
    return %c0_i32, %arg0 : i32, i32
  }
  func.func @transform_4(%arg0: i32) -> (i32, i32) {
    %c0_i32 = arith.constant 0 : i32
    %c0_i32_0 = arith.constant 0 : i32
    return %c0_i32, %arg0 : i32, i32
  }
  func.func @transform_5(%arg0: i32) -> (i32, i32) {
    %c0_i32 = arith.constant 0 : i32
    %c0_i32_0 = arith.constant 0 : i32
    return %c0_i32, %arg0 : i32, i32
  }
  func.func @transform_6(%arg0: i32) -> (i32, i32) {
    %c0_i32 = arith.constant 0 : i32
    %c0_i32_0 = arith.constant 0 : i32
    return %c0_i32, %arg0 : i32, i32
  }
  func.func @transform_7(%arg0: i32) -> (i32, i32) {
    %c0_i32 = arith.constant 0 : i32
    %c0_i32_0 = arith.constant 0 : i32
    return %c0_i32, %arg0 : i32, i32
  }
  func.func @transform_8(%arg0: i32) -> (i32, i32) {
    %c0_i32 = arith.constant 0 : i32
    %c0_i32_0 = arith.constant 0 : i32
    return %arg0, %c0_i32 : i32, i32
  }
  func.func @transform_9(%arg0: i32) -> (i32, i32) {
    %c0_i32 = arith.constant 0 : i32
    %c0_i32_0 = arith.constant 0 : i32
    return %arg0, %c0_i32 : i32, i32
  }
  func.func @transform_10(%arg0: i32) -> (i32, i32) {
    %c0_i32 = arith.constant 0 : i32
    %c0_i32_0 = arith.constant 0 : i32
    %c0_i32_1 = arith.constant 0 : i32
    return %c0_i32, %c0_i32_0 : i32, i32
  }
  func.func @transform_11(%arg0: i32) -> (i32, i32) {
    %c0_i32 = arith.constant 0 : i32
    %c0_i32_0 = arith.constant 0 : i32
    %c0_i32_1 = arith.constant 0 : i32
    return %c0_i32, %c0_i32_0 : i32, i32
  }
}

</mosaic_0001>

<llo_original>
// kernel: custom-call.3
$region0: #{custom-call.3}
  %s0 = inlined_call_operand.hbm [shape: c64[2,4,512], index: 0, kind: input, shape index: {}]
  %s1 = inlined_call_operand.vmem [shape: f32[2,4,512], index: 1, kind: output, shape index: {}]
  %s2 = scalar_lea.hbm %s0, 512
  $region1: #{custom-call.3} parent=0
    #allocation0 [shape = 's32[1]{0}', space=sflag, size = 0x4, scoped, tag = 'scoped memory for custom-call.3']
    %3 = vsyncpa [#allocation0], 0
    %s4 = sshll.u32 %s1, 4
    %s5 = int_to_ptr.vmem [resolvable:$true] %s4
    %7 = dma.hbm_to_vmem [thread:$0]  %s2, 512, %s5, [#allocation0]
    %8 = dma.done [#allocation0], 512
    %9 = vsyncpa [#allocation0], 1

// kernel: custom-call.2
$region0: #{custom-call.2}
  %s0 = inlined_call_operand.hbm [shape: c64[2,4,512], index: 0, kind: input, shape index: {}]
  %s1 = inlined_call_operand.vmem [shape: f32[2,4,512], index: 1, kind: output, shape index: {}]
  $region1: #{custom-call.2} parent=0
    #allocation0 [shape = 's32[1]{0}', space=sflag, size = 0x4, scoped, tag = 'scoped memory for custom-call.2']
    %2 = vsyncpa [#allocation0], 0
    %s3 = sshll.u32 %s1, 4
    %s4 = int_to_ptr.vmem [resolvable:$true] %s3
    %6 = dma.hbm_to_vmem [thread:$0]  %s0, 512, %s4, [#allocation0]
    %7 = dma.done [#allocation0], 512
    %8 = vsyncpa [#allocation0], 1

// kernel: custom-call.1
$region0: #{custom-call.1}
  %s0 = inlined_call_operand.hbm [shape: c64[2,4,16,16], index: 0, kind: input, shape index: {}]
  %s1 = inlined_call_operand.vmem [shape: f32[2,4,16,16], index: 1, kind: output, shape index: {}]
  %s2 = scalar_lea.hbm %s0, 2048
  $region1: #{custom-call.1} parent=0
    #allocation0 [shape = 's32[1]{0}', space=sflag, size = 0x4, scoped, tag = 'scoped memory for custom-call.1']
    %3 = vsyncpa [#allocation0], 0
    %s4 = sshll.u32 %s1, 4
    %s5 = int_to_ptr.vmem [resolvable:$true] %s4
    %7 = dma.hbm_to_vmem [thread:$0]  %s2, 2048, %s5, [#allocation0]
    %8 = dma.done [#allocation0], 2048
    %9 = vsyncpa [#allocation0], 1

// kernel: custom-call
$region0: #{custom-call}
  %s0 = inlined_call_operand.hbm [shape: c64[2,4,16,16], index: 0, kind: input, shape index: {}]
  %s1 = inlined_call_operand.vmem [shape: f32[2,4,16,16], index: 1, kind: output, shape index: {}]
  $region1: #{custom-call} parent=0
    #allocation0 [shape = 's32[1]{0}', space=sflag, size = 0x4, scoped, tag = 'scoped memory for custom-call']
    %2 = vsyncpa [#allocation0], 0
    %s3 = sshll.u32 %s1, 4
    %s4 = int_to_ptr.vmem [resolvable:$true] %s3
    %6 = dma.hbm_to_vmem [thread:$0]  %s0, 2048, %s4, [#allocation0]
    %7 = dma.done [#allocation0], 2048
    %8 = vsyncpa [#allocation0], 1

// kernel: custom-call.4
$region0: #{custom-call.4}
  %s0 = inlined_call_operand.vmem [shape: f32[2,4,16,16], index: 0, kind: input, shape index: {}]
  %s1 = inlined_call_operand.vmem [shape: f32[2,4,16,16], index: 1, kind: input, shape index: {}]
  %s2 = inlined_call_operand.hbm [shape: c64[2,4,16,16], index: 2, kind: output, shape index: {}]
  %s3 = scalar_lea.hbm %s2, 2048
  $region1: #{custom-call.4} parent=0
    #allocation0 [shape = 's32[1]{0}', space=sflag, size = 0x4, scoped, tag = 'scoped memory for custom-call.4']
    %4 = vsyncpa [#allocation0], 0
    %s5 = sshll.u32 %s0, 4
    %s6 = int_to_ptr.vmem [resolvable:$true] %s5
    %8 = dma.vmem_to_hbm [thread:$0]  %s6, 2048, %s2, [#allocation0]
    %9 = dma.done [#allocation0], 2048
    %10 = vsyncpa [#allocation0], 1
  $region2: #{custom-call.4} parent=0
    #allocation1 [shape = 's32[1]{0}', space=sflag, size = 0x4, scoped, tag = 'scoped memory for custom-call.4']
    %11 = vsyncpa [#allocation1], 0
    %s12 = sshll.u32 %s1, 4
    %s13 = int_to_ptr.vmem [resolvable:$true] %s12
    %15 = dma.vmem_to_hbm [thread:$0]  %s13, 2048, %s3, [#allocation1]
    %16 = dma.done [#allocation1], 2048
    %17 = vsyncpa [#allocation1], 1

// kernel: p2pcse_dc_gradient.1
$region0: #{p2pcse_dc_gradient.1}
  #allocation0 [shape = 'u32[]', space=smem, size = 0x4, offset = 0x4, fixed_abs, tag = 'smem constant byte address 0x4 - core index']
  #allocation1 [shape = 'u32[144,128]{1,0:T(1,128)}', space=vmem, size = 0x12000, scoped, tag = 'internal scratch']
  %s0 = inlined_call_operand.vmem [shape: bf16[128,16], index: 0, kind: input, shape index: {}]
  %s1 = inlined_call_operand.vmem [shape: bf16[128,16], index: 1, kind: input, shape index: {}]
  %s2 = inlined_call_operand.vmem [shape: f32[8,512], index: 2, kind: input, shape index: {}]
  %s3 = inlined_call_operand.vmem [shape: f32[8,512], index: 3, kind: input, shape index: {}]
  %s4 = inlined_call_operand.vmem [shape: bf16[16,512], index: 4, kind: input, shape index: {}]
  %s5 = inlined_call_operand.vmem [shape: bf16[16,512], index: 5, kind: input, shape index: {}]
  %s6 = inlined_call_operand.vmem [shape: f32[16,512], index: 6, kind: input, shape index: {}]
  %s7 = inlined_call_operand.vmem [shape: f32[16,512], index: 7, kind: input, shape index: {}]
  %s8 = inlined_call_operand.vmem [shape: bf16[512,16], index: 8, kind: input, shape index: {}]
  %s9 = inlined_call_operand.vmem [shape: bf16[512,16], index: 9, kind: input, shape index: {}]
  %s10 = inlined_call_operand.vmem [shape: f32[128,16], index: 10, kind: output, shape index: {0}]
  %s11 = inlined_call_operand.vmem [shape: f32[128,16], index: 11, kind: output, shape index: {1}]
  %12 = xla_tuple %s10, %s11
  %s13 = sld [smem:[#allocation0]]
  $region207: #{p2pcse_dc_gradient.1} parent=0
    _
  %s15 = ssub.s32 1, %s13
  %s16 = scalar_select 0, %s15, %s13
  $region1: #{p2pcse_dc_gradient.1} parent=0
    #allocation2 [shape = 'u8[16384]{0}', space=vmem, size = 0x4000, scoped, tag = 'input window, operand 4']
    #allocation3 [shape = 'u8[16384]{0}', space=vmem, size = 0x4000, scoped, tag = 'input window, operand 5']
    #allocation4 [shape = 'u8[32768]{0}', space=vmem, size = 0x8000, scoped, tag = 'input window, operand 6']
    #allocation5 [shape = 'u8[32768]{0}', space=vmem, size = 0x8000, scoped, tag = 'input window, operand 7']
    loop: start=0, step=1, limit=4
    $region2: #{p2pcse_dc_gradient.1} parent=1 // loop_pre_header
      _
    $region3: #{p2pcse_dc_gradient.1} parent=1 // loop_header
      %s18 = sphi 0, %s22
      %p19 = scmp.ge.s32.totalorder %s18, 4
      %s26 = sphi 0, %s26
      %s28 = sphi 0, %s26
      %s29 = sphi 0, %s28
      %s43 = sphi 0, %s29
      %s47 = sphi 0, %s47
      %s49 = sphi 0, %s47
      %s50 = sphi 0, %s49
      %s64 = sphi 0, %s50
      %s70 = sphi 0, %s72
      %s73 = sphi 0, %s70
      %s74 = sphi 0, %s73
      %s90 = sphi 0, %s74
      %s96 = sphi 0, %s98
      %s99 = sphi 0, %s96
      %s100 = sphi 0, %s99
      %s116 = sphi 0, %s100
      %s122 = sphi 0, %s124
      %s125 = sphi 0, %s122
      %s126 = sphi 0, %s125
      %s142 = sphi 0, %s126
      %s148 = sphi 0, %s150
      %s151 = sphi 0, %s148
      %s152 = sphi 0, %s151
      %s168 = sphi 0, %s152
      %s174 = sphi 0, %s176
      %s177 = sphi 0, %s174
      %s178 = sphi 0, %s177
      %s194 = sphi 0, %s178
      %s200 = sphi 0, %s202
      %s203 = sphi 0, %s200
      %s204 = sphi 0, %s203
      %s220 = sphi 0, %s204
      %s226 = sphi 0, %s228
      %s229 = sphi 0, %s226
      %s230 = sphi 0, %s229
      %s246 = sphi 0, %s230
      %s252 = sphi 0, %s254
      %s255 = sphi 0, %s252
      %s256 = sphi 0, %s255
      %s272 = sphi 0, %s256
      %s276 = sphi 0, %s276
      %s278 = sphi 0, %s276
      %s279 = sphi 0, %s278
      %s293 = sphi 0, %s279
      %s297 = sphi 0, %s297
      %s299 = sphi 0, %s297
      %s300 = sphi 0, %s299
      %s314 = sphi 0, %s300
    $region4: #{p2pcse_dc_gradient.1} parent=1 // loop_header_branch
      %21 = sbr.rel (%p19) target = $region8
    $region5: #{p2pcse_dc_gradient.1} parent=1 // loop_body
      %s23 = ssub.s32 %s18, 1
      %s24 = ssub.s32 %s18, 2
      %s25 = sadd.s32 %s18, 1
      %s27 = sadd.s32 %s26, 1
      %p30 = scmp.eq.s32.totalorder %s18, 1
      %p31 = scmp.ne.s32.totalorder %s26, %s28
      %p32 = scmp.eq.s32.totalorder %s18, 0
      %p33 = por %p31, %p32
      %p34 = scmp.ne.s32.totalorder %s26, %s28
      %p35 = scmp.eq.s32.totalorder %s23, 1
      %p36 = por %p34, %p35
      %p37 = scmp.ne.s32.totalorder %s28, %s29
      %p38 = scmp.eq.s32.totalorder %s23, 0
      %p39 = por %p37, %p38
      %p40 = scmp.ne.s32.totalorder %s28, %s29
      %p41 = scmp.eq.s32.totalorder %s24, 1
      %p42 = por %p40, %p41
      %p44 = scmp.ne.s32.totalorder %s29, %s43
      %p45 = scmp.eq.s32.totalorder %s24, 0
      %p46 = por %p44, %p45
      %s48 = sadd.s32 %s47, 1
      %p51 = scmp.eq.s32.totalorder %s18, 1
      %p52 = scmp.ne.s32.totalorder %s47, %s49
      %p53 = scmp.eq.s32.totalorder %s18, 0
      %p54 = por %p52, %p53
      %p55 = scmp.ne.s32.totalorder %s47, %s49
      %p56 = scmp.eq.s32.totalorder %s23, 1
      %p57 = por %p55, %p56
      %p58 = scmp.ne.s32.totalorder %s49, %s50
      %p59 = scmp.eq.s32.totalorder %s23, 0
      %p60 = por %p58, %p59
      %p61 = scmp.ne.s32.totalorder %s49, %s50
      %p62 = scmp.eq.s32.totalorder %s24, 1
      %p63 = por %p61, %p62
      %p65 = scmp.ne.s32.totalorder %s50, %s64
      %p66 = scmp.eq.s32.totalorder %s24, 0
      %p67 = por %p65, %p66
      %s68 = ssub.s32 %s18, %s25
      %p69 = scmp.eq.s32.totalorder %s68, 0
      %s71 = sadd.s32 %s70, 1
      %s72 = scalar_select %p69, %s70, %s71
      %p75 = pneg %p69
      %p76 = scmp.eq.s32.totalorder %s18, 1
      %p77 = por %p75, %p76
      %p78 = scmp.ne.s32.totalorder %s70, %s73
      %p79 = scmp.eq.s32.totalorder %s18, 0
      %p80 = por %p78, %p79
      %p81 = scmp.ne.s32.totalorder %s70, %s73
      %p82 = scmp.eq.s32.totalorder %s23, 1
      %p83 = por %p81, %p82
      %p84 = scmp.ne.s32.totalorder %s73, %s74
      %p85 = scmp.eq.s32.totalorder %s23, 0
      %p86 = por %p84, %p85
      %p87 = scmp.ne.s32.totalorder %s73, %s74
      %p88 = scmp.eq.s32.totalorder %s24, 1
      %p89 = por %p87, %p88
      %p91 = scmp.ne.s32.totalorder %s74, %s90
      %p92 = scmp.eq.s32.totalorder %s24, 0
      %p93 = por %p91, %p92
      %s94 = ssub.s32 %s18, %s25
      %p95 = scmp.eq.s32.totalorder %s94, 0
      %s97 = sadd.s32 %s96, 1
      %s98 = scalar_select %p95, %s96, %s97
      %p101 = pneg %p95
      %p102 = scmp.eq.s32.totalorder %s18, 1
      %p103 = por %p101, %p102
      %p104 = scmp.ne.s32.totalorder %s96, %s99
      %p105 = scmp.eq.s32.totalorder %s18, 0
      %p106 = por %p104, %p105
      %p107 = scmp.ne.s32.totalorder %s96, %s99
      %p108 = scmp.eq.s32.totalorder %s23, 1
      %p109 = por %p107, %p108
      %p110 = scmp.ne.s32.totalorder %s99, %s100
      %p111 = scmp.eq.s32.totalorder %s23, 0
      %p112 = por %p110, %p111
      %p113 = scmp.ne.s32.totalorder %s99, %s100
      %p114 = scmp.eq.s32.totalorder %s24, 1
      %p115 = por %p113, %p114
      %p117 = scmp.ne.s32.totalorder %s100, %s116
      %p118 = scmp.eq.s32.totalorder %s24, 0
      %p119 = por %p117, %p118
      %s120 = ssub.s32 %s18, %s25
      %p121 = scmp.eq.s32.totalorder %s120, 0
      %s123 = sadd.s32 %s122, 1
      %s124 = scalar_select %p121, %s122, %s123
      %p127 = pneg %p121
      %p128 = scmp.eq.s32.totalorder %s18, 1
      %p129 = por %p127, %p128
      %p130 = scmp.ne.s32.totalorder %s122, %s125
      %p131 = scmp.eq.s32.totalorder %s18, 0
      %p132 = por %p130, %p131
      %p133 = scmp.ne.s32.totalorder %s122, %s125
      %p134 = scmp.eq.s32.totalorder %s23, 1
      %p135 = por %p133, %p134
      %p136 = scmp.ne.s32.totalorder %s125, %s126
      %p137 = scmp.eq.s32.totalorder %s23, 0
      %p138 = por %p136, %p137
      %p139 = scmp.ne.s32.totalorder %s125, %s126
      %p140 = scmp.eq.s32.totalorder %s24, 1
      %p141 = por %p139, %p140
      %p143 = scmp.ne.s32.totalorder %s126, %s142
      %p144 = scmp.eq.s32.totalorder %s24, 0
      %p145 = por %p143, %p144
      %s146 = ssub.s32 %s18, %s25
      %p147 = scmp.eq.s32.totalorder %s146, 0
      %s149 = sadd.s32 %s148, 1
      %s150 = scalar_select %p147, %s148, %s149
      %p153 = pneg %p147
      %p154 = scmp.eq.s32.totalorder %s18, 1
      %p155 = por %p153, %p154
      %p156 = scmp.ne.s32.totalorder %s148, %s151
      %p157 = scmp.eq.s32.totalorder %s18, 0
      %p158 = por %p156, %p157
      %p159 = scmp.ne.s32.totalorder %s148, %s151
      %p160 = scmp.eq.s32.totalorder %s23, 1
      %p161 = por %p159, %p160
      %p162 = scmp.ne.s32.totalorder %s151, %s152
      %p163 = scmp.eq.s32.totalorder %s23, 0
      %p164 = por %p162, %p163
      %p165 = scmp.ne.s32.totalorder %s151, %s152
      %p166 = scmp.eq.s32.totalorder %s24, 1
      %p167 = por %p165, %p166
      %p169 = scmp.ne.s32.totalorder %s152, %s168
      %p170 = scmp.eq.s32.totalorder %s24, 0
      %p171 = por %p169, %p170
      %s172 = ssub.s32 %s18, %s25
      %p173 = scmp.eq.s32.totalorder %s172, 0
      %s175 = sadd.s32 %s174, 1
      %s176 = scalar_select %p173, %s174, %s175
      %p179 = pneg %p173
      %p180 = scmp.eq.s32.totalorder %s18, 1
      %p181 = por %p179, %p180
      %p182 = scmp.ne.s32.totalorder %s174, %s177
      %p183 = scmp.eq.s32.totalorder %s18, 0
      %p184 = por %p182, %p183
      %p185 = scmp.ne.s32.totalorder %s174, %s177
      %p186 = scmp.eq.s32.totalorder %s23, 1
      %p187 = por %p185, %p186
      %p188 = scmp.ne.s32.totalorder %s177, %s178
      %p189 = scmp.eq.s32.totalorder %s23, 0
      %p190 = por %p188, %p189
      %p191 = scmp.ne.s32.totalorder %s177, %s178
      %p192 = scmp.eq.s32.totalorder %s24, 1
      %p193 = por %p191, %p192
      %p195 = scmp.ne.s32.totalorder %s178, %s194
      %p196 = scmp.eq.s32.totalorder %s24, 0
      %p197 = por %p195, %p196
      %s198 = ssub.s32 %s18, %s25
      %p199 = scmp.eq.s32.totalorder %s198, 0
      %s201 = sadd.s32 %s200, 1
      %s202 = scalar_select %p199, %s200, %s201
      %p205 = pneg %p199
      %p206 = scmp.eq.s32.totalorder %s18, 1
      %p207 = por %p205, %p206
      %p208 = scmp.ne.s32.totalorder %s200, %s203
      %p209 = scmp.eq.s32.totalorder %s18, 0
      %p210 = por %p208, %p209
      %p211 = scmp.ne.s32.totalorder %s200, %s203
      %p212 = scmp.eq.s32.totalorder %s23, 1
      %p213 = por %p211, %p212
      %p214 = scmp.ne.s32.totalorder %s203, %s204
      %p215 = scmp.eq.s32.totalorder %s23, 0
      %p216 = por %p214, %p215
      %p217 = scmp.ne.s32.totalorder %s203, %s204
      %p218 = scmp.eq.s32.totalorder %s24, 1
      %p219 = por %p217, %p218
      %p221 = scmp.ne.s32.totalorder %s204, %s220
      %p222 = scmp.eq.s32.totalorder %s24, 0
      %p223 = por %p221, %p222
      %s224 = ssub.s32 %s18, %s25
      %p225 = scmp.eq.s32.totalorder %s224, 0
      %s227 = sadd.s32 %s226, 1
      %s228 = scalar_select %p225, %s226, %s227
      %p231 = pneg %p225
      %p232 = scmp.eq.s32.totalorder %s18, 1
      %p233 = por %p231, %p232
      %p234 = scmp.ne.s32.totalorder %s226, %s229
      %p235 = scmp.eq.s32.totalorder %s18, 0
      %p236 = por %p234, %p235
      %p237 = scmp.ne.s32.totalorder %s226, %s229
      %p238 = scmp.eq.s32.totalorder %s23, 1
      %p239 = por %p237, %p238
      %p240 = scmp.ne.s32.totalorder %s229, %s230
      %p241 = scmp.eq.s32.totalorder %s23, 0
      %p242 = por %p240, %p241
      %p243 = scmp.ne.s32.totalorder %s229, %s230
      %p244 = scmp.eq.s32.totalorder %s24, 1
      %p245 = por %p243, %p244
      %p247 = scmp.ne.s32.totalorder %s230, %s246
      %p248 = scmp.eq.s32.totalorder %s24, 0
      %p249 = por %p247, %p248
      %s250 = ssub.s32 %s18, %s25
      %p251 = scmp.eq.s32.totalorder %s250, 0
      %s253 = sadd.s32 %s252, 1
      %s254 = scalar_select %p251, %s252, %s253
      %p257 = pneg %p251
      %p258 = scmp.eq.s32.totalorder %s18, 1
      %p259 = por %p257, %p258
      %p260 = scmp.ne.s32.totalorder %s252, %s255
      %p261 = scmp.eq.s32.totalorder %s18, 0
      %p262 = por %p260, %p261
      %p263 = scmp.ne.s32.totalorder %s252, %s255
      %p264 = scmp.eq.s32.totalorder %s23, 1
      %p265 = por %p263, %p264
      %p266 = scmp.ne.s32.totalorder %s255, %s256
      %p267 = scmp.eq.s32.totalorder %s23, 0
      %p268 = por %p266, %p267
      %p269 = scmp.ne.s32.totalorder %s255, %s256
      %p270 = scmp.eq.s32.totalorder %s24, 1
      %p271 = por %p269, %p270
      %p273 = scmp.ne.s32.totalorder %s256, %s272
      %p274 = scmp.eq.s32.totalorder %s24, 0
      %p275 = por %p273, %p274
      %s277 = sadd.s32 %s276, 1
      %p280 = scmp.eq.s32.totalorder %s18, 1
      %p281 = scmp.ne.s32.totalorder %s276, %s278
      %p282 = scmp.eq.s32.totalorder %s18, 0
      %p283 = por %p281, %p282
      %p284 = scmp.ne.s32.totalorder %s276, %s278
      %p285 = scmp.eq.s32.totalorder %s23, 1
      %p286 = por %p284, %p285
      %p287 = scmp.ne.s32.totalorder %s278, %s279
      %p288 = scmp.eq.s32.totalorder %s23, 0
      %p289 = por %p287, %p288
      %p290 = scmp.ne.s32.totalorder %s278, %s279
      %p291 = scmp.eq.s32.totalorder %s24, 1
      %p292 = por %p290, %p291
      %p294 = scmp.ne.s32.totalorder %s279, %s293
      %p295 = scmp.eq.s32.totalorder %s24, 0
      %p296 = por %p294, %p295
      %s298 = sadd.s32 %s297, 1
      %p301 = scmp.eq.s32.totalorder %s18, 1
      %p302 = scmp.ne.s32.totalorder %s297, %s299
      %p303 = scmp.eq.s32.totalorder %s18, 0
      %p304 = por %p302, %p303
      %p305 = scmp.ne.s32.totalorder %s297, %s299
      %p306 = scmp.eq.s32.totalorder %s23, 1
      %p307 = por %p305, %p306
      %p308 = scmp.ne.s32.totalorder %s299, %s300
      %p309 = scmp.eq.s32.totalorder %s23, 0
      %p310 = por %p308, %p309
      %p311 = scmp.ne.s32.totalorder %s299, %s300
      %p312 = scmp.eq.s32.totalorder %s24, 1
      %p313 = por %p311, %p312
      %p315 = scmp.ne.s32.totalorder %s300, %s314
      %p316 = scmp.eq.s32.totalorder %s24, 0
      %p317 = por %p315, %p316
      %p318 = scmp.le.s32.totalorder 1, %s18
      %p319 = scmp.lt.s32.totalorder %s18, 3
      %p320 = pnand %p318, %p319
      %p321 = pneg %p320
      // Predicated region
      $region9: #{p2pcse_dc_gradient.1} parent=5 // pred_check
        _
      $region10: #{p2pcse_dc_gradient.1} parent=5 // pred_check_branch
        %323 = sbr.rel (%p320) target = $region12
      $region11: #{p2pcse_dc_gradient.1} parent=5 // pred_region
        %s324 = ssub.s32 %s18, 1
        // Predicated region
        $region13: #{p2pcse_dc_gradient.1} parent=11 // pred_check
          %p325 = pneg %p39
        $region14: #{p2pcse_dc_gradient.1} parent=11 // pred_check_branch
          %327 = sbr.rel (%p325) target = $region16
        $region15: #{p2pcse_dc_gradient.1} parent=11 // pred_region
          _
        $region16: #{p2pcse_dc_gradient.1} parent=11 // pred_fallthru
          _
        // Predicated region
        $region17: #{p2pcse_dc_gradient.1} parent=11 // pred_check
          %p328 = pneg %p60
        $region18: #{p2pcse_dc_gradient.1} parent=11 // pred_check_branch
          %330 = sbr.rel (%p328) target = $region20
        $region19: #{p2pcse_dc_gradient.1} parent=11 // pred_region
          _
        $region20: #{p2pcse_dc_gradient.1} parent=11 // pred_fallthru
          _
      $region12: #{p2pcse_dc_gradient.1} parent=5 // pred_fallthru
        _
      %p331 = scmp.lt.s32.totalorder %s18, 2
      // Predicated region
      $region21: #{p2pcse_dc_gradient.1} parent=5 // pred_check
        %p332 = pneg %p331
      $region22: #{p2pcse_dc_gradient.1} parent=5 // pred_check_branch
        %334 = sbr.rel (%p332) target = $region24
      $region23: #{p2pcse_dc_gradient.1} parent=5 // pred_region
        // Predicated region
        $region25: #{p2pcse_dc_gradient.1} parent=23 // pred_check
          %p335 = pneg %p80
        $region26: #{p2pcse_dc_gradient.1} parent=23 // pred_check_branch
          %337 = sbr.rel (%p335) target = $region28
        $region27: #{p2pcse_dc_gradient.1} parent=23 // pred_region
          %s338 = smul.u32 2, %s18
          %p339 = scmp.lt.s32.totalorder %s338, 3
          %s340 = scalar_select %p339, %s338, 3
          %s341 = smul.addr %s340, 8
          %s342 = scalar_lea.vmem %s2, %s341
          %s343 = smul.u32 2, %s18
        $region28: #{p2pcse_dc_gradient.1} parent=23 // pred_fallthru
          _
        // Predicated region
        $region29: #{p2pcse_dc_gradient.1} parent=23 // pred_check
          %p344 = pneg %p106
        $region30: #{p2pcse_dc_gradient.1} parent=23 // pred_check_branch
          %346 = sbr.rel (%p344) target = $region32
        $region31: #{p2pcse_dc_gradient.1} parent=23 // pred_region
          %s347 = smul.u32 2, %s18
          %p348 = scmp.lt.s32.totalorder %s347, 3
          %s349 = scalar_select %p348, %s347, 3
          %s350 = smul.addr %s349, 8
          %s351 = scalar_lea.vmem %s3, %s350
          %s352 = smul.u32 2, %s18
        $region32: #{p2pcse_dc_gradient.1} parent=23 // pred_fallthru
          _
        // Predicated region
        $region33: #{p2pcse_dc_gradient.1} parent=23 // pred_check
          %p353 = pneg %p132
        $region34: #{p2pcse_dc_gradient.1} parent=23 // pred_check_branch
          %355 = sbr.rel (%p353) target = $region36
        $region35: #{p2pcse_dc_gradient.1} parent=23 // pred_region
          %s356 = sand.u32 %s122, 1
          %s357 = sand.u32 %s122, 1
          %s358 = smul.addr %s357, 16
          %s359 = scalar_lea.vmem [#allocation2], %s358
          %s360 = smul.u32 2, %s18
          %s361 = smul.addr %s360, 4
          %s362 = scalar_lea.vmem %s4, %s361
          // Predicated region
          $region37: #{p2pcse_dc_gradient.1} parent=35 // pred_check
            _
          $region38: #{p2pcse_dc_gradient.1} parent=35 // pred_check_branch
            %364 = sbr.rel (0) target = $region40
          $region39: #{p2pcse_dc_gradient.1} parent=35 // pred_region
            // Predicated region
            $region41: #{p2pcse_dc_gradient.1} parent=39 // pred_check
              _
            $region42: #{p2pcse_dc_gradient.1} parent=39 // pred_check_branch
              %366 = sbr.rel (0) target = $region44
            $region43: #{p2pcse_dc_gradient.1} parent=39 // pred_region
              // Predicated region
              $region56: #{p2pcse_dc_gradient.1} parent=43 // pred_check
                _
              $region57: #{p2pcse_dc_gradient.1} parent=43 // pred_check_branch
                %383 = sbr.rel (0) target = $region59
              $region58: #{p2pcse_dc_gradient.1} parent=43 // pred_region
                loop: start=0, step=1, limit=1
                $region60: #{p2pcse_dc_gradient.1} parent=58 // loop_pre_header
                  _
                $region61: #{p2pcse_dc_gradient.1} parent=58 // loop_header
                  %s385 = sphi 0, %s389
                  %p386 = scmp.ge.s32.totalorder %s385, 1
                  %s390 = sphi %s362, %s362
                  %s391 = sphi %s359, %s359
                $region62: #{p2pcse_dc_gradient.1} parent=58 // loop_header_branch
                  %388 = sbr.rel (%p386) target = $region66
                $region63: #{p2pcse_dc_gradient.1} parent=58 // loop_body
                  %v392 = vld [vmem:[%s390] sm:$0xff]
                  %393 = vst [vmem:[%s391] sm:$0xff] %v392
                  %v394 = vld [vmem:[%s390 + $0x10] sm:$0xff]
                  %395 = vst [vmem:[%s391 + $0x8] sm:$0xff] %v394
                $region64: #{p2pcse_dc_gradient.1} parent=58 // loop_footer
                  %s389 = sadd.s32 1, %s385
                $region65: #{p2pcse_dc_gradient.1} parent=58 // loop_footer_branch
                  %384 = sbr.rel target = $region61
                $region66: #{p2pcse_dc_gradient.1} parent=58 // loop_exit
                  _
              $region59: #{p2pcse_dc_gradient.1} parent=43 // pred_fallthru
                _
              // Predicated region
              $region67: #{p2pcse_dc_gradient.1} parent=43 // pred_check
                _
              $region68: #{p2pcse_dc_gradient.1} parent=43 // pred_check_branch
                %397 = sbr.rel target = $region70
              $region69: #{p2pcse_dc_gradient.1} parent=43 // pred_region
                _
              $region70: #{p2pcse_dc_gradient.1} parent=43 // pred_fallthru
                _
            $region44: #{p2pcse_dc_gradient.1} parent=39 // pred_fallthru
              _
            // Predicated region
            $region45: #{p2pcse_dc_gradient.1} parent=39 // pred_check
              _
            $region46: #{p2pcse_dc_gradient.1} parent=39 // pred_check_branch
              %368 = sbr.rel target = $region48
            $region47: #{p2pcse_dc_gradient.1} parent=39 // pred_region
              loop: start=0, step=1, limit=1
              $region49: #{p2pcse_dc_gradient.1} parent=47 // loop_pre_header
                _
              $region50: #{p2pcse_dc_gradient.1} parent=47 // loop_header
                %s371 = sphi 0, %s375
                %p372 = scmp.ge.s32.totalorder %s371, 1
                %s376 = sphi %s362, %s362
                %s377 = sphi %s359, %s359
              $region51: #{p2pcse_dc_gradient.1} parent=47 // loop_header_branch
                %374 = sbr.rel (%p372) target = $region55
              $region52: #{p2pcse_dc_gradient.1} parent=47 // loop_body
                %v378 = vld [vmem:[%s376] sm:$0xff]
                %379 = vst [vmem:[%s377] sm:$0xff] %v378
                %v380 = vld [vmem:[%s376 + $0x10] sm:$0xff]
                %381 = vst [vmem:[%s377 + $0x8] sm:$0xff] %v380
              $region53: #{p2pcse_dc_gradient.1} parent=47 // loop_footer
                %s375 = sadd.s32 1, %s371
              $region54: #{p2pcse_dc_gradient.1} parent=47 // loop_footer_branch
                %370 = sbr.rel target = $region50
              $region55: #{p2pcse_dc_gradient.1} parent=47 // loop_exit
                _
            $region48: #{p2pcse_dc_gradient.1} parent=39 // pred_fallthru
              _
          $region40: #{p2pcse_dc_gradient.1} parent=35 // pred_fallthru
            _
          %398 = vnop
        $region36: #{p2pcse_dc_gradient.1} parent=23 // pred_fallthru
          _
        // Predicated region
        $region71: #{p2pcse_dc_gradient.1} parent=23 // pred_check
          %p399 = pneg %p158
        $region72: #{p2pcse_dc_gradient.1} parent=23 // pred_check_branch
          %401 = sbr.rel (%p399) target = $region74
        $region73: #{p2pcse_dc_gradient.1} parent=23 // pred_region
          %s402 = sand.u32 %s148, 1
          %s403 = sand.u32 %s148, 1
          %s404 = smul.addr %s403, 16
          %s405 = scalar_lea.vmem [#allocation3], %s404
          %s406 = smul.u32 2, %s18
          %s407 = smul.addr %s406, 4
          %s408 = scalar_lea.vmem %s5, %s407
          // Predicated region
          $region75: #{p2pcse_dc_gradient.1} parent=73 // pred_check
            _
          $region76: #{p2pcse_dc_gradient.1} parent=73 // pred_check_branch
            %410 = sbr.rel (0) target = $region78
          $region77: #{p2pcse_dc_gradient.1} parent=73 // pred_region
            // Predicated region
            $region79: #{p2pcse_dc_gradient.1} parent=77 // pred_check
              _
            $region80: #{p2pcse_dc_gradient.1} parent=77 // pred_check_branch
              %412 = sbr.rel (0) target = $region82
            $region81: #{p2pcse_dc_gradient.1} parent=77 // pred_region
              // Predicated region
              $region94: #{p2pcse_dc_gradient.1} parent=81 // pred_check
                _
              $region95: #{p2pcse_dc_gradient.1} parent=81 // pred_check_branch
                %429 = sbr.rel (0) target = $region97
              $region96: #{p2pcse_dc_gradient.1} parent=81 // pred_region
                loop: start=0, step=1, limit=1
                $region98: #{p2pcse_dc_gradient.1} parent=96 // loop_pre_header
                  _
                $region99: #{p2pcse_dc_gradient.1} parent=96 // loop_header
                  %s431 = sphi 0, %s435
                  %p432 = scmp.ge.s32.totalorder %s431, 1
                  %s436 = sphi %s408, %s408
                  %s437 = sphi %s405, %s405
                $region100: #{p2pcse_dc_gradient.1} parent=96 // loop_header_branch
                  %434 = sbr.rel (%p432) target = $region104
                $region101: #{p2pcse_dc_gradient.1} parent=96 // loop_body
                  %v438 = vld [vmem:[%s436] sm:$0xff]
                  %439 = vst [vmem:[%s437] sm:$0xff] %v438
                  %v440 = vld [vmem:[%s436 + $0x10] sm:$0xff]
                  %441 = vst [vmem:[%s437 + $0x8] sm:$0xff] %v440
                $region102: #{p2pcse_dc_gradient.1} parent=96 // loop_footer
                  %s435 = sadd.s32 1, %s431
                $region103: #{p2pcse_dc_gradient.1} parent=96 // loop_footer_branch
                  %430 = sbr.rel target = $region99
                $region104: #{p2pcse_dc_gradient.1} parent=96 // loop_exit
                  _
              $region97: #{p2pcse_dc_gradient.1} parent=81 // pred_fallthru
                _
              // Predicated region
              $region105: #{p2pcse_dc_gradient.1} parent=81 // pred_check
                _
              $region106: #{p2pcse_dc_gradient.1} parent=81 // pred_check_branch
                %443 = sbr.rel target = $region108
              $region107: #{p2pcse_dc_gradient.1} parent=81 // pred_region
                _
              $region108: #{p2pcse_dc_gradient.1} parent=81 // pred_fallthru
                _
            $region82: #{p2pcse_dc_gradient.1} parent=77 // pred_fallthru
              _
            // Predicated region
            $region83: #{p2pcse_dc_gradient.1} parent=77 // pred_check
              _
            $region84: #{p2pcse_dc_gradient.1} parent=77 // pred_check_branch
              %414 = sbr.rel target = $region86
            $region85: #{p2pcse_dc_gradient.1} parent=77 // pred_region
              loop: start=0, step=1, limit=1
              $region87: #{p2pcse_dc_gradient.1} parent=85 // loop_pre_header
                _
              $region88: #{p2pcse_dc_gradient.1} parent=85 // loop_header
                %s417 = sphi 0, %s421
                %p418 = scmp.ge.s32.totalorder %s417, 1
                %s422 = sphi %s408, %s408
                %s423 = sphi %s405, %s405
              $region89: #{p2pcse_dc_gradient.1} parent=85 // loop_header_branch
                %420 = sbr.rel (%p418) target = $region93
              $region90: #{p2pcse_dc_gradient.1} parent=85 // loop_body
                %v424 = vld [vmem:[%s422] sm:$0xff]
                %425 = vst [vmem:[%s423] sm:$0xff] %v424
                %v426 = vld [vmem:[%s422 + $0x10] sm:$0xff]
                %427 = vst [vmem:[%s423 + $0x8] sm:$0xff] %v426
              $region91: #{p2pcse_dc_gradient.1} parent=85 // loop_footer
                %s421 = sadd.s32 1, %s417
              $region92: #{p2pcse_dc_gradient.1} parent=85 // loop_footer_branch
                %416 = sbr.rel target = $region88
              $region93: #{p2pcse_dc_gradient.1} parent=85 // loop_exit
                _
            $region86: #{p2pcse_dc_gradient.1} parent=77 // pred_fallthru
              _
          $region78: #{p2pcse_dc_gradient.1} parent=73 // pred_fallthru
            _
          %444 = vnop
        $region74: #{p2pcse_dc_gradient.1} parent=23 // pred_fallthru
          _
        // Predicated region
        $region109: #{p2pcse_dc_gradient.1} parent=23 // pred_check
          %p445 = pneg %p184
        $region110: #{p2pcse_dc_gradient.1} parent=23 // pred_check_branch
          %447 = sbr.rel (%p445) target = $region112
        $region111: #{p2pcse_dc_gradient.1} parent=23 // pred_region
          %s448 = sand.u32 %s174, 1
          %s449 = sand.u32 %s174, 1
          %s450 = smul.addr %s449, 32
          %s451 = scalar_lea.vmem [#allocation4], %s450
          %s452 = smul.u32 2, %s18
          %s453 = smul.addr %s452, 8
          %s454 = scalar_lea.vmem %s6, %s453
          // Predicated region
          $region113: #{p2pcse_dc_gradient.1} parent=111 // pred_check
            _
          $region114: #{p2pcse_dc_gradient.1} parent=111 // pred_check_branch
            %456 = sbr.rel (0) target = $region116
          $region115: #{p2pcse_dc_gradient.1} parent=111 // pred_region
            // Predicated region
            $region117: #{p2pcse_dc_gradient.1} parent=115 // pred_check
              _
            $region118: #{p2pcse_dc_gradient.1} parent=115 // pred_check_branch
              %458 = sbr.rel (0) target = $region120
            $region119: #{p2pcse_dc_gradient.1} parent=115 // pred_region
              loop: start=0, step=1, limit=1
              $region121: #{p2pcse_dc_gradient.1} parent=119 // loop_pre_header
                _
              $region122: #{p2pcse_dc_gradient.1} parent=119 // loop_header
                %s460 = sphi 0, %s464
                %p461 = scmp.ge.s32.totalorder %s460, 1
                %s465 = sphi %s454, %s454
                %s466 = sphi %s451, %s451
              $region123: #{p2pcse_dc_gradient.1} parent=119 // loop_header_branch
                %463 = sbr.rel (%p461) target = $region127
              $region124: #{p2pcse_dc_gradient.1} parent=119 // loop_body
                %v467 = vld [vmem:[%s465] sm:$0xff]
                %468 = vst [vmem:[%s466] sm:$0xff] %v467
                %v469 = vld [vmem:[%s465 + $0x8] sm:$0xff]
                %470 = vst [vmem:[%s466 + $0x8] sm:$0xff] %v469
                %v471 = vld [vmem:[%s465 + $0x20] sm:$0xff]
                %472 = vst [vmem:[%s466 + $0x10] sm:$0xff] %v471
                %v473 = vld [vmem:[%s465 + $0x28] sm:$0xff]
                %474 = vst [vmem:[%s466 + $0x18] sm:$0xff] %v473
              $region125: #{p2pcse_dc_gradient.1} parent=119 // loop_footer
                %s464 = sadd.s32 1, %s460
              $region126: #{p2pcse_dc_gradient.1} parent=119 // loop_footer_branch
                %459 = sbr.rel target = $region122
              $region127: #{p2pcse_dc_gradient.1} parent=119 // loop_exit
                _
            $region120: #{p2pcse_dc_gradient.1} parent=115 // pred_fallthru
              _
            // Predicated region
            $region128: #{p2pcse_dc_gradient.1} parent=115 // pred_check
              _
            $region129: #{p2pcse_dc_gradient.1} parent=115 // pred_check_branch
              %476 = sbr.rel target = $region131
            $region130: #{p2pcse_dc_gradient.1} parent=115 // pred_region
              _
            $region131: #{p2pcse_dc_gradient.1} parent=115 // pred_fallthru
              _
          $region116: #{p2pcse_dc_gradient.1} parent=111 // pred_fallthru
            _
          %477 = vnop
        $region112: #{p2pcse_dc_gradient.1} parent=23 // pred_fallthru
          _
        // Predicated region
        $region132: #{p2pcse_dc_gradient.1} parent=23 // pred_check
          %p478 = pneg %p210
        $region133: #{p2pcse_dc_gradient.1} parent=23 // pred_check_branch
          %480 = sbr.rel (%p478) target = $region135
        $region134: #{p2pcse_dc_gradient.1} parent=23 // pred_region
          %s481 = sand.u32 %s200, 1
          %s482 = sand.u32 %s200, 1
          %s483 = smul.addr %s482, 32
          %s484 = scalar_lea.vmem [#allocation5], %s483
          %s485 = smul.u32 2, %s18
          %s486 = smul.addr %s485, 8
          %s487 = scalar_lea.vmem %s7, %s486
          // Predicated region
          $region136: #{p2pcse_dc_gradient.1} parent=134 // pred_check
            _
          $region137: #{p2pcse_dc_gradient.1} parent=134 // pred_check_branch
            %489 = sbr.rel (0) target = $region139
          $region138: #{p2pcse_dc_gradient.1} parent=134 // pred_region
            // Predicated region
            $region140: #{p2pcse_dc_gradient.1} parent=138 // pred_check
              _
            $region141: #{p2pcse_dc_gradient.1} parent=138 // pred_check_branch
              %491 = sbr.rel (0) target = $region143
            $region142: #{p2pcse_dc_gradient.1} parent=138 // pred_region
              loop: start=0, step=1, limit=1
              $region144: #{p2pcse_dc_gradient.1} parent=142 // loop_pre_header
                _
              $region145: #{p2pcse_dc_gradient.1} parent=142 // loop_header
                %s493 = sphi 0, %s497
                %p494 = scmp.ge.s32.totalorder %s493, 1
                %s498 = sphi %s487, %s487
                %s499 = sphi %s484, %s484
              $region146: #{p2pcse_dc_gradient.1} parent=142 // loop_header_branch
                %496 = sbr.rel (%p494) target = $region150
              $region147: #{p2pcse_dc_gradient.1} parent=142 // loop_body
                %v500 = vld [vmem:[%s498] sm:$0xff]
                %501 = vst [vmem:[%s499] sm:$0xff] %v500
                %v502 = vld [vmem:[%s498 + $0x8] sm:$0xff]
                %503 = vst [vmem:[%s499 + $0x8] sm:$0xff] %v502
                %v504 = vld [vmem:[%s498 + $0x20] sm:$0xff]
                %505 = vst [vmem:[%s499 + $0x10] sm:$0xff] %v504
                %v506 = vld [vmem:[%s498 + $0x28] sm:$0xff]
                %507 = vst [vmem:[%s499 + $0x18] sm:$0xff] %v506
              $region148: #{p2pcse_dc_gradient.1} parent=142 // loop_footer
                %s497 = sadd.s32 1, %s493
              $region149: #{p2pcse_dc_gradient.1} parent=142 // loop_footer_branch
                %492 = sbr.rel target = $region145
              $region150: #{p2pcse_dc_gradient.1} parent=142 // loop_exit
                _
            $region143: #{p2pcse_dc_gradient.1} parent=138 // pred_fallthru
              _
            // Predicated region
            $region151: #{p2pcse_dc_gradient.1} parent=138 // pred_check
              _
            $region152: #{p2pcse_dc_gradient.1} parent=138 // pred_check_branch
              %509 = sbr.rel target = $region154
            $region153: #{p2pcse_dc_gradient.1} parent=138 // pred_region
              _
            $region154: #{p2pcse_dc_gradient.1} parent=138 // pred_fallthru
              _
          $region139: #{p2pcse_dc_gradient.1} parent=134 // pred_fallthru
            _
          %510 = vnop
        $region135: #{p2pcse_dc_gradient.1} parent=23 // pred_fallthru
          _
        // Predicated region
        $region155: #{p2pcse_dc_gradient.1} parent=23 // pred_check
          %p511 = pneg %p236
        $region156: #{p2pcse_dc_gradient.1} parent=23 // pred_check_branch
          %513 = sbr.rel (%p511) target = $region158
        $region157: #{p2pcse_dc_gradient.1} parent=23 // pred_region
          %s514 = smul.u32 32, %s18
          %p515 = scmp.lt.s32.totalorder %s514, 63
          %s516 = scalar_select %p515, %s514, 63
          %s517 = smul.addr %s516, 4
          %s518 = scalar_lea.vmem %s8, %s517
          %s519 = smul.u32 32, %s18
        $region158: #{p2pcse_dc_gradient.1} parent=23 // pred_fallthru
          _
        // Predicated region
        $region159: #{p2pcse_dc_gradient.1} parent=23 // pred_check
          %p520 = pneg %p262
        $region160: #{p2pcse_dc_gradient.1} parent=23 // pred_check_branch
          %522 = sbr.rel (%p520) target = $region162
        $region161: #{p2pcse_dc_gradient.1} parent=23 // pred_region
          %s523 = smul.u32 32, %s18
          %p524 = scmp.lt.s32.totalorder %s523, 63
          %s525 = scalar_select %p524, %s523, 63
          %s526 = smul.addr %s525, 4
          %s527 = scalar_lea.vmem %s9, %s526
          %s528 = smul.u32 32, %s18
        $region162: #{p2pcse_dc_gradient.1} parent=23 // pred_fallthru
          _
      $region24: #{p2pcse_dc_gradient.1} parent=5 // pred_fallthru
        _
      %p529 = scmp.le.s32.totalorder 1, %s18
      %p530 = scmp.lt.s32.totalorder %s18, 3
      %p531 = pnand %p529, %p530
      %p532 = pneg %p531
      // Predicated region
      $region163: #{p2pcse_dc_gradient.1} parent=5 // pred_check
        _
      $region164: #{p2pcse_dc_gradient.1} parent=5 // pred_check_branch
        %534 = sbr.rel (%p531) target = $region166
      $region165: #{p2pcse_dc_gradient.1} parent=5 // pred_region
        %s535 = ssub.s32 %s18, 1
        %s536 = sand.u32 %s125, 1
        %s537 = sand.u32 %s125, 1
        %s538 = smul.addr %s537, 16
        %s539 = scalar_lea.vmem [#allocation2], %s538
        // Predicated region
        $region167: #{p2pcse_dc_gradient.1} parent=165 // pred_check
          %p540 = pneg %p138
        $region168: #{p2pcse_dc_gradient.1} parent=165 // pred_check_branch
          %542 = sbr.rel (%p540) target = $region170
        $region169: #{p2pcse_dc_gradient.1} parent=165 // pred_region
          _
        $region170: #{p2pcse_dc_gradient.1} parent=165 // pred_fallthru
          _
        %s543 = sand.u32 %s151, 1
        %s544 = sand.u32 %s151, 1
        %s545 = smul.addr %s544, 16
        %s546 = scalar_lea.vmem [#allocation3], %s545
        // Predicated region
        $region171: #{p2pcse_dc_gradient.1} parent=165 // pred_check
          %p547 = pneg %p164
        $region172: #{p2pcse_dc_gradient.1} parent=165 // pred_check_branch
          %549 = sbr.rel (%p547) target = $region174
        $region173: #{p2pcse_dc_gradient.1} parent=165 // pred_region
          _
        $region174: #{p2pcse_dc_gradient.1} parent=165 // pred_fallthru
          _
        %s550 = sand.u32 %s177, 1
        %s551 = sand.u32 %s177, 1
        %s552 = smul.addr %s551, 32
        %s553 = scalar_lea.vmem [#allocation4], %s552
        // Predicated region
        $region175: #{p2pcse_dc_gradient.1} parent=165 // pred_check
          %p554 = pneg %p190
        $region176: #{p2pcse_dc_gradient.1} parent=165 // pred_check_branch
          %556 = sbr.rel (%p554) target = $region178
        $region177: #{p2pcse_dc_gradient.1} parent=165 // pred_region
          _
        $region178: #{p2pcse_dc_gradient.1} parent=165 // pred_fallthru
          _
        %s557 = sand.u32 %s203, 1
        %s558 = sand.u32 %s203, 1
        %s559 = smul.addr %s558, 32
        %s560 = scalar_lea.vmem [#allocation5], %s559
        // Predicated region
        $region179: #{p2pcse_dc_gradient.1} parent=165 // pred_check
          %p561 = pneg %p216
        $region180: #{p2pcse_dc_gradient.1} parent=165 // pred_check_branch
          %563 = sbr.rel (%p561) target = $region182
        $region181: #{p2pcse_dc_gradient.1} parent=165 // pred_region
          _
        $region182: #{p2pcse_dc_gradient.1} parent=165 // pred_fallthru
          _
        %p564 = pneg %p39
        %p565 = pneg %p36
        %p566 = pneg %p60
        %p567 = pneg %p57
        %s568 = smul.u32 2, %s23
        %p569 = scmp.lt.s32.totalorder %s568, 3
        %s570 = scalar_select %p569, %s568, 3
        %s571 = smul.addr %s570, 8
        %s572 = scalar_lea.vmem %s2, %s571
        %p573 = pneg %p86
        %p574 = pneg %p83
        %s575 = smul.u32 2, %s23
        %p576 = scmp.lt.s32.totalorder %s575, 3
        %s577 = scalar_select %p576, %s575, 3
        %s578 = smul.addr %s577, 8
        %s579 = scalar_lea.vmem %s3, %s578
        %p580 = pneg %p112
        %p581 = pneg %p109
        %s582 = sand.u32 %s125, 1
        %s583 = sand.u32 %s125, 1
        %s584 = smul.addr %s583, 16
        %s585 = scalar_lea.vmem [#allocation2], %s584
        %p586 = pneg %p138
        %p587 = pneg %p135
        %s588 = sand.u32 %s151, 1
        %s589 = sand.u32 %s151, 1
        %s590 = smul.addr %s589, 16
        %s591 = scalar_lea.vmem [#allocation3], %s590
        %p592 = pneg %p164
        %p593 = pneg %p161
        %s594 = sand.u32 %s177, 1
        %s595 = sand.u32 %s177, 1
        %s596 = smul.addr %s595, 32
        %s597 = scalar_lea.vmem [#allocation4], %s596
        %p598 = pneg %p190
        %p599 = pneg %p187
        %s600 = sand.u32 %s203, 1
        %s601 = sand.u32 %s203, 1
        %s602 = smul.addr %s601, 32
        %s603 = scalar_lea.vmem [#allocation5], %s602
        %p604 = pneg %p216
        %p605 = pneg %p213
        %s606 = smul.u32 32, %s23
        %p607 = scmp.lt.s32.totalorder %s606, 63
        %s608 = scalar_select %p607, %s606, 63
        %s609 = smul.addr %s608, 4
        %s610 = scalar_lea.vmem %s8, %s609
        %p611 = pneg %p242
        %p612 = pneg %p239
        %s613 = smul.u32 32, %s23
        %p614 = scmp.lt.s32.totalorder %s613, 63
        %s615 = scalar_select %p614, %s613, 63
        %s616 = smul.addr %s615, 4
        %s617 = scalar_lea.vmem %s9, %s616
        %p618 = pneg %p268
        %p619 = pneg %p265
        %p620 = pneg %p289
        %p621 = pneg %p286
        %p622 = pneg %p310
        %p623 = pneg %p307
        %s624 = smul.u32 2, %s23
        %p625 = scmp.lt.s32.totalorder %s624, 3
        %s626 = scalar_select %p625, %s624, 3
        %s627 = smul.addr %s626, 8
        %s628 = scalar_lea.vmem %s2, %s627
        %s629 = smul.u32 2, %s23
        %s630 = smul.u32 2, %s23
        %p631 = scmp.lt.s32.totalorder %s630, 3
        %s632 = scalar_select %p631, %s630, 3
        %s633 = smul.addr %s632, 8
        %s634 = scalar_lea.vmem %s3, %s633
        %s635 = smul.u32 2, %s23
        %s636 = smul.u32 2, %s23
        %s637 = smul.u32 2, %s23
        %s638 = smul.u32 2, %s23
        %s639 = smul.u32 2, %s23
        %s640 = smul.u32 32, %s23
        %p641 = scmp.lt.s32.totalorder %s640, 63
        %s642 = scalar_select %p641, %s640, 63
        %s643 = smul.addr %s642, 4
        %s644 = scalar_lea.vmem %s8, %s643
        %s645 = smul.u32 32, %s23
        %s646 = smul.u32 32, %s23
        %p647 = scmp.lt.s32.totalorder %s646, 63
        %s648 = scalar_select %p647, %s646, 63
        %s649 = smul.addr %s648, 4
        %s650 = scalar_lea.vmem %s9, %s649
        %s651 = smul.u32 32, %s23
        %p653 = scmp.eq.s32.totalorder %s23, 0
        // Predicated region
        $region183: #{p2pcse_dc_gradient.1} parent=165 // pred_check
          %p654 = pneg %p653
        $region184: #{p2pcse_dc_gradient.1} parent=165 // pred_check_branch
          %656 = sbr.rel (%p654) target = $region186
        $region185: #{p2pcse_dc_gradient.1} parent=165 // pred_region
          %vm657 = vcmask 130048
          %658 = vst.msk [vmem:[%s10] sm:$0xff] %vm657, 0.0
          %659 = vst.msk [vmem:[%s10 + $0x8] sm:$0xff] %vm657, 0.0
          %660 = vst.msk [vmem:[%s10 + $0x10] sm:$0xff] %vm657, 0.0
          %661 = vst.msk [vmem:[%s10 + $0x18] sm:$0xff] %vm657, 0.0
          %662 = vst.msk [vmem:[%s10 + $0x20] sm:$0xff] %vm657, 0.0
          %663 = vst.msk [vmem:[%s10 + $0x28] sm:$0xff] %vm657, 0.0
          %664 = vst.msk [vmem:[%s10 + $0x30] sm:$0xff] %vm657, 0.0
          %665 = vst.msk [vmem:[%s10 + $0x38] sm:$0xff] %vm657, 0.0
          %666 = vst.msk [vmem:[%s10 + $0x40] sm:$0xff] %vm657, 0.0
          %667 = vst.msk [vmem:[%s10 + $0x48] sm:$0xff] %vm657, 0.0
          %668 = vst.msk [vmem:[%s10 + $0x50] sm:$0xff] %vm657, 0.0
          %669 = vst.msk [vmem:[%s10 + $0x58] sm:$0xff] %vm657, 0.0
          %670 = vst.msk [vmem:[%s10 + $0x60] sm:$0xff] %vm657, 0.0
          %671 = vst.msk [vmem:[%s10 + $0x68] sm:$0xff] %vm657, 0.0
          %672 = vst.msk [vmem:[%s10 + $0x70] sm:$0xff] %vm657, 0.0
          %673 = vst.msk [vmem:[%s10 + $0x78] sm:$0xff] %vm657, 0.0
          %674 = vst.msk [vmem:[%s11] sm:$0xff] %vm657, 0.0
          %675 = vst.msk [vmem:[%s11 + $0x8] sm:$0xff] %vm657, 0.0
          %676 = vst.msk [vmem:[%s11 + $0x10] sm:$0xff] %vm657, 0.0
          %677 = vst.msk [vmem:[%s11 + $0x18] sm:$0xff] %vm657, 0.0
          %678 = vst.msk [vmem:[%s11 + $0x20] sm:$0xff] %vm657, 0.0
          %679 = vst.msk [vmem:[%s11 + $0x28] sm:$0xff] %vm657, 0.0
          %680 = vst.msk [vmem:[%s11 + $0x30] sm:$0xff] %vm657, 0.0
          %681 = vst.msk [vmem:[%s11 + $0x38] sm:$0xff] %vm657, 0.0
          %682 = vst.msk [vmem:[%s11 + $0x40] sm:$0xff] %vm657, 0.0
          %683 = vst.msk [vmem:[%s11 + $0x48] sm:$0xff] %vm657, 0.0
          %684 = vst.msk [vmem:[%s11 + $0x50] sm:$0xff] %vm657, 0.0
          %685 = vst.msk [vmem:[%s11 + $0x58] sm:$0xff] %vm657, 0.0
          %686 = vst.msk [vmem:[%s11 + $0x60] sm:$0xff] %vm657, 0.0
          %687 = vst.msk [vmem:[%s11 + $0x68] sm:$0xff] %vm657, 0.0
          %688 = vst.msk [vmem:[%s11 + $0x70] sm:$0xff] %vm657, 0.0
          %689 = vst.msk [vmem:[%s11 + $0x78] sm:$0xff] %vm657, 0.0
        $region186: #{p2pcse_dc_gradient.1} parent=165 // pred_fallthru
          _
        %v690 = vld [vmem:[%s0] sm:$0xf]
        %v691 = vld [vmem:[%s0 + $0x4] sm:$0xf]
        %v692 = vld [vmem:[%s0 + $0x8] sm:$0xf]
        %v693 = vld [vmem:[%s0 + $0xc] sm:$0xf]
        %v694 = vld [vmem:[%s0 + $0x10] sm:$0xf]
        %v695 = vld [vmem:[%s0 + $0x14] sm:$0xf]
        %v696 = vld [vmem:[%s0 + $0x18] sm:$0xf]
        %v697 = vld [vmem:[%s0 + $0x1c] sm:$0xf]
        %v698 = vld [vmem:[%s0 + $0x20] sm:$0xf]
        %v699 = vld [vmem:[%s0 + $0x24] sm:$0xf]
        %v700 = vld [vmem:[%s0 + $0x28] sm:$0xf]
        %v701 = vld [vmem:[%s0 + $0x2c] sm:$0xf]
        %v702 = vld [vmem:[%s0 + $0x30] sm:$0xf]
        %v703 = vld [vmem:[%s0 + $0x34] sm:$0xf]
        %v704 = vld [vmem:[%s0 + $0x38] sm:$0xf]
        %v705 = vld [vmem:[%s0 + $0x3c] sm:$0xf]
        %v706 = vld [vmem:[%s1] sm:$0xf]
        %v707 = vld [vmem:[%s1 + $0x4] sm:$0xf]
        %v708 = vld [vmem:[%s1 + $0x8] sm:$0xf]
        %v709 = vld [vmem:[%s1 + $0xc] sm:$0xf]
        %v710 = vld [vmem:[%s1 + $0x10] sm:$0xf]
        %v711 = vld [vmem:[%s1 + $0x14] sm:$0xf]
        %v712 = vld [vmem:[%s1 + $0x18] sm:$0xf]
        %v713 = vld [vmem:[%s1 + $0x1c] sm:$0xf]
        %v714 = vld [vmem:[%s1 + $0x20] sm:$0xf]
        %v715 = vld [vmem:[%s1 + $0x24] sm:$0xf]
        %v716 = vld [vmem:[%s1 + $0x28] sm:$0xf]
        %v717 = vld [vmem:[%s1 + $0x2c] sm:$0xf]
        %v718 = vld [vmem:[%s1 + $0x30] sm:$0xf]
        %v719 = vld [vmem:[%s1 + $0x34] sm:$0xf]
        %v720 = vld [vmem:[%s1 + $0x38] sm:$0xf]
        %v721 = vld [vmem:[%s1 + $0x3c] sm:$0xf]
        %v722 = vld [vmem:[%s539] sm:$0xff]
        %v723 = vld [vmem:[%s539 + $0x8] sm:$0xff]
        %v724 = vld [vmem:[%s546] sm:$0xff]
        %v725 = vld [vmem:[%s546 + $0x8] sm:$0xff]
        %v742 = vunpack.c.l.b16 %v706
        %v743 = vunpack.c.l.b16 %v707
        %v744 = vunpack.c.l.b16 %v708
        %v745 = vunpack.c.l.b16 %v709
        %v746 = vunpack.c.l.b16 %v710
        %v747 = vunpack.c.l.b16 %v711
        %v748 = vunpack.c.l.b16 %v712
        %v749 = vunpack.c.l.b16 %v713
        %v750 = vunpack.c.l.b16 %v714
        %v751 = vunpack.c.l.b16 %v715
        %v752 = vunpack.c.l.b16 %v716
        %v753 = vunpack.c.l.b16 %v717
        %v754 = vunpack.c.l.b16 %v718
        %v755 = vunpack.c.l.b16 %v719
        %v756 = vunpack.c.l.b16 %v720
        %v757 = vunpack.c.l.b16 %v721
        %v758 = vpack.c.b16 %v743, %v742
        %v759 = vpack.c.b16 %v745, %v744
        %v760 = vpack.c.b16 %v747, %v746
        %v761 = vpack.c.b16 %v749, %v748
        %v762 = vpack.c.b16 %v751, %v750
        %v763 = vpack.c.b16 %v753, %v752
        %v764 = vpack.c.b16 %v755, %v754
        %v765 = vpack.c.b16 %v757, %v756
        %v768 = vunpack.c.l.b16 %v724
        %v769 = vunpack.c.h.b16 %v724
        %v770 = vunpack.c.l.b16 %v725
        %v771 = vunpack.c.h.b16 %v725
        %v772 = vpack.c.b16 %v770, %v768
        %v773 = vpack.c.b16 %v771, %v769
        %vm776 = vcmask 130048
        %v778 = vsel %vm776, %v758, 0
        %v781 = vsel %vm776, %v759, 0
        %v784 = vsel %vm776, %v760, 0
        %v787 = vsel %vm776, %v761, 0
        %v790 = vsel %vm776, %v762, 0
        %v793 = vsel %vm776, %v763, 0
        %v796 = vsel %vm776, %v764, 0
        %v799 = vsel %vm776, %v765, 0
        %801 = vmatprep.subr.bf16.mxu0 %v773
        %802 = vmatpush1.bf16.msra.mxu0 %v772
        %803 = vmatprep.subr.bf16.mxu0 0
        %804 = vmatpush1.bf16.msra.mxu0 0
        %805 = vmatprep.subr.bf16.mxu0 0
        %806 = vmatpush1.bf16.msra.mxu0 0
        %807 = vmatprep.subr.bf16.mxu0 0
        %808 = vmatpush1.bf16.msra.mxu0 0
        %809 = vmatprep.subr.bf16.mxu0 0
        %810 = vmatpush1.bf16.msra.mxu0 0
        %811 = vmatprep.subr.bf16.mxu0 0
        %812 = vmatpush1.bf16.msra.mxu0 0
        %813 = vmatprep.subr.bf16.mxu0 0
        %814 = vmatpush1.bf16.msra.mxu0 0
        %815 = vmatprep.subr.bf16.mxu0 0
        %816 = vmatpush1.bf16.msra.mxu0 0
        %817 = vmatprep.subr.bf16.mxu0 0
        %818 = vmatpush1.bf16.msra.mxu0 0
        %819 = vmatprep.subr.bf16.mxu0 0
        %820 = vmatpush1.bf16.msra.mxu0 0
        %821 = vmatprep.subr.bf16.mxu0 0
        %822 = vmatpush1.bf16.msra.mxu0 0
        %823 = vmatprep.subr.bf16.mxu0 0
        %824 = vmatpush1.bf16.msra.mxu0 0
        %825 = vmatprep.subr.bf16.mxu0 0
        %826 = vmatpush1.bf16.msra.mxu0 0
        %827 = vmatprep.subr.bf16.mxu0 0
        %828 = vmatpush1.bf16.msra.mxu0 0
        %829 = vmatprep.subr.bf16.mxu0 0
        %830 = vmatpush1.bf16.msra.mxu0 0
        %831 = vmatprep.subr.bf16.mxu0 0
        %832 = vmatpush1.bf16.msra.mxu0 0
        %833 = vmatprep.mubr.bf16.mxu0 0
        %834 = vmatmul.mubr.bf16.gmra.mrb[0].mxu0 %v778
        %v835 = vpop.f32.mrb[0].mxu0
        %v836 = vadd.f32 0.0, %v835
        %v837 = vpop.f32.mrb[0].mxu0
        %v838 = vadd.f32 0.0, %v837
        %v839 = vpop.f32.mrb[0].mxu0
        %v840 = vadd.f32 0.0, %v839
        %v841 = vpop.f32.mrb[0].mxu0
        %v842 = vadd.f32 0.0, %v841
        %843 = vmatprep.mubr.bf16.mxu0 0
        %844 = vmatmul.mubr.bf16.gmra.mrb[0].mxu0 %v781
        %v845 = vpop.f32.mrb[0].mxu0
        %v846 = vadd.f32 0.0, %v845
        %v847 = vpop.f32.mrb[0].mxu0
        %v848 = vadd.f32 0.0, %v847
        %v849 = vpop.f32.mrb[0].mxu0
        %v850 = vadd.f32 0.0, %v849
        %v851 = vpop.f32.mrb[0].mxu0
        %v852 = vadd.f32 0.0, %v851
        %853 = vmatprep.mubr.bf16.mxu0 0
        %854 = vmatmul.mubr.bf16.gmra.mrb[0].mxu0 %v784
        %v855 = vpop.f32.mrb[0].mxu0
        %v856 = vadd.f32 0.0, %v855
        %v857 = vpop.f32.mrb[0].mxu0
        %v858 = vadd.f32 0.0, %v857
        %v859 = vpop.f32.mrb[0].mxu0
        %v860 = vadd.f32 0.0, %v859
        %v861 = vpop.f32.mrb[0].mxu0
        %v862 = vadd.f32 0.0, %v861
        %863 = vmatprep.mubr.bf16.mxu0 0
        %864 = vmatmul.mubr.bf16.gmra.mrb[0].mxu0 %v787
        %v865 = vpop.f32.mrb[0].mxu0
        %v866 = vadd.f32 0.0, %v865
        %v867 = vpop.f32.mrb[0].mxu0
        %v868 = vadd.f32 0.0, %v867
        %v869 = vpop.f32.mrb[0].mxu0
        %v870 = vadd.f32 0.0, %v869
        %v871 = vpop.f32.mrb[0].mxu0
        %v872 = vadd.f32 0.0, %v871
        %873 = vmatprep.mubr.bf16.mxu0 0
        %874 = vmatmul.mubr.bf16.gmra.mrb[0].mxu0 %v790
        %v875 = vpop.f32.mrb[0].mxu0
        %v876 = vadd.f32 0.0, %v875
        %v877 = vpop.f32.mrb[0].mxu0
        %v878 = vadd.f32 0.0, %v877
        %v879 = vpop.f32.mrb[0].mxu0
        %v880 = vadd.f32 0.0, %v879
        %v881 = vpop.f32.mrb[0].mxu0
        %v882 = vadd.f32 0.0, %v881
        %883 = vmatprep.mubr.bf16.mxu0 0
        %884 = vmatmul.mubr.bf16.gmra.mrb[0].mxu0 %v793
        %v885 = vpop.f32.mrb[0].mxu0
        %v886 = vadd.f32 0.0, %v885
        %v887 = vpop.f32.mrb[0].mxu0
        %v888 = vadd.f32 0.0, %v887
        %v889 = vpop.f32.mrb[0].mxu0
        %v890 = vadd.f32 0.0, %v889
        %v891 = vpop.f32.mrb[0].mxu0
        %v892 = vadd.f32 0.0, %v891
        %893 = vmatprep.mubr.bf16.mxu0 0
        %894 = vmatmul.mubr.bf16.gmra.mrb[0].mxu0 %v796
        %v895 = vpop.f32.mrb[0].mxu0
        %v896 = vadd.f32 0.0, %v895
        %v897 = vpop.f32.mrb[0].mxu0
        %v898 = vadd.f32 0.0, %v897
        %v899 = vpop.f32.mrb[0].mxu0
        %v900 = vadd.f32 0.0, %v899
        %v901 = vpop.f32.mrb[0].mxu0
        %v902 = vadd.f32 0.0, %v901
        %903 = vmatprep.mubr.bf16.mxu0 0
        %904 = vmatmul.mubr.bf16.gmra.mrb[0].mxu0 %v799
        %v905 = vpop.f32.mrb[0].mxu0
        %v906 = vadd.f32 0.0, %v905
        %v907 = vpop.f32.mrb[0].mxu0
        %v908 = vadd.f32 0.0, %v907
        %v909 = vpop.f32.mrb[0].mxu0
        %v910 = vadd.f32 0.0, %v909
        %v911 = vpop.f32.mrb[0].mxu0
        %v912 = vadd.f32 0.0, %v911
        %913 = vdwg.mxu0
        %v930 = vunpack.c.l.b16 %v690
        %v931 = vunpack.c.l.b16 %v691
        %v932 = vunpack.c.l.b16 %v692
        %v933 = vunpack.c.l.b16 %v693
        %v934 = vunpack.c.l.b16 %v694
        %v935 = vunpack.c.l.b16 %v695
        %v936 = vunpack.c.l.b16 %v696
        %v937 = vunpack.c.l.b16 %v697
        %v938 = vunpack.c.l.b16 %v698
        %v939 = vunpack.c.l.b16 %v699
        %v940 = vunpack.c.l.b16 %v700
        %v941 = vunpack.c.l.b16 %v701
        %v942 = vunpack.c.l.b16 %v702
        %v943 = vunpack.c.l.b16 %v703
        %v944 = vunpack.c.l.b16 %v704
        %v945 = vunpack.c.l.b16 %v705
        %v946 = vpack.c.b16 %v931, %v930
        %v947 = vpack.c.b16 %v933, %v932
        %v948 = vpack.c.b16 %v935, %v934
        %v949 = vpack.c.b16 %v937, %v936
        %v950 = vpack.c.b16 %v939, %v938
        %v951 = vpack.c.b16 %v941, %v940
        %v952 = vpack.c.b16 %v943, %v942
        %v953 = vpack.c.b16 %v945, %v944
        %v956 = vunpack.c.l.b16 %v722
        %v957 = vunpack.c.h.b16 %v722
        %v958 = vunpack.c.l.b16 %v723
        %v959 = vunpack.c.h.b16 %v723
        %v960 = vpack.c.b16 %v958, %v956
        %v961 = vpack.c.b16 %v959, %v957
        %v965 = vsel %vm776, %v946, 0
        %v968 = vsel %vm776, %v947, 0
        %v971 = vsel %vm776, %v948, 0
        %v974 = vsel %vm776, %v949, 0
        %v977 = vsel %vm776, %v950, 0
        %v980 = vsel %vm776, %v951, 0
        %v983 = vsel %vm776, %v952, 0
        %v986 = vsel %vm776, %v953, 0
        %988 = vmatprep.subr.bf16.mxu0 %v961
        %989 = vmatpush1.bf16.msra.mxu0 %v960
        %990 = vmatprep.subr.bf16.mxu0 0
        %991 = vmatpush1.bf16.msra.mxu0 0
        %992 = vmatprep.subr.bf16.mxu0 0
        %993 = vmatpush1.bf16.msra.mxu0 0
        %994 = vmatprep.subr.bf16.mxu0 0
        %995 = vmatpush1.bf16.msra.mxu0 0
        %996 = vmatprep.subr.bf16.mxu0 0
        %997 = vmatpush1.bf16.msra.mxu0 0
        %998 = vmatprep.subr.bf16.mxu0 0
        %999 = vmatpush1.bf16.msra.mxu0 0
        %1000 = vmatprep.subr.bf16.mxu0 0
        %1001 = vmatpush1.bf16.msra.mxu0 0
        %1002 = vmatprep.subr.bf16.mxu0 0
        %1003 = vmatpush1.bf16.msra.mxu0 0
        %1004 = vmatprep.subr.bf16.mxu0 0
        %1005 = vmatpush1.bf16.msra.mxu0 0
        %1006 = vmatprep.subr.bf16.mxu0 0
        %1007 = vmatpush1.bf16.msra.mxu0 0
        %1008 = vmatprep.subr.bf16.mxu0 0
        %1009 = vmatpush1.bf16.msra.mxu0 0
        %1010 = vmatprep.subr.bf16.mxu0 0
        %1011 = vmatpush1.bf16.msra.mxu0 0
        %1012 = vmatprep.subr.bf16.mxu0 0
        %1013 = vmatpush1.bf16.msra.mxu0 0
        %1014 = vmatprep.subr.bf16.mxu0 0
        %1015 = vmatpush1.bf16.msra.mxu0 0
        %1016 = vmatprep.subr.bf16.mxu0 0
        %1017 = vmatpush1.bf16.msra.mxu0 0
        %1018 = vmatprep.subr.bf16.mxu0 0
        %1019 = vmatpush1.bf16.msra.mxu0 0
        %1020 = vmatprep.mubr.bf16.mxu0 0
        %1021 = vmatmul.mubr.bf16.gmra.mrb[0].mxu0 %v965
        %v1022 = vpop.f32.mrb[0].mxu0
        %v1023 = vadd.f32 %v836, %v1022
        %v1024 = vpop.f32.mrb[0].mxu0
        %v1025 = vadd.f32 %v838, %v1024
        %v1026 = vpop.f32.mrb[0].mxu0
        %v1027 = vadd.f32 %v840, %v1026
        %v1028 = vpop.f32.mrb[0].mxu0
        %v1029 = vadd.f32 %v842, %v1028
        %1030 = vmatprep.mubr.bf16.mxu0 0
        %1031 = vmatmul.mubr.bf16.gmra.mrb[0].mxu0 %v968
        %v1032 = vpop.f32.mrb[0].mxu0
        %v1033 = vadd.f32 %v846, %v1032
        %v1034 = vpop.f32.mrb[0].mxu0
        %v1035 = vadd.f32 %v848, %v1034
        %v1036 = vpop.f32.mrb[0].mxu0
        %v1037 = vadd.f32 %v850, %v1036
        %v1038 = vpop.f32.mrb[0].mxu0
        %v1039 = vadd.f32 %v852, %v1038
        %1040 = vmatprep.mubr.bf16.mxu0 0
        %1041 = vmatmul.mubr.bf16.gmra.mrb[0].mxu0 %v971
        %v1042 = vpop.f32.mrb[0].mxu0
        %v1043 = vadd.f32 %v856, %v1042
        %v1044 = vpop.f32.mrb[0].mxu0
        %v1045 = vadd.f32 %v858, %v1044
        %v1046 = vpop.f32.mrb[0].mxu0
        %v1047 = vadd.f32 %v860, %v1046
        %v1048 = vpop.f32.mrb[0].mxu0
        %v1049 = vadd.f32 %v862, %v1048
        %1050 = vmatprep.mubr.bf16.mxu0 0
        %1051 = vmatmul.mubr.bf16.gmra.mrb[0].mxu0 %v974
        %v1052 = vpop.f32.mrb[0].mxu0
        %v1053 = vadd.f32 %v866, %v1052
        %v1054 = vpop.f32.mrb[0].mxu0
        %v1055 = vadd.f32 %v868, %v1054
        %v1056 = vpop.f32.mrb[0].mxu0
        %v1057 = vadd.f32 %v870, %v1056
        %v1058 = vpop.f32.mrb[0].mxu0
        %v1059 = vadd.f32 %v872, %v1058
        %1060 = vmatprep.mubr.bf16.mxu0 0
        %1061 = vmatmul.mubr.bf16.gmra.mrb[0].mxu0 %v977
        %v1062 = vpop.f32.mrb[0].mxu0
        %v1063 = vadd.f32 %v876, %v1062
        %v1064 = vpop.f32.mrb[0].mxu0
        %v1065 = vadd.f32 %v878, %v1064
        %v1066 = vpop.f32.mrb[0].mxu0
        %v1067 = vadd.f32 %v880, %v1066
        %v1068 = vpop.f32.mrb[0].mxu0
        %v1069 = vadd.f32 %v882, %v1068
        %1070 = vmatprep.mubr.bf16.mxu0 0
        %1071 = vmatmul.mubr.bf16.gmra.mrb[0].mxu0 %v980
        %v1072 = vpop.f32.mrb[0].mxu0
        %v1073 = vadd.f32 %v886, %v1072
        %v1074 = vpop.f32.mrb[0].mxu0
        %v1075 = vadd.f32 %v888, %v1074
        %v1076 = vpop.f32.mrb[0].mxu0
        %v1077 = vadd.f32 %v890, %v1076
        %v1078 = vpop.f32.mrb[0].mxu0
        %v1079 = vadd.f32 %v892, %v1078
        %1080 = vmatprep.mubr.bf16.mxu0 0
        %1081 = vmatmul.mubr.bf16.gmra.mrb[0].mxu0 %v983
        %v1082 = vpop.f32.mrb[0].mxu0
        %v1083 = vadd.f32 %v896, %v1082
        %v1084 = vpop.f32.mrb[0].mxu0
        %v1085 = vadd.f32 %v898, %v1084
        %v1086 = vpop.f32.mrb[0].mxu0
        %v1087 = vadd.f32 %v900, %v1086
        %v1088 = vpop.f32.mrb[0].mxu0
        %v1089 = vadd.f32 %v902, %v1088
        %1090 = vmatprep.mubr.bf16.mxu0 0
        %1091 = vmatmul.mubr.bf16.gmra.mrb[0].mxu0 %v986
        %v1092 = vpop.f32.mrb[0].mxu0
        %v1093 = vadd.f32 %v906, %v1092
        %v1094 = vpop.f32.mrb[0].mxu0
        %v1095 = vadd.f32 %v908, %v1094
        %v1096 = vpop.f32.mrb[0].mxu0
        %v1097 = vadd.f32 %v910, %v1096
        %v1098 = vpop.f32.mrb[0].mxu0
        %v1099 = vadd.f32 %v912, %v1098
        %1100 = vdwg.mxu0
        %1101 = vmatprep.subr.bf16.mxu0 %v961
        %1102 = vmatpush1.bf16.msra.mxu0 %v960
        %1103 = vmatprep.subr.bf16.mxu0 0
        %1104 = vmatpush1.bf16.msra.mxu0 0
        %1105 = vmatprep.subr.bf16.mxu0 0
        %1106 = vmatpush1.bf16.msra.mxu0 0
        %1107 = vmatprep.subr.bf16.mxu0 0
        %1108 = vmatpush1.bf16.msra.mxu0 0
        %1109 = vmatprep.subr.bf16.mxu0 0
        %1110 = vmatpush1.bf16.msra.mxu0 0
        %1111 = vmatprep.subr.bf16.mxu0 0
        %1112 = vmatpush1.bf16.msra.mxu0 0
        %1113 = vmatprep.subr.bf16.mxu0 0
        %1114 = vmatpush1.bf16.msra.mxu0 0
        %1115 = vmatprep.subr.bf16.mxu0 0
        %1116 = vmatpush1.bf16.msra.mxu0 0
        %1117 = vmatprep.subr.bf16.mxu0 0
        %1118 = vmatpush1.bf16.msra.mxu0 0
        %1119 = vmatprep.subr.bf16.mxu0 0
        %1120 = vmatpush1.bf16.msra.mxu0 0
        %1121 = vmatprep.subr.bf16.mxu0 0
        %1122 = vmatpush1.bf16.msra.mxu0 0
        %1123 = vmatprep.subr.bf16.mxu0 0
        %1124 = vmatpush1.bf16.msra.mxu0 0
        %1125 = vmatprep.subr.bf16.mxu0 0
        %1126 = vmatpush1.bf16.msra.mxu0 0
        %1127 = vmatprep.subr.bf16.mxu0 0
        %1128 = vmatpush1.bf16.msra.mxu0 0
        %1129 = vmatprep.subr.bf16.mxu0 0
        %1130 = vmatpush1.bf16.msra.mxu0 0
        %1131 = vmatprep.subr.bf16.mxu0 0
        %1132 = vmatpush1.bf16.msra.mxu0 0
        %1133 = vmatprep.mubr.bf16.mxu0 0
        %1134 = vmatmul.mubr.bf16.gmra.mrb[0].mxu0 %v778
        %v1135 = vpop.f32.mrb[0].mxu0
        %v1136 = vadd.f32 0.0, %v1135
        %v1137 = vpop.f32.mrb[0].mxu0
        %v1138 = vadd.f32 0.0, %v1137
        %v1139 = vpop.f32.mrb[0].mxu0
        %v1140 = vadd.f32 0.0, %v1139
        %v1141 = vpop.f32.mrb[0].mxu0
        %v1142 = vadd.f32 0.0, %v1141
        %1143 = vmatprep.mubr.bf16.mxu0 0
        %1144 = vmatmul.mubr.bf16.gmra.mrb[0].mxu0 %v781
        %v1145 = vpop.f32.mrb[0].mxu0
        %v1146 = vadd.f32 0.0, %v1145
        %v1147 = vpop.f32.mrb[0].mxu0
        %v1148 = vadd.f32 0.0, %v1147
        %v1149 = vpop.f32.mrb[0].mxu0
        %v1150 = vadd.f32 0.0, %v1149
        %v1151 = vpop.f32.mrb[0].mxu0
        %v1152 = vadd.f32 0.0, %v1151
        %1153 = vmatprep.mubr.bf16.mxu0 0
        %1154 = vmatmul.mubr.bf16.gmra.mrb[0].mxu0 %v784
        %v1155 = vpop.f32.mrb[0].mxu0
        %v1156 = vadd.f32 0.0, %v1155
        %v1157 = vpop.f32.mrb[0].mxu0
        %v1158 = vadd.f32 0.0, %v1157
        %v1159 = vpop.f32.mrb[0].mxu0
        %v1160 = vadd.f32 0.0, %v1159
        %v1161 = vpop.f32.mrb[0].mxu0
        %v1162 = vadd.f32 0.0, %v1161
        %1163 = vmatprep.mubr.bf16.mxu0 0
        %1164 = vmatmul.mubr.bf16.gmra.mrb[0].mxu0 %v787
        %v1165 = vpop.f32.mrb[0].mxu0
        %v1166 = vadd.f32 0.0, %v1165
        %v1167 = vpop.f32.mrb[0].mxu0
        %v1168 = vadd.f32 0.0, %v1167
        %v1169 = vpop.f32.mrb[0].mxu0
        %v1170 = vadd.f32 0.0, %v1169
        %v1171 = vpop.f32.mrb[0].mxu0
        %v1172 = vadd.f32 0.0, %v1171
        %1173 = vmatprep.mubr.bf16.mxu0 0
        %1174 = vmatmul.mubr.bf16.gmra.mrb[0].mxu0 %v790
        %v1175 = vpop.f32.mrb[0].mxu0
        %v1176 = vadd.f32 0.0, %v1175
        %v1177 = vpop.f32.mrb[0].mxu0
        %v1178 = vadd.f32 0.0, %v1177
        %v1179 = vpop.f32.mrb[0].mxu0
        %v1180 = vadd.f32 0.0, %v1179
        %v1181 = vpop.f32.mrb[0].mxu0
        %v1182 = vadd.f32 0.0, %v1181
        %1183 = vmatprep.mubr.bf16.mxu0 0
        %1184 = vmatmul.mubr.bf16.gmra.mrb[0].mxu0 %v793
        %v1185 = vpop.f32.mrb[0].mxu0
        %v1186 = vadd.f32 0.0, %v1185
        %v1187 = vpop.f32.mrb[0].mxu0
        %v1188 = vadd.f32 0.0, %v1187
        %v1189 = vpop.f32.mrb[0].mxu0
        %v1190 = vadd.f32 0.0, %v1189
        %v1191 = vpop.f32.mrb[0].mxu0
        %v1192 = vadd.f32 0.0, %v1191
        %1193 = vmatprep.mubr.bf16.mxu0 0
        %1194 = vmatmul.mubr.bf16.gmra.mrb[0].mxu0 %v796
        %v1195 = vpop.f32.mrb[0].mxu0
        %v1196 = vadd.f32 0.0, %v1195
        %v1197 = vpop.f32.mrb[0].mxu0
        %v1198 = vadd.f32 0.0, %v1197
        %v1199 = vpop.f32.mrb[0].mxu0
        %v1200 = vadd.f32 0.0, %v1199
        %v1201 = vpop.f32.mrb[0].mxu0
        %v1202 = vadd.f32 0.0, %v1201
        %1203 = vmatprep.mubr.bf16.mxu0 0
        %1204 = vmatmul.mubr.bf16.gmra.mrb[0].mxu0 %v799
        %v1205 = vpop.f32.mrb[0].mxu0
        %v1206 = vadd.f32 0.0, %v1205
        %v1207 = vpop.f32.mrb[0].mxu0
        %v1208 = vadd.f32 0.0, %v1207
        %v1209 = vpop.f32.mrb[0].mxu0
        %v1210 = vadd.f32 0.0, %v1209
        %v1211 = vpop.f32.mrb[0].mxu0
        %v1212 = vadd.f32 0.0, %v1211
        %1213 = vdwg.mxu0
        %1214 = vmatprep.subr.bf16.mxu0 %v773
        %1215 = vmatpush1.bf16.msra.mxu0 %v772
        %1216 = vmatprep.subr.bf16.mxu0 0
        %1217 = vmatpush1.bf16.msra.mxu0 0
        %1218 = vmatprep.subr.bf16.mxu0 0
        %1219 = vmatpush1.bf16.msra.mxu0 0
        %1220 = vmatprep.subr.bf16.mxu0 0
        %1221 = vmatpush1.bf16.msra.mxu0 0
        %1222 = vmatprep.subr.bf16.mxu0 0
        %1223 = vmatpush1.bf16.msra.mxu0 0
        %1224 = vmatprep.subr.bf16.mxu0 0
        %1225 = vmatpush1.bf16.msra.mxu0 0
        %1226 = vmatprep.subr.bf16.mxu0 0
        %1227 = vmatpush1.bf16.msra.mxu0 0
        %1228 = vmatprep.subr.bf16.mxu0 0
        %1229 = vmatpush1.bf16.msra.mxu0 0
        %1230 = vmatprep.subr.bf16.mxu0 0
        %1231 = vmatpush1.bf16.msra.mxu0 0
        %1232 = vmatprep.subr.bf16.mxu0 0
        %1233 = vmatpush1.bf16.msra.mxu0 0
        %1234 = vmatprep.subr.bf16.mxu0 0
        %1235 = vmatpush1.bf16.msra.mxu0 0
        %1236 = vmatprep.subr.bf16.mxu0 0
        %1237 = vmatpush1.bf16.msra.mxu0 0
        %1238 = vmatprep.subr.bf16.mxu0 0
        %1239 = vmatpush1.bf16.msra.mxu0 0
        %1240 = vmatprep.subr.bf16.mxu0 0
        %1241 = vmatpush1.bf16.msra.mxu0 0
        %1242 = vmatprep.subr.bf16.mxu0 0
        %1243 = vmatpush1.bf16.msra.mxu0 0
        %1244 = vmatprep.subr.bf16.mxu0 0
        %1245 = vmatpush1.bf16.msra.mxu0 0
        %1246 = vmatprep.mubr.bf16.mxu0 0
        %1247 = vmatmul.mubr.bf16.gmra.mrb[0].mxu0 %v965
        %v1248 = vpop.f32.mrb[0].mxu0
        %v1249 = vadd.f32 0.0, %v1248
        %v1250 = vpop.f32.mrb[0].mxu0
        %v1251 = vadd.f32 0.0, %v1250
        %v1252 = vpop.f32.mrb[0].mxu0
        %v1253 = vadd.f32 0.0, %v1252
        %v1254 = vpop.f32.mrb[0].mxu0
        %v1255 = vadd.f32 0.0, %v1254
        %1256 = vmatprep.mubr.bf16.mxu0 0
        %1257 = vmatmul.mubr.bf16.gmra.mrb[0].mxu0 %v968
        %v1258 = vpop.f32.mrb[0].mxu0
        %v1259 = vadd.f32 0.0, %v1258
        %v1260 = vpop.f32.mrb[0].mxu0
        %v1261 = vadd.f32 0.0, %v1260
        %v1262 = vpop.f32.mrb[0].mxu0
        %v1263 = vadd.f32 0.0, %v1262
        %v1264 = vpop.f32.mrb[0].mxu0
        %v1265 = vadd.f32 0.0, %v1264
        %1266 = vmatprep.mubr.bf16.mxu0 0
        %1267 = vmatmul.mubr.bf16.gmra.mrb[0].mxu0 %v971
        %v1268 = vpop.f32.mrb[0].mxu0
        %v1269 = vadd.f32 0.0, %v1268
        %v1270 = vpop.f32.mrb[0].mxu0
        %v1271 = vadd.f32 0.0, %v1270
        %v1272 = vpop.f32.mrb[0].mxu0
        %v1273 = vadd.f32 0.0, %v1272
        %v1274 = vpop.f32.mrb[0].mxu0
        %v1275 = vadd.f32 0.0, %v1274
        %1276 = vmatprep.mubr.bf16.mxu0 0
        %1277 = vmatmul.mubr.bf16.gmra.mrb[0].mxu0 %v974
        %v1278 = vpop.f32.mrb[0].mxu0
        %v1279 = vadd.f32 0.0, %v1278
        %v1280 = vpop.f32.mrb[0].mxu0
        %v1281 = vadd.f32 0.0, %v1280
        %v1282 = vpop.f32.mrb[0].mxu0
        %v1283 = vadd.f32 0.0, %v1282
        %v1284 = vpop.f32.mrb[0].mxu0
        %v1285 = vadd.f32 0.0, %v1284
        %1286 = vmatprep.mubr.bf16.mxu0 0
        %1287 = vmatmul.mubr.bf16.gmra.mrb[0].mxu0 %v977
        %v1288 = vpop.f32.mrb[0].mxu0
        %v1289 = vadd.f32 0.0, %v1288
        %v1290 = vpop.f32.mrb[0].mxu0
        %v1291 = vadd.f32 0.0, %v1290
        %v1292 = vpop.f32.mrb[0].mxu0
        %v1293 = vadd.f32 0.0, %v1292
        %v1294 = vpop.f32.mrb[0].mxu0
        %v1295 = vadd.f32 0.0, %v1294
        %1296 = vmatprep.mubr.bf16.mxu0 0
        %1297 = vmatmul.mubr.bf16.gmra.mrb[0].mxu0 %v980
        %v1298 = vpop.f32.mrb[0].mxu0
        %v1299 = vadd.f32 0.0, %v1298
        %v1300 = vpop.f32.mrb[0].mxu0
        %v1301 = vadd.f32 0.0, %v1300
        %v1302 = vpop.f32.mrb[0].mxu0
        %v1303 = vadd.f32 0.0, %v1302
        %v1304 = vpop.f32.mrb[0].mxu0
        %v1305 = vadd.f32 0.0, %v1304
        %1306 = vmatprep.mubr.bf16.mxu0 0
        %1307 = vmatmul.mubr.bf16.gmra.mrb[0].mxu0 %v983
        %v1308 = vpop.f32.mrb[0].mxu0
        %v1309 = vadd.f32 0.0, %v1308
        %v1310 = vpop.f32.mrb[0].mxu0
        %v1311 = vadd.f32 0.0, %v1310
        %v1312 = vpop.f32.mrb[0].mxu0
        %v1313 = vadd.f32 0.0, %v1312
        %v1314 = vpop.f32.mrb[0].mxu0
        %v1315 = vadd.f32 0.0, %v1314
        %1316 = vmatprep.mubr.bf16.mxu0 0
        %1317 = vmatmul.mubr.bf16.gmra.mrb[0].mxu0 %v986
        %v1318 = vpop.f32.mrb[0].mxu0
        %v1319 = vadd.f32 0.0, %v1318
        %v1320 = vpop.f32.mrb[0].mxu0
        %v1321 = vadd.f32 0.0, %v1320
        %v1322 = vpop.f32.mrb[0].mxu0
        %v1323 = vadd.f32 0.0, %v1322
        %v1324 = vpop.f32.mrb[0].mxu0
        %v1325 = vadd.f32 0.0, %v1324
        %1326 = vdwg.mxu0
        %v1327 = vsub.f32 %v1136, %v1249
        %v1328 = vsub.f32 %v1138, %v1251
        %v1329 = vsub.f32 %v1140, %v1253
        %v1330 = vsub.f32 %v1142, %v1255
        %v1331 = vsub.f32 %v1146, %v1259
        %v1332 = vsub.f32 %v1148, %v1261
        %v1333 = vsub.f32 %v1150, %v1263
        %v1334 = vsub.f32 %v1152, %v1265
        %v1335 = vsub.f32 %v1156, %v1269
        %v1336 = vsub.f32 %v1158, %v1271
        %v1337 = vsub.f32 %v1160, %v1273
        %v1338 = vsub.f32 %v1162, %v1275
        %v1339 = vsub.f32 %v1166, %v1279
        %v1340 = vsub.f32 %v1168, %v1281
        %v1341 = vsub.f32 %v1170, %v1283
        %v1342 = vsub.f32 %v1172, %v1285
        %v1343 = vsub.f32 %v1176, %v1289
        %v1344 = vsub.f32 %v1178, %v1291
        %v1345 = vsub.f32 %v1180, %v1293
        %v1346 = vsub.f32 %v1182, %v1295
        %v1347 = vsub.f32 %v1186, %v1299
        %v1348 = vsub.f32 %v1188, %v1301
        %v1349 = vsub.f32 %v1190, %v1303
        %v1350 = vsub.f32 %v1192, %v1305
        %v1351 = vsub.f32 %v1196, %v1309
        %v1352 = vsub.f32 %v1198, %v1311
        %v1353 = vsub.f32 %v1200, %v1313
        %v1354 = vsub.f32 %v1202, %v1315
        %v1355 = vsub.f32 %v1206, %v1319
        %v1356 = vsub.f32 %v1208, %v1321
        %v1357 = vsub.f32 %v1210, %v1323
        %v1358 = vsub.f32 %v1212, %v1325
        %v1359 = vld [vmem:[%s553] sm:$0xff]
        %v1360 = vld [vmem:[%s553 + $0x8] sm:$0xff]
        %v1361 = vld [vmem:[%s553 + $0x10] sm:$0xff]
        %v1362 = vld [vmem:[%s553 + $0x18] sm:$0xff]
        %v1363 = vld [vmem:[%s560] sm:$0xff]
        %v1364 = vld [vmem:[%s560 + $0x8] sm:$0xff]
        %v1365 = vld [vmem:[%s560 + $0x10] sm:$0xff]
        %v1366 = vld [vmem:[%s560 + $0x18] sm:$0xff]
        %v1367 = vmul.f32 %v1359, %v1023
        %v1368 = vmul.f32 %v1360, %v1025
        %v1369 = vmul.f32 %v1361, %v1027
        %v1370 = vmul.f32 %v1362, %v1029
        %v1371 = vmul.f32 %v1359, %v1033
        %v1372 = vmul.f32 %v1360, %v1035
        %v1373 = vmul.f32 %v1361, %v1037
        %v1374 = vmul.f32 %v1362, %v1039
        %v1375 = vmul.f32 %v1359, %v1043
        %v1376 = vmul.f32 %v1360, %v1045
        %v1377 = vmul.f32 %v1361, %v1047
        %v1378 = vmul.f32 %v1362, %v1049
        %v1379 = vmul.f32 %v1359, %v1053
        %v1380 = vmul.f32 %v1360, %v1055
        %v1381 = vmul.f32 %v1361, %v1057
        %v1382 = vmul.f32 %v1362, %v1059
        %v1383 = vmul.f32 %v1359, %v1063
        %v1384 = vmul.f32 %v1360, %v1065
        %v1385 = vmul.f32 %v1361, %v1067
        %v1386 = vmul.f32 %v1362, %v1069
        %v1387 = vmul.f32 %v1359, %v1073
        %v1388 = vmul.f32 %v1360, %v1075
        %v1389 = vmul.f32 %v1361, %v1077
        %v1390 = vmul.f32 %v1362, %v1079
        %v1391 = vmul.f32 %v1359, %v1083
        %v1392 = vmul.f32 %v1360, %v1085
        %v1393 = vmul.f32 %v1361, %v1087
        %v1394 = vmul.f32 %v1362, %v1089
        %v1395 = vmul.f32 %v1359, %v1093
        %v1396 = vmul.f32 %v1360, %v1095
        %v1397 = vmul.f32 %v1361, %v1097
        %v1398 = vmul.f32 %v1362, %v1099
        %v1399 = vmul.f32 %v1363, %v1327
        %v1400 = vmul.f32 %v1364, %v1328
        %v1401 = vmul.f32 %v1365, %v1329
        %v1402 = vmul.f32 %v1366, %v1330
        %v1403 = vmul.f32 %v1363, %v1331
        %v1404 = vmul.f32 %v1364, %v1332
        %v1405 = vmul.f32 %v1365, %v1333
        %v1406 = vmul.f32 %v1366, %v1334
        %v1407 = vmul.f32 %v1363, %v1335
        %v1408 = vmul.f32 %v1364, %v1336
        %v1409 = vmul.f32 %v1365, %v1337
        %v1410 = vmul.f32 %v1366, %v1338
        %v1411 = vmul.f32 %v1363, %v1339
        %v1412 = vmul.f32 %v1364, %v1340
        %v1413 = vmul.f32 %v1365, %v1341
        %v1414 = vmul.f32 %v1366, %v1342
        %v1415 = vmul.f32 %v1363, %v1343
        %v1416 = vmul.f32 %v1364, %v1344
        %v1417 = vmul.f32 %v1365, %v1345
        %v1418 = vmul.f32 %v1366, %v1346
        %v1419 = vmul.f32 %v1363, %v1347
        %v1420 = vmul.f32 %v1364, %v1348
        %v1421 = vmul.f32 %v1365, %v1349
        %v1422 = vmul.f32 %v1366, %v1350
        %v1423 = vmul.f32 %v1363, %v1351
        %v1424 = vmul.f32 %v1364, %v1352
        %v1425 = vmul.f32 %v1365, %v1353
        %v1426 = vmul.f32 %v1366, %v1354
        %v1427 = vmul.f32 %v1363, %v1355
        %v1428 = vmul.f32 %v1364, %v1356
        %v1429 = vmul.f32 %v1365, %v1357
        %v1430 = vmul.f32 %v1366, %v1358
        %v1431 = vadd.f32 %v1367, %v1399
        %v1432 = vadd.f32 %v1368, %v1400
        %v1433 = vadd.f32 %v1369, %v1401
        %v1434 = vadd.f32 %v1370, %v1402
        %v1435 = vadd.f32 %v1371, %v1403
        %v1436 = vadd.f32 %v1372, %v1404
        %v1437 = vadd.f32 %v1373, %v1405
        %v1438 = vadd.f32 %v1374, %v1406
        %v1439 = vadd.f32 %v1375, %v1407
        %v1440 = vadd.f32 %v1376, %v1408
        %v1441 = vadd.f32 %v1377, %v1409
        %v1442 = vadd.f32 %v1378, %v1410
        %v1443 = vadd.f32 %v1379, %v1411
        %v1444 = vadd.f32 %v1380, %v1412
        %v1445 = vadd.f32 %v1381, %v1413
        %v1446 = vadd.f32 %v1382, %v1414
        %v1447 = vadd.f32 %v1383, %v1415
        %v1448 = vadd.f32 %v1384, %v1416
        %v1449 = vadd.f32 %v1385, %v1417
        %v1450 = vadd.f32 %v1386, %v1418
        %v1451 = vadd.f32 %v1387, %v1419
        %v1452 = vadd.f32 %v1388, %v1420
        %v1453 = vadd.f32 %v1389, %v1421
        %v1454 = vadd.f32 %v1390, %v1422
        %v1455 = vadd.f32 %v1391, %v1423
        %v1456 = vadd.f32 %v1392, %v1424
        %v1457 = vadd.f32 %v1393, %v1425
        %v1458 = vadd.f32 %v1394, %v1426
        %v1459 = vadd.f32 %v1395, %v1427
        %v1460 = vadd.f32 %v1396, %v1428
        %v1461 = vadd.f32 %v1397, %v1429
        %v1462 = vadd.f32 %v1398, %v1430
        %v1463 = vadd.f32 %v1431, %v1433
        %v1464 = vrot.slane %v1463, 4
        %v1465 = vadd.f32 %v1463, %v1464
        %v1466 = vrot.slane %v1465, 2
        %v1467 = vadd.f32 %v1465, %v1466
        %v1468 = vrot.slane %v1467, 1
        %v1469 = vadd.f32 %v1467, %v1468
        %v1470 = vadd.f32 %v1432, %v1434
        %v1471 = vrot.slane %v1470, 4
        %v1472 = vadd.f32 %v1470, %v1471
        %v1473 = vrot.slane %v1472, 2
        %v1474 = vadd.f32 %v1472, %v1473
        %v1475 = vrot.slane %v1474, 1
        %v1476 = vadd.f32 %v1474, %v1475
        %v1477 = vadd.f32 %v1435, %v1437
        %v1478 = vrot.slane %v1477, 4
        %v1479 = vadd.f32 %v1477, %v1478
        %v1480 = vrot.slane %v1479, 2
        %v1481 = vadd.f32 %v1479, %v1480
        %v1482 = vrot.slane %v1481, 1
        %v1483 = vadd.f32 %v1481, %v1482
        %v1484 = vadd.f32 %v1436, %v1438
        %v1485 = vrot.slane %v1484, 4
        %v1486 = vadd.f32 %v1484, %v1485
        %v1487 = vrot.slane %v1486, 2
        %v1488 = vadd.f32 %v1486, %v1487
        %v1489 = vrot.slane %v1488, 1
        %v1490 = vadd.f32 %v1488, %v1489
        %v1491 = vadd.f32 %v1439, %v1441
        %v1492 = vrot.slane %v1491, 4
        %v1493 = vadd.f32 %v1491, %v1492
        %v1494 = vrot.slane %v1493, 2
        %v1495 = vadd.f32 %v1493, %v1494
        %v1496 = vrot.slane %v1495, 1
        %v1497 = vadd.f32 %v1495, %v1496
        %v1498 = vadd.f32 %v1440, %v1442
        %v1499 = vrot.slane %v1498, 4
        %v1500 = vadd.f32 %v1498, %v1499
        %v1501 = vrot.slane %v1500, 2
        %v1502 = vadd.f32 %v1500, %v1501
        %v1503 = vrot.slane %v1502, 1
        %v1504 = vadd.f32 %v1502, %v1503
        %v1505 = vadd.f32 %v1443, %v1445
        %v1506 = vrot.slane %v1505, 4
        %v1507 = vadd.f32 %v1505, %v1506
        %v1508 = vrot.slane %v1507, 2
        %v1509 = vadd.f32 %v1507, %v1508
        %v1510 = vrot.slane %v1509, 1
        %v1511 = vadd.f32 %v1509, %v1510
        %v1512 = vadd.f32 %v1444, %v1446
        %v1513 = vrot.slane %v1512, 4
        %v1514 = vadd.f32 %v1512, %v1513
        %v1515 = vrot.slane %v1514, 2
        %v1516 = vadd.f32 %v1514, %v1515
        %v1517 = vrot.slane %v1516, 1
        %v1518 = vadd.f32 %v1516, %v1517
        %v1519 = vadd.f32 %v1447, %v1449
        %v1520 = vrot.slane %v1519, 4
        %v1521 = vadd.f32 %v1519, %v1520
        %v1522 = vrot.slane %v1521, 2
        %v1523 = vadd.f32 %v1521, %v1522
        %v1524 = vrot.slane %v1523, 1
        %v1525 = vadd.f32 %v1523, %v1524
        %v1526 = vadd.f32 %v1448, %v1450
        %v1527 = vrot.slane %v1526, 4
        %v1528 = vadd.f32 %v1526, %v1527
        %v1529 = vrot.slane %v1528, 2
        %v1530 = vadd.f32 %v1528, %v1529
        %v1531 = vrot.slane %v1530, 1
        %v1532 = vadd.f32 %v1530, %v1531
        %v1533 = vadd.f32 %v1451, %v1453
        %v1534 = vrot.slane %v1533, 4
        %v1535 = vadd.f32 %v1533, %v1534
        %v1536 = vrot.slane %v1535, 2
        %v1537 = vadd.f32 %v1535, %v1536
        %v1538 = vrot.slane %v1537, 1
        %v1539 = vadd.f32 %v1537, %v1538
        %v1540 = vadd.f32 %v1452, %v1454
        %v1541 = vrot.slane %v1540, 4
        %v1542 = vadd.f32 %v1540, %v1541
        %v1543 = vrot.slane %v1542, 2
        %v1544 = vadd.f32 %v1542, %v1543
        %v1545 = vrot.slane %v1544, 1
        %v1546 = vadd.f32 %v1544, %v1545
        %v1547 = vadd.f32 %v1455, %v1457
        %v1548 = vrot.slane %v1547, 4
        %v1549 = vadd.f32 %v1547, %v1548
        %v1550 = vrot.slane %v1549, 2
        %v1551 = vadd.f32 %v1549, %v1550
        %v1552 = vrot.slane %v1551, 1
        %v1553 = vadd.f32 %v1551, %v1552
        %v1554 = vadd.f32 %v1456, %v1458
        %v1555 = vrot.slane %v1554, 4
        %v1556 = vadd.f32 %v1554, %v1555
        %v1557 = vrot.slane %v1556, 2
        %v1558 = vadd.f32 %v1556, %v1557
        %v1559 = vrot.slane %v1558, 1
        %v1560 = vadd.f32 %v1558, %v1559
        %v1561 = vadd.f32 %v1459, %v1461
        %v1562 = vrot.slane %v1561, 4
        %v1563 = vadd.f32 %v1561, %v1562
        %v1564 = vrot.slane %v1563, 2
        %v1565 = vadd.f32 %v1563, %v1564
        %v1566 = vrot.slane %v1565, 1
        %v1567 = vadd.f32 %v1565, %v1566
        %v1568 = vadd.f32 %v1460, %v1462
        %v1569 = vrot.slane %v1568, 4
        %v1570 = vadd.f32 %v1568, %v1569
        %v1571 = vrot.slane %v1570, 2
        %v1572 = vadd.f32 %v1570, %v1571
        %v1573 = vrot.slane %v1572, 1
        %v1574 = vadd.f32 %v1572, %v1573
        %v1575 = vmul.f32 %v1359, %v1327
        %v1576 = vmul.f32 %v1360, %v1328
        %v1577 = vmul.f32 %v1361, %v1329
        %v1578 = vmul.f32 %v1362, %v1330
        %v1579 = vmul.f32 %v1359, %v1331
        %v1580 = vmul.f32 %v1360, %v1332
        %v1581 = vmul.f32 %v1361, %v1333
        %v1582 = vmul.f32 %v1362, %v1334
        %v1583 = vmul.f32 %v1359, %v1335
        %v1584 = vmul.f32 %v1360, %v1336
        %v1585 = vmul.f32 %v1361, %v1337
        %v1586 = vmul.f32 %v1362, %v1338
        %v1587 = vmul.f32 %v1359, %v1339
        %v1588 = vmul.f32 %v1360, %v1340
        %v1589 = vmul.f32 %v1361, %v1341
        %v1590 = vmul.f32 %v1362, %v1342
        %v1591 = vmul.f32 %v1359, %v1343
        %v1592 = vmul.f32 %v1360, %v1344
        %v1593 = vmul.f32 %v1361, %v1345
        %v1594 = vmul.f32 %v1362, %v1346
        %v1595 = vmul.f32 %v1359, %v1347
        %v1596 = vmul.f32 %v1360, %v1348
        %v1597 = vmul.f32 %v1361, %v1349
        %v1598 = vmul.f32 %v1362, %v1350
        %v1599 = vmul.f32 %v1359, %v1351
        %v1600 = vmul.f32 %v1360, %v1352
        %v1601 = vmul.f32 %v1361, %v1353
        %v1602 = vmul.f32 %v1362, %v1354
        %v1603 = vmul.f32 %v1359, %v1355
        %v1604 = vmul.f32 %v1360, %v1356
        %v1605 = vmul.f32 %v1361, %v1357
        %v1606 = vmul.f32 %v1362, %v1358
        %v1607 = vmul.f32 %v1363, %v1023
        %v1608 = vmul.f32 %v1364, %v1025
        %v1609 = vmul.f32 %v1365, %v1027
        %v1610 = vmul.f32 %v1366, %v1029
        %v1611 = vmul.f32 %v1363, %v1033
        %v1612 = vmul.f32 %v1364, %v1035
        %v1613 = vmul.f32 %v1365, %v1037
        %v1614 = vmul.f32 %v1366, %v1039
        %v1615 = vmul.f32 %v1363, %v1043
        %v1616 = vmul.f32 %v1364, %v1045
        %v1617 = vmul.f32 %v1365, %v1047
        %v1618 = vmul.f32 %v1366, %v1049
        %v1619 = vmul.f32 %v1363, %v1053
        %v1620 = vmul.f32 %v1364, %v1055
        %v1621 = vmul.f32 %v1365, %v1057
        %v1622 = vmul.f32 %v1366, %v1059
        %v1623 = vmul.f32 %v1363, %v1063
        %v1624 = vmul.f32 %v1364, %v1065
        %v1625 = vmul.f32 %v1365, %v1067
        %v1626 = vmul.f32 %v1366, %v1069
        %v1627 = vmul.f32 %v1363, %v1073
        %v1628 = vmul.f32 %v1364, %v1075
        %v1629 = vmul.f32 %v1365, %v1077
        %v1630 = vmul.f32 %v1366, %v1079
        %v1631 = vmul.f32 %v1363, %v1083
        %v1632 = vmul.f32 %v1364, %v1085
        %v1633 = vmul.f32 %v1365, %v1087
        %v1634 = vmul.f32 %v1366, %v1089
        %v1635 = vmul.f32 %v1363, %v1093
        %v1636 = vmul.f32 %v1364, %v1095
        %v1637 = vmul.f32 %v1365, %v1097
        %v1638 = vmul.f32 %v1366, %v1099
        %v1639 = vsub.f32 %v1575, %v1607
        %v1640 = vsub.f32 %v1576, %v1608
        %v1641 = vsub.f32 %v1577, %v1609
        %v1642 = vsub.f32 %v1578, %v1610
        %v1643 = vsub.f32 %v1579, %v1611
        %v1644 = vsub.f32 %v1580, %v1612
        %v1645 = vsub.f32 %v1581, %v1613
        %v1646 = vsub.f32 %v1582, %v1614
        %v1647 = vsub.f32 %v1583, %v1615
        %v1648 = vsub.f32 %v1584, %v1616
        %v1649 = vsub.f32 %v1585, %v1617
        %v1650 = vsub.f32 %v1586, %v1618
        %v1651 = vsub.f32 %v1587, %v1619
        %v1652 = vsub.f32 %v1588, %v1620
        %v1653 = vsub.f32 %v1589, %v1621
        %v1654 = vsub.f32 %v1590, %v1622
        %v1655 = vsub.f32 %v1591, %v1623
        %v1656 = vsub.f32 %v1592, %v1624
        %v1657 = vsub.f32 %v1593, %v1625
        %v1658 = vsub.f32 %v1594, %v1626
        %v1659 = vsub.f32 %v1595, %v1627
        %v1660 = vsub.f32 %v1596, %v1628
        %v1661 = vsub.f32 %v1597, %v1629
        %v1662 = vsub.f32 %v1598, %v1630
        %v1663 = vsub.f32 %v1599, %v1631
        %v1664 = vsub.f32 %v1600, %v1632
        %v1665 = vsub.f32 %v1601, %v1633
        %v1666 = vsub.f32 %v1602, %v1634
        %v1667 = vsub.f32 %v1603, %v1635
        %v1668 = vsub.f32 %v1604, %v1636
        %v1669 = vsub.f32 %v1605, %v1637
        %v1670 = vsub.f32 %v1606, %v1638
        %v1671 = vadd.f32 %v1639, %v1641
        %v1672 = vrot.slane %v1671, 4
        %v1673 = vadd.f32 %v1671, %v1672
        %v1674 = vrot.slane %v1673, 2
        %v1675 = vadd.f32 %v1673, %v1674
        %v1676 = vrot.slane %v1675, 1
        %v1677 = vadd.f32 %v1675, %v1676
        %v1678 = vadd.f32 %v1640, %v1642
        %v1679 = vrot.slane %v1678, 4
        %v1680 = vadd.f32 %v1678, %v1679
        %v1681 = vrot.slane %v1680, 2
        %v1682 = vadd.f32 %v1680, %v1681
        %v1683 = vrot.slane %v1682, 1
        %v1684 = vadd.f32 %v1682, %v1683
        %v1685 = vadd.f32 %v1643, %v1645
        %v1686 = vrot.slane %v1685, 4
        %v1687 = vadd.f32 %v1685, %v1686
        %v1688 = vrot.slane %v1687, 2
        %v1689 = vadd.f32 %v1687, %v1688
        %v1690 = vrot.slane %v1689, 1
        %v1691 = vadd.f32 %v1689, %v1690
        %v1692 = vadd.f32 %v1644, %v1646
        %v1693 = vrot.slane %v1692, 4
        %v1694 = vadd.f32 %v1692, %v1693
        %v1695 = vrot.slane %v1694, 2
        %v1696 = vadd.f32 %v1694, %v1695
        %v1697 = vrot.slane %v1696, 1
        %v1698 = vadd.f32 %v1696, %v1697
        %v1699 = vadd.f32 %v1647, %v1649
        %v1700 = vrot.slane %v1699, 4
        %v1701 = vadd.f32 %v1699, %v1700
        %v1702 = vrot.slane %v1701, 2
        %v1703 = vadd.f32 %v1701, %v1702
        %v1704 = vrot.slane %v1703, 1
        %v1705 = vadd.f32 %v1703, %v1704
        %v1706 = vadd.f32 %v1648, %v1650
        %v1707 = vrot.slane %v1706, 4
        %v1708 = vadd.f32 %v1706, %v1707
        %v1709 = vrot.slane %v1708, 2
        %v1710 = vadd.f32 %v1708, %v1709
        %v1711 = vrot.slane %v1710, 1
        %v1712 = vadd.f32 %v1710, %v1711
        %v1713 = vadd.f32 %v1651, %v1653
        %v1714 = vrot.slane %v1713, 4
        %v1715 = vadd.f32 %v1713, %v1714
        %v1716 = vrot.slane %v1715, 2
        %v1717 = vadd.f32 %v1715, %v1716
        %v1718 = vrot.slane %v1717, 1
        %v1719 = vadd.f32 %v1717, %v1718
        %v1720 = vadd.f32 %v1652, %v1654
        %v1721 = vrot.slane %v1720, 4
        %v1722 = vadd.f32 %v1720, %v1721
        %v1723 = vrot.slane %v1722, 2
        %v1724 = vadd.f32 %v1722, %v1723
        %v1725 = vrot.slane %v1724, 1
        %v1726 = vadd.f32 %v1724, %v1725
        %v1727 = vadd.f32 %v1655, %v1657
        %v1728 = vrot.slane %v1727, 4
        %v1729 = vadd.f32 %v1727, %v1728
        %v1730 = vrot.slane %v1729, 2
        %v1731 = vadd.f32 %v1729, %v1730
        %v1732 = vrot.slane %v1731, 1
        %v1733 = vadd.f32 %v1731, %v1732
        %v1734 = vadd.f32 %v1656, %v1658
        %v1735 = vrot.slane %v1734, 4
        %v1736 = vadd.f32 %v1734, %v1735
        %v1737 = vrot.slane %v1736, 2
        %v1738 = vadd.f32 %v1736, %v1737
        %v1739 = vrot.slane %v1738, 1
        %v1740 = vadd.f32 %v1738, %v1739
        %v1741 = vadd.f32 %v1659, %v1661
        %v1742 = vrot.slane %v1741, 4
        %v1743 = vadd.f32 %v1741, %v1742
        %v1744 = vrot.slane %v1743, 2
        %v1745 = vadd.f32 %v1743, %v1744
        %v1746 = vrot.slane %v1745, 1
        %v1747 = vadd.f32 %v1745, %v1746
        %v1748 = vadd.f32 %v1660, %v1662
        %v1749 = vrot.slane %v1748, 4
        %v1750 = vadd.f32 %v1748, %v1749
        %v1751 = vrot.slane %v1750, 2
        %v1752 = vadd.f32 %v1750, %v1751
        %v1753 = vrot.slane %v1752, 1
        %v1754 = vadd.f32 %v1752, %v1753
        %v1755 = vadd.f32 %v1663, %v1665
        %v1756 = vrot.slane %v1755, 4
        %v1757 = vadd.f32 %v1755, %v1756
        %v1758 = vrot.slane %v1757, 2
        %v1759 = vadd.f32 %v1757, %v1758
        %v1760 = vrot.slane %v1759, 1
        %v1761 = vadd.f32 %v1759, %v1760
        %v1762 = vadd.f32 %v1664, %v1666
        %v1763 = vrot.slane %v1762, 4
        %v1764 = vadd.f32 %v1762, %v1763
        %v1765 = vrot.slane %v1764, 2
        %v1766 = vadd.f32 %v1764, %v1765
        %v1767 = vrot.slane %v1766, 1
        %v1768 = vadd.f32 %v1766, %v1767
        %v1769 = vadd.f32 %v1667, %v1669
        %v1770 = vrot.slane %v1769, 4
        %v1771 = vadd.f32 %v1769, %v1770
        %v1772 = vrot.slane %v1771, 2
        %v1773 = vadd.f32 %v1771, %v1772
        %v1774 = vrot.slane %v1773, 1
        %v1775 = vadd.f32 %v1773, %v1774
        %v1776 = vadd.f32 %v1668, %v1670
        %v1777 = vrot.slane %v1776, 4
        %v1778 = vadd.f32 %v1776, %v1777
        %v1779 = vrot.slane %v1778, 2
        %v1780 = vadd.f32 %v1778, %v1779
        %v1781 = vrot.slane %v1780, 1
        %v1782 = vadd.f32 %v1780, %v1781
        %v1783 = vld [vmem:[%s628] sm:$0xff]
        %v1784 = vld [vmem:[%s628 + $0x8] sm:$0xff]
        %v1787 = vrot.slane %v1783, 1
        %v1788 = vrot.slane %v1784, 1
        %v1789 = vrot.slane %v1783, 2
        %v1790 = vrot.slane %v1784, 2
        %v1791 = vrot.slane %v1783, 3
        %v1792 = vrot.slane %v1784, 3
        %v1793 = vrot.slane %v1783, 4
        %v1794 = vrot.slane %v1784, 4
        %v1795 = vrot.slane %v1783, 5
        %v1796 = vrot.slane %v1784, 5
        %v1797 = vrot.slane %v1783, 6
        %v1798 = vrot.slane %v1784, 6
        %v1799 = vrot.slane %v1783, 7
        %v1800 = vrot.slane %v1784, 7
        %v1817 = vsub.f32 %v1469, %v1783
        %v1818 = vsub.f32 %v1476, %v1784
        %v1819 = vsub.f32 %v1483, %v1787
        %v1820 = vsub.f32 %v1490, %v1788
        %v1821 = vsub.f32 %v1497, %v1789
        %v1822 = vsub.f32 %v1504, %v1790
        %v1823 = vsub.f32 %v1511, %v1791
        %v1824 = vsub.f32 %v1518, %v1792
        %v1825 = vsub.f32 %v1525, %v1793
        %v1826 = vsub.f32 %v1532, %v1794
        %v1827 = vsub.f32 %v1539, %v1795
        %v1828 = vsub.f32 %v1546, %v1796
        %v1829 = vsub.f32 %v1553, %v1797
        %v1830 = vsub.f32 %v1560, %v1798
        %v1831 = vsub.f32 %v1567, %v1799
        %v1832 = vsub.f32 %v1574, %v1800
        %v1833 = vld [vmem:[%s634] sm:$0xff]
        %v1834 = vld [vmem:[%s634 + $0x8] sm:$0xff]
        %v1837 = vrot.slane %v1833, 1
        %v1838 = vrot.slane %v1834, 1
        %v1839 = vrot.slane %v1833, 2
        %v1840 = vrot.slane %v1834, 2
        %v1841 = vrot.slane %v1833, 3
        %v1842 = vrot.slane %v1834, 3
        %v1843 = vrot.slane %v1833, 4
        %v1844 = vrot.slane %v1834, 4
        %v1845 = vrot.slane %v1833, 5
        %v1846 = vrot.slane %v1834, 5
        %v1847 = vrot.slane %v1833, 6
        %v1848 = vrot.slane %v1834, 6
        %v1849 = vrot.slane %v1833, 7
        %v1850 = vrot.slane %v1834, 7
        %v1867 = vsub.f32 %v1677, %v1833
        %v1868 = vsub.f32 %v1684, %v1834
        %v1869 = vsub.f32 %v1691, %v1837
        %v1870 = vsub.f32 %v1698, %v1838
        %v1871 = vsub.f32 %v1705, %v1839
        %v1872 = vsub.f32 %v1712, %v1840
        %v1873 = vsub.f32 %v1719, %v1841
        %v1874 = vsub.f32 %v1726, %v1842
        %v1875 = vsub.f32 %v1733, %v1843
        %v1876 = vsub.f32 %v1740, %v1844
        %v1877 = vsub.f32 %v1747, %v1845
        %v1878 = vsub.f32 %v1754, %v1846
        %v1879 = vsub.f32 %v1761, %v1847
        %v1880 = vsub.f32 %v1768, %v1848
        %v1881 = vsub.f32 %v1775, %v1849
        %v1882 = vsub.f32 %v1782, %v1850
        %v1883 = vlaneseq
        %v1884 = vshrl.u32 %v1883, 7
        %v1885 = vsub.s32 0, %v1884
        %v1886 = vrot.slane %v1817, %v1885
        %v1887 = vlaneseq
        %v1888 = vshrl.u32 %v1887, 7
        %v1889 = vsub.s32 0, %v1888
        %v1890 = vrot.slane %v1818, %v1889
        %v1891 = vlaneseq
        %v1892 = vshrl.u32 %v1891, 7
        %v1893 = vsub.s32 0, %v1892
        %v1894 = vrot.slane %v1819, %v1893
        %v1895 = vlaneseq
        %v1896 = vshrl.u32 %v1895, 7
        %v1897 = vsub.s32 0, %v1896
        %v1898 = vrot.slane %v1820, %v1897
        %v1899 = vlaneseq
        %v1900 = vshrl.u32 %v1899, 7
        %v1901 = vsub.s32 0, %v1900
        %v1902 = vrot.slane %v1821, %v1901
        %v1903 = vlaneseq
        %v1904 = vshrl.u32 %v1903, 7
        %v1905 = vsub.s32 0, %v1904
        %v1906 = vrot.slane %v1822, %v1905
        %v1907 = vlaneseq
        %v1908 = vshrl.u32 %v1907, 7
        %v1909 = vsub.s32 0, %v1908
        %v1910 = vrot.slane %v1823, %v1909
        %v1911 = vlaneseq
        %v1912 = vshrl.u32 %v1911, 7
        %v1913 = vsub.s32 0, %v1912
        %v1914 = vrot.slane %v1824, %v1913
        %v1915 = vlaneseq
        %v1916 = vshrl.u32 %v1915, 7
        %v1917 = vsub.s32 0, %v1916
        %v1918 = vrot.slane %v1825, %v1917
        %v1919 = vlaneseq
        %v1920 = vshrl.u32 %v1919, 7
        %v1921 = vsub.s32 0, %v1920
        %v1922 = vrot.slane %v1826, %v1921
        %v1923 = vlaneseq
        %v1924 = vshrl.u32 %v1923, 7
        %v1925 = vsub.s32 0, %v1924
        %v1926 = vrot.slane %v1827, %v1925
        %v1927 = vlaneseq
        %v1928 = vshrl.u32 %v1927, 7
        %v1929 = vsub.s32 0, %v1928
        %v1930 = vrot.slane %v1828, %v1929
        %v1931 = vlaneseq
        %v1932 = vshrl.u32 %v1931, 7
        %v1933 = vsub.s32 0, %v1932
        %v1934 = vrot.slane %v1829, %v1933
        %v1935 = vlaneseq
        %v1936 = vshrl.u32 %v1935, 7
        %v1937 = vsub.s32 0, %v1936
        %v1938 = vrot.slane %v1830, %v1937
        %v1939 = vlaneseq
        %v1940 = vshrl.u32 %v1939, 7
        %v1941 = vsub.s32 0, %v1940
        %v1942 = vrot.slane %v1831, %v1941
        %v1943 = vlaneseq
        %v1944 = vshrl.u32 %v1943, 7
        %v1945 = vsub.s32 0, %v1944
        %v1946 = vrot.slane %v1832, %v1945
        %v1947 = vmul.f32 %v1886, %v1359
        %v1948 = vmul.f32 %v1890, %v1360
        %v1949 = vmul.f32 %v1886, %v1361
        %v1950 = vmul.f32 %v1890, %v1362
        %v1951 = vmul.f32 %v1894, %v1359
        %v1952 = vmul.f32 %v1898, %v1360
        %v1953 = vmul.f32 %v1894, %v1361
        %v1954 = vmul.f32 %v1898, %v1362
        %v1955 = vmul.f32 %v1902, %v1359
        %v1956 = vmul.f32 %v1906, %v1360
        %v1957 = vmul.f32 %v1902, %v1361
        %v1958 = vmul.f32 %v1906, %v1362
        %v1959 = vmul.f32 %v1910, %v1359
        %v1960 = vmul.f32 %v1914, %v1360
        %v1961 = vmul.f32 %v1910, %v1361
        %v1962 = vmul.f32 %v1914, %v1362
        %v1963 = vmul.f32 %v1918, %v1359
        %v1964 = vmul.f32 %v1922, %v1360
        %v1965 = vmul.f32 %v1918, %v1361
        %v1966 = vmul.f32 %v1922, %v1362
        %v1967 = vmul.f32 %v1926, %v1359
        %v1968 = vmul.f32 %v1930, %v1360
        %v1969 = vmul.f32 %v1926, %v1361
        %v1970 = vmul.f32 %v1930, %v1362
        %v1971 = vmul.f32 %v1934, %v1359
        %v1972 = vmul.f32 %v1938, %v1360
        %v1973 = vmul.f32 %v1934, %v1361
        %v1974 = vmul.f32 %v1938, %v1362
        %v1975 = vmul.f32 %v1942, %v1359
        %v1976 = vmul.f32 %v1946, %v1360
        %v1977 = vmul.f32 %v1942, %v1361
        %v1978 = vmul.f32 %v1946, %v1362
        %v1979 = vlaneseq
        %v1980 = vshrl.u32 %v1979, 7
        %v1981 = vsub.s32 0, %v1980
        %v1982 = vrot.slane %v1867, %v1981
        %v1983 = vlaneseq
        %v1984 = vshrl.u32 %v1983, 7
        %v1985 = vsub.s32 0, %v1984
        %v1986 = vrot.slane %v1868, %v1985
        %v1987 = vlaneseq
        %v1988 = vshrl.u32 %v1987, 7
        %v1989 = vsub.s32 0, %v1988
        %v1990 = vrot.slane %v1869, %v1989
        %v1991 = vlaneseq
        %v1992 = vshrl.u32 %v1991, 7
        %v1993 = vsub.s32 0, %v1992
        %v1994 = vrot.slane %v1870, %v1993
        %v1995 = vlaneseq
        %v1996 = vshrl.u32 %v1995, 7
        %v1997 = vsub.s32 0, %v1996
        %v1998 = vrot.slane %v1871, %v1997
        %v1999 = vlaneseq
        %v2000 = vshrl.u32 %v1999, 7
        %v2001 = vsub.s32 0, %v2000
        %v2002 = vrot.slane %v1872, %v2001
        %v2003 = vlaneseq
        %v2004 = vshrl.u32 %v2003, 7
        %v2005 = vsub.s32 0, %v2004
        %v2006 = vrot.slane %v1873, %v2005
        %v2007 = vlaneseq
        %v2008 = vshrl.u32 %v2007, 7
        %v2009 = vsub.s32 0, %v2008
        %v2010 = vrot.slane %v1874, %v2009
        %v2011 = vlaneseq
        %v2012 = vshrl.u32 %v2011, 7
        %v2013 = vsub.s32 0, %v2012
        %v2014 = vrot.slane %v1875, %v2013
        %v2015 = vlaneseq
        %v2016 = vshrl.u32 %v2015, 7
        %v2017 = vsub.s32 0, %v2016
        %v2018 = vrot.slane %v1876, %v2017
        %v2019 = vlaneseq
        %v2020 = vshrl.u32 %v2019, 7
        %v2021 = vsub.s32 0, %v2020
        %v2022 = vrot.slane %v1877, %v2021
        %v2023 = vlaneseq
        %v2024 = vshrl.u32 %v2023, 7
        %v2025 = vsub.s32 0, %v2024
        %v2026 = vrot.slane %v1878, %v2025
        %v2027 = vlaneseq
        %v2028 = vshrl.u32 %v2027, 7
        %v2029 = vsub.s32 0, %v2028
        %v2030 = vrot.slane %v1879, %v2029
        %v2031 = vlaneseq
        %v2032 = vshrl.u32 %v2031, 7
        %v2033 = vsub.s32 0, %v2032
        %v2034 = vrot.slane %v1880, %v2033
        %v2035 = vlaneseq
        %v2036 = vshrl.u32 %v2035, 7
        %v2037 = vsub.s32 0, %v2036
        %v2038 = vrot.slane %v1881, %v2037
        %v2039 = vlaneseq
        %v2040 = vshrl.u32 %v2039, 7
        %v2041 = vsub.s32 0, %v2040
        %v2042 = vrot.slane %v1882, %v2041
        %v2043 = vmul.f32 %v1982, %v1363
        %v2044 = vmul.f32 %v1986, %v1364
        %v2045 = vmul.f32 %v1982, %v1365
        %v2046 = vmul.f32 %v1986, %v1366
        %v2047 = vmul.f32 %v1990, %v1363
        %v2048 = vmul.f32 %v1994, %v1364
        %v2049 = vmul.f32 %v1990, %v1365
        %v2050 = vmul.f32 %v1994, %v1366
        %v2051 = vmul.f32 %v1998, %v1363
        %v2052 = vmul.f32 %v2002, %v1364
        %v2053 = vmul.f32 %v1998, %v1365
        %v2054 = vmul.f32 %v2002, %v1366
        %v2055 = vmul.f32 %v2006, %v1363
        %v2056 = vmul.f32 %v2010, %v1364
        %v2057 = vmul.f32 %v2006, %v1365
        %v2058 = vmul.f32 %v2010, %v1366
        %v2059 = vmul.f32 %v2014, %v1363
        %v2060 = vmul.f32 %v2018, %v1364
        %v2061 = vmul.f32 %v2014, %v1365
        %v2062 = vmul.f32 %v2018, %v1366
        %v2063 = vmul.f32 %v2022, %v1363
        %v2064 = vmul.f32 %v2026, %v1364
        %v2065 = vmul.f32 %v2022, %v1365
        %v2066 = vmul.f32 %v2026, %v1366
        %v2067 = vmul.f32 %v2030, %v1363
        %v2068 = vmul.f32 %v2034, %v1364
        %v2069 = vmul.f32 %v2030, %v1365
        %v2070 = vmul.f32 %v2034, %v1366
        %v2071 = vmul.f32 %v2038, %v1363
        %v2072 = vmul.f32 %v2042, %v1364
        %v2073 = vmul.f32 %v2038, %v1365
        %v2074 = vmul.f32 %v2042, %v1366
        %v2075 = vsub.f32 %v1947, %v2043
        %v2076 = vsub.f32 %v1948, %v2044
        %v2077 = vsub.f32 %v1949, %v2045
        %v2078 = vsub.f32 %v1950, %v2046
        %v2079 = vsub.f32 %v1951, %v2047
        %v2080 = vsub.f32 %v1952, %v2048
        %v2081 = vsub.f32 %v1953, %v2049
        %v2082 = vsub.f32 %v1954, %v2050
        %v2083 = vsub.f32 %v1955, %v2051
        %v2084 = vsub.f32 %v1956, %v2052
        %v2085 = vsub.f32 %v1957, %v2053
        %v2086 = vsub.f32 %v1958, %v2054
        %v2087 = vsub.f32 %v1959, %v2055
        %v2088 = vsub.f32 %v1960, %v2056
        %v2089 = vsub.f32 %v1961, %v2057
        %v2090 = vsub.f32 %v1962, %v2058
        %v2091 = vsub.f32 %v1963, %v2059
        %v2092 = vsub.f32 %v1964, %v2060
        %v2093 = vsub.f32 %v1965, %v2061
        %v2094 = vsub.f32 %v1966, %v2062
        %v2095 = vsub.f32 %v1967, %v2063
        %v2096 = vsub.f32 %v1968, %v2064
        %v2097 = vsub.f32 %v1969, %v2065
        %v2098 = vsub.f32 %v1970, %v2066
        %v2099 = vsub.f32 %v1971, %v2067
        %v2100 = vsub.f32 %v1972, %v2068
        %v2101 = vsub.f32 %v1973, %v2069
        %v2102 = vsub.f32 %v1974, %v2070
        %v2103 = vsub.f32 %v1975, %v2071
        %v2104 = vsub.f32 %v1976, %v2072
        %v2105 = vsub.f32 %v1977, %v2073
        %v2106 = vsub.f32 %v1978, %v2074
        %v2107 = vmul.f32 %v1886, %v1363
        %v2108 = vmul.f32 %v1890, %v1364
        %v2109 = vmul.f32 %v1886, %v1365
        %v2110 = vmul.f32 %v1890, %v1366
        %v2111 = vmul.f32 %v1894, %v1363
        %v2112 = vmul.f32 %v1898, %v1364
        %v2113 = vmul.f32 %v1894, %v1365
        %v2114 = vmul.f32 %v1898, %v1366
        %v2115 = vmul.f32 %v1902, %v1363
        %v2116 = vmul.f32 %v1906, %v1364
        %v2117 = vmul.f32 %v1902, %v1365
        %v2118 = vmul.f32 %v1906, %v1366
        %v2119 = vmul.f32 %v1910, %v1363
        %v2120 = vmul.f32 %v1914, %v1364
        %v2121 = vmul.f32 %v1910, %v1365
        %v2122 = vmul.f32 %v1914, %v1366
        %v2123 = vmul.f32 %v1918, %v1363
        %v2124 = vmul.f32 %v1922, %v1364
        %v2125 = vmul.f32 %v1918, %v1365
        %v2126 = vmul.f32 %v1922, %v1366
        %v2127 = vmul.f32 %v1926, %v1363
        %v2128 = vmul.f32 %v1930, %v1364
        %v2129 = vmul.f32 %v1926, %v1365
        %v2130 = vmul.f32 %v1930, %v1366
        %v2131 = vmul.f32 %v1934, %v1363
        %v2132 = vmul.f32 %v1938, %v1364
        %v2133 = vmul.f32 %v1934, %v1365
        %v2134 = vmul.f32 %v1938, %v1366
        %v2135 = vmul.f32 %v1942, %v1363
        %v2136 = vmul.f32 %v1946, %v1364
        %v2137 = vmul.f32 %v1942, %v1365
        %v2138 = vmul.f32 %v1946, %v1366
        %v2139 = vmul.f32 %v1982, %v1359
        %v2140 = vmul.f32 %v1986, %v1360
        %v2141 = vmul.f32 %v1982, %v1361
        %v2142 = vmul.f32 %v1986, %v1362
        %v2143 = vmul.f32 %v1990, %v1359
        %v2144 = vmul.f32 %v1994, %v1360
        %v2145 = vmul.f32 %v1990, %v1361
        %v2146 = vmul.f32 %v1994, %v1362
        %v2147 = vmul.f32 %v1998, %v1359
        %v2148 = vmul.f32 %v2002, %v1360
        %v2149 = vmul.f32 %v1998, %v1361
        %v2150 = vmul.f32 %v2002, %v1362
        %v2151 = vmul.f32 %v2006, %v1359
        %v2152 = vmul.f32 %v2010, %v1360
        %v2153 = vmul.f32 %v2006, %v1361
        %v2154 = vmul.f32 %v2010, %v1362
        %v2155 = vmul.f32 %v2014, %v1359
        %v2156 = vmul.f32 %v2018, %v1360
        %v2157 = vmul.f32 %v2014, %v1361
        %v2158 = vmul.f32 %v2018, %v1362
        %v2159 = vmul.f32 %v2022, %v1359
        %v2160 = vmul.f32 %v2026, %v1360
        %v2161 = vmul.f32 %v2022, %v1361
        %v2162 = vmul.f32 %v2026, %v1362
        %v2163 = vmul.f32 %v2030, %v1359
        %v2164 = vmul.f32 %v2034, %v1360
        %v2165 = vmul.f32 %v2030, %v1361
        %v2166 = vmul.f32 %v2034, %v1362
        %v2167 = vmul.f32 %v2038, %v1359
        %v2168 = vmul.f32 %v2042, %v1360
        %v2169 = vmul.f32 %v2038, %v1361
        %v2170 = vmul.f32 %v2042, %v1362
        %v2171 = vadd.f32 %v2107, %v2139
        %v2172 = vadd.f32 %v2108, %v2140
        %v2173 = vadd.f32 %v2109, %v2141
        %v2174 = vadd.f32 %v2110, %v2142
        %v2175 = vadd.f32 %v2111, %v2143
        %v2176 = vadd.f32 %v2112, %v2144
        %v2177 = vadd.f32 %v2113, %v2145
        %v2178 = vadd.f32 %v2114, %v2146
        %v2179 = vadd.f32 %v2115, %v2147
        %v2180 = vadd.f32 %v2116, %v2148
        %v2181 = vadd.f32 %v2117, %v2149
        %v2182 = vadd.f32 %v2118, %v2150
        %v2183 = vadd.f32 %v2119, %v2151
        %v2184 = vadd.f32 %v2120, %v2152
        %v2185 = vadd.f32 %v2121, %v2153
        %v2186 = vadd.f32 %v2122, %v2154
        %v2187 = vadd.f32 %v2123, %v2155
        %v2188 = vadd.f32 %v2124, %v2156
        %v2189 = vadd.f32 %v2125, %v2157
        %v2190 = vadd.f32 %v2126, %v2158
        %v2191 = vadd.f32 %v2127, %v2159
        %v2192 = vadd.f32 %v2128, %v2160
        %v2193 = vadd.f32 %v2129, %v2161
        %v2194 = vadd.f32 %v2130, %v2162
        %v2195 = vadd.f32 %v2131, %v2163
        %v2196 = vadd.f32 %v2132, %v2164
        %v2197 = vadd.f32 %v2133, %v2165
        %v2198 = vadd.f32 %v2134, %v2166
        %v2199 = vadd.f32 %v2135, %v2167
        %v2200 = vadd.f32 %v2136, %v2168
        %v2201 = vadd.f32 %v2137, %v2169
        %v2202 = vadd.f32 %v2138, %v2170
        %v2203 = vpack.c.bf16 %v2077, %v2075
        %v2204 = vpack.c.bf16 %v2078, %v2076
        %v2205 = vpack.c.bf16 %v2081, %v2079
        %v2206 = vpack.c.bf16 %v2082, %v2080
        %v2207 = vpack.c.bf16 %v2085, %v2083
        %v2208 = vpack.c.bf16 %v2086, %v2084
        %v2209 = vpack.c.bf16 %v2089, %v2087
        %v2210 = vpack.c.bf16 %v2090, %v2088
        %v2211 = vpack.c.bf16 %v2093, %v2091
        %v2212 = vpack.c.bf16 %v2094, %v2092
        %v2213 = vpack.c.bf16 %v2097, %v2095
        %v2214 = vpack.c.bf16 %v2098, %v2096
        %v2215 = vpack.c.bf16 %v2101, %v2099
        %v2216 = vpack.c.bf16 %v2102, %v2100
        %v2217 = vpack.c.bf16 %v2105, %v2103
        %v2218 = vpack.c.bf16 %v2106, %v2104
        %v2219 = vpack.c.bf16 %v2173, %v2171
        %v2220 = vpack.c.bf16 %v2174, %v2172
        %v2221 = vpack.c.bf16 %v2177, %v2175
        %v2222 = vpack.c.bf16 %v2178, %v2176
        %v2223 = vpack.c.bf16 %v2181, %v2179
        %v2224 = vpack.c.bf16 %v2182, %v2180
        %v2225 = vpack.c.bf16 %v2185, %v2183
        %v2226 = vpack.c.bf16 %v2186, %v2184
        %v2227 = vpack.c.bf16 %v2189, %v2187
        %v2228 = vpack.c.bf16 %v2190, %v2188
        %v2229 = vpack.c.bf16 %v2193, %v2191
        %v2230 = vpack.c.bf16 %v2194, %v2192
        %v2231 = vpack.c.bf16 %v2197, %v2195
        %v2232 = vpack.c.bf16 %v2198, %v2196
        %v2233 = vpack.c.bf16 %v2201, %v2199
        %v2234 = vpack.c.bf16 %v2202, %v2200
        %v2235 = vld [vmem:[%s644] sm:$0xf]
        %v2236 = vld [vmem:[%s644 + $0x4] sm:$0xf]
        %v2237 = vld [vmem:[%s644 + $0x8] sm:$0xf]
        %v2238 = vld [vmem:[%s644 + $0xc] sm:$0xf]
        %v2239 = vld [vmem:[%s644 + $0x10] sm:$0xf]
        %v2240 = vld [vmem:[%s644 + $0x14] sm:$0xf]
        %v2241 = vld [vmem:[%s644 + $0x18] sm:$0xf]
        %v2242 = vld [vmem:[%s644 + $0x1c] sm:$0xf]
        %v2243 = vld [vmem:[%s644 + $0x20] sm:$0xf]
        %v2244 = vld [vmem:[%s644 + $0x24] sm:$0xf]
        %v2245 = vld [vmem:[%s644 + $0x28] sm:$0xf]
        %v2246 = vld [vmem:[%s644 + $0x2c] sm:$0xf]
        %v2247 = vld [vmem:[%s644 + $0x30] sm:$0xf]
        %v2248 = vld [vmem:[%s644 + $0x34] sm:$0xf]
        %v2249 = vld [vmem:[%s644 + $0x38] sm:$0xf]
        %v2250 = vld [vmem:[%s644 + $0x3c] sm:$0xf]
        %v2251 = vld [vmem:[%s644 + $0x40] sm:$0xf]
        %v2252 = vld [vmem:[%s644 + $0x44] sm:$0xf]
        %v2253 = vld [vmem:[%s644 + $0x48] sm:$0xf]
        %v2254 = vld [vmem:[%s644 + $0x4c] sm:$0xf]
        %v2255 = vld [vmem:[%s644 + $0x50] sm:$0xf]
        %v2256 = vld [vmem:[%s644 + $0x54] sm:$0xf]
        %v2257 = vld [vmem:[%s644 + $0x58] sm:$0xf]
        %v2258 = vld [vmem:[%s644 + $0x5c] sm:$0xf]
        %v2259 = vld [vmem:[%s644 + $0x60] sm:$0xf]
        %v2260 = vld [vmem:[%s644 + $0x64] sm:$0xf]
        %v2261 = vld [vmem:[%s644 + $0x68] sm:$0xf]
        %v2262 = vld [vmem:[%s644 + $0x6c] sm:$0xf]
        %v2263 = vld [vmem:[%s644 + $0x70] sm:$0xf]
        %v2264 = vld [vmem:[%s644 + $0x74] sm:$0xf]
        %v2265 = vld [vmem:[%s644 + $0x78] sm:$0xf]
        %v2266 = vld [vmem:[%s644 + $0x7c] sm:$0xf]
        %v2267 = vld [vmem:[%s650] sm:$0xf]
        %v2268 = vld [vmem:[%s650 + $0x4] sm:$0xf]
        %v2269 = vld [vmem:[%s650 + $0x8] sm:$0xf]
        %v2270 = vld [vmem:[%s650 + $0xc] sm:$0xf]
        %v2271 = vld [vmem:[%s650 + $0x10] sm:$0xf]
        %v2272 = vld [vmem:[%s650 + $0x14] sm:$0xf]
        %v2273 = vld [vmem:[%s650 + $0x18] sm:$0xf]
        %v2274 = vld [vmem:[%s650 + $0x1c] sm:$0xf]
        %v2275 = vld [vmem:[%s650 + $0x20] sm:$0xf]
        %v2276 = vld [vmem:[%s650 + $0x24] sm:$0xf]
        %v2277 = vld [vmem:[%s650 + $0x28] sm:$0xf]
        %v2278 = vld [vmem:[%s650 + $0x2c] sm:$0xf]
        %v2279 = vld [vmem:[%s650 + $0x30] sm:$0xf]
        %v2280 = vld [vmem:[%s650 + $0x34] sm:$0xf]
        %v2281 = vld [vmem:[%s650 + $0x38] sm:$0xf]
        %v2282 = vld [vmem:[%s650 + $0x3c] sm:$0xf]
        %v2283 = vld [vmem:[%s650 + $0x40] sm:$0xf]
        %v2284 = vld [vmem:[%s650 + $0x44] sm:$0xf]
        %v2285 = vld [vmem:[%s650 + $0x48] sm:$0xf]
        %v2286 = vld [vmem:[%s650 + $0x4c] sm:$0xf]
        %v2287 = vld [vmem:[%s650 + $0x50] sm:$0xf]
        %v2288 = vld [vmem:[%s650 + $0x54] sm:$0xf]
        %v2289 = vld [vmem:[%s650 + $0x58] sm:$0xf]
        %v2290 = vld [vmem:[%s650 + $0x5c] sm:$0xf]
        %v2291 = vld [vmem:[%s650 + $0x60] sm:$0xf]
        %v2292 = vld [vmem:[%s650 + $0x64] sm:$0xf]
        %v2293 = vld [vmem:[%s650 + $0x68] sm:$0xf]
        %v2294 = vld [vmem:[%s650 + $0x6c] sm:$0xf]
        %v2295 = vld [vmem:[%s650 + $0x70] sm:$0xf]
        %v2296 = vld [vmem:[%s650 + $0x74] sm:$0xf]
        %v2297 = vld [vmem:[%s650 + $0x78] sm:$0xf]
        %v2298 = vld [vmem:[%s650 + $0x7c] sm:$0xf]
        %v2299 = vld [vmem:[%s10] sm:$0xff]
        %v2300 = vld [vmem:[%s10 + $0x8] sm:$0xff]
        %v2301 = vld [vmem:[%s10 + $0x10] sm:$0xff]
        %v2302 = vld [vmem:[%s10 + $0x18] sm:$0xff]
        %v2303 = vld [vmem:[%s10 + $0x20] sm:$0xff]
        %v2304 = vld [vmem:[%s10 + $0x28] sm:$0xff]
        %v2305 = vld [vmem:[%s10 + $0x30] sm:$0xff]
        %v2306 = vld [vmem:[%s10 + $0x38] sm:$0xff]
        %v2307 = vld [vmem:[%s10 + $0x40] sm:$0xff]
        %v2308 = vld [vmem:[%s10 + $0x48] sm:$0xff]
        %v2309 = vld [vmem:[%s10 + $0x50] sm:$0xff]
        %v2310 = vld [vmem:[%s10 + $0x58] sm:$0xff]
        %v2311 = vld [vmem:[%s10 + $0x60] sm:$0xff]
        %v2312 = vld [vmem:[%s10 + $0x68] sm:$0xff]
        %v2313 = vld [vmem:[%s10 + $0x70] sm:$0xff]
        %v2314 = vld [vmem:[%s10 + $0x78] sm:$0xff]
        %v2347 = vunpack.c.l.b16 %v2235
        %v2348 = vunpack.c.l.b16 %v2236
        %v2349 = vunpack.c.l.b16 %v2237
        %v2350 = vunpack.c.l.b16 %v2238
        %v2351 = vunpack.c.l.b16 %v2239
        %v2352 = vunpack.c.l.b16 %v2240
        %v2353 = vunpack.c.l.b16 %v2241
        %v2354 = vunpack.c.l.b16 %v2242
        %v2355 = vunpack.c.l.b16 %v2243
        %v2356 = vunpack.c.l.b16 %v2244
        %v2357 = vunpack.c.l.b16 %v2245
        %v2358 = vunpack.c.l.b16 %v2246
        %v2359 = vunpack.c.l.b16 %v2247
        %v2360 = vunpack.c.l.b16 %v2248
        %v2361 = vunpack.c.l.b16 %v2249
        %v2362 = vunpack.c.l.b16 %v2250
        %v2363 = vunpack.c.l.b16 %v2251
        %v2364 = vunpack.c.l.b16 %v2252
        %v2365 = vunpack.c.l.b16 %v2253
        %v2366 = vunpack.c.l.b16 %v2254
        %v2367 = vunpack.c.l.b16 %v2255
        %v2368 = vunpack.c.l.b16 %v2256
        %v2369 = vunpack.c.l.b16 %v2257
        %v2370 = vunpack.c.l.b16 %v2258
        %v2371 = vunpack.c.l.b16 %v2259
        %v2372 = vunpack.c.l.b16 %v2260
        %v2373 = vunpack.c.l.b16 %v2261
        %v2374 = vunpack.c.l.b16 %v2262
        %v2375 = vunpack.c.l.b16 %v2263
        %v2376 = vunpack.c.l.b16 %v2264
        %v2377 = vunpack.c.l.b16 %v2265
        %v2378 = vunpack.c.l.b16 %v2266
        %v2379 = vpack.c.b16 %v2348, %v2347
        %v2380 = vpack.c.b16 %v2350, %v2349
        %v2381 = vpack.c.b16 %v2352, %v2351
        %v2382 = vpack.c.b16 %v2354, %v2353
        %v2383 = vpack.c.b16 %v2356, %v2355
        %v2384 = vpack.c.b16 %v2358, %v2357
        %v2385 = vpack.c.b16 %v2360, %v2359
        %v2386 = vpack.c.b16 %v2362, %v2361
        %v2387 = vpack.c.b16 %v2364, %v2363
        %v2388 = vpack.c.b16 %v2366, %v2365
        %v2389 = vpack.c.b16 %v2368, %v2367
        %v2390 = vpack.c.b16 %v2370, %v2369
        %v2391 = vpack.c.b16 %v2372, %v2371
        %v2392 = vpack.c.b16 %v2374, %v2373
        %v2393 = vpack.c.b16 %v2376, %v2375
        %v2394 = vpack.c.b16 %v2378, %v2377
        %2411 = vmatprep.subr.bf16.mxu0 0
        %2412 = vmatpush1.bf16.msra.mxu0 %v2379
        %2413 = vmatprep.subr.bf16.mxu0 0
        %2414 = vmatpush1.bf16.msra.mxu0 %v2380
        %2415 = vmatprep.subr.bf16.mxu0 0
        %2416 = vmatpush1.bf16.msra.mxu0 %v2381
        %2417 = vmatprep.subr.bf16.mxu0 0
        %2418 = vmatpush1.bf16.msra.mxu0 %v2382
        %2419 = vmatprep.subr.bf16.mxu0 0
        %2420 = vmatpush1.bf16.msra.mxu0 %v2383
        %2421 = vmatprep.subr.bf16.mxu0 0
        %2422 = vmatpush1.bf16.msra.mxu0 %v2384
        %2423 = vmatprep.subr.bf16.mxu0 0
        %2424 = vmatpush1.bf16.msra.mxu0 %v2385
        %2425 = vmatprep.subr.bf16.mxu0 0
        %2426 = vmatpush1.bf16.msra.mxu0 %v2386
        %2427 = vmatprep.subr.bf16.mxu0 0
        %2428 = vmatpush1.bf16.msra.mxu0 %v2387
        %2429 = vmatprep.subr.bf16.mxu0 0
        %2430 = vmatpush1.bf16.msra.mxu0 %v2388
        %2431 = vmatprep.subr.bf16.mxu0 0
        %2432 = vmatpush1.bf16.msra.mxu0 %v2389
        %2433 = vmatprep.subr.bf16.mxu0 0
        %2434 = vmatpush1.bf16.msra.mxu0 %v2390
        %2435 = vmatprep.subr.bf16.mxu0 0
        %2436 = vmatpush1.bf16.msra.mxu0 %v2391
        %2437 = vmatprep.subr.bf16.mxu0 0
        %2438 = vmatpush1.bf16.msra.mxu0 %v2392
        %2439 = vmatprep.subr.bf16.mxu0 0
        %2440 = vmatpush1.bf16.msra.mxu0 %v2393
        %2441 = vmatprep.subr.bf16.mxu0 0
        %2442 = vmatpush1.bf16.msra.mxu0 %v2394
        %2443 = vmatprep.mubr.bf16.mxu0 %v2204
        %2444 = vmatmul.mubr.bf16.gmra.mrb[0].mxu0 %v2203
        %v2445 = vpop.f32.mrb[0].mxu0
        %v2446 = vadd.f32 0.0, %v2445
        %v2447 = vpop.f32.mrb[0].mxu0
        %v2448 = vpop.f32.mrb[0].mxu0
        %v2449 = vadd.f32 0.0, %v2448
        %v2450 = vpop.f32.mrb[0].mxu0
        %2451 = vmatprep.mubr.bf16.mxu0 %v2206
        %2452 = vmatmul.mubr.bf16.gmra.mrb[0].mxu0 %v2205
        %v2453 = vpop.f32.mrb[0].mxu0
        %v2454 = vadd.f32 0.0, %v2453
        %v2455 = vpop.f32.mrb[0].mxu0
        %v2456 = vpop.f32.mrb[0].mxu0
        %v2457 = vadd.f32 0.0, %v2456
        %v2458 = vpop.f32.mrb[0].mxu0
        %2459 = vmatprep.mubr.bf16.mxu0 %v2208
        %2460 = vmatmul.mubr.bf16.gmra.mrb[0].mxu0 %v2207
        %v2461 = vpop.f32.mrb[0].mxu0
        %v2462 = vadd.f32 0.0, %v2461
        %v2463 = vpop.f32.mrb[0].mxu0
        %v2464 = vpop.f32.mrb[0].mxu0
        %v2465 = vadd.f32 0.0, %v2464
        %v2466 = vpop.f32.mrb[0].mxu0
        %2467 = vmatprep.mubr.bf16.mxu0 %v2210
        %2468 = vmatmul.mubr.bf16.gmra.mrb[0].mxu0 %v2209
        %v2469 = vpop.f32.mrb[0].mxu0
        %v2470 = vadd.f32 0.0, %v2469
        %v2471 = vpop.f32.mrb[0].mxu0
        %v2472 = vpop.f32.mrb[0].mxu0
        %v2473 = vadd.f32 0.0, %v2472
        %v2474 = vpop.f32.mrb[0].mxu0
        %2475 = vmatprep.mubr.bf16.mxu0 %v2212
        %2476 = vmatmul.mubr.bf16.gmra.mrb[0].mxu0 %v2211
        %v2477 = vpop.f32.mrb[0].mxu0
        %v2478 = vadd.f32 0.0, %v2477
        %v2479 = vpop.f32.mrb[0].mxu0
        %v2480 = vpop.f32.mrb[0].mxu0
        %v2481 = vadd.f32 0.0, %v2480
        %v2482 = vpop.f32.mrb[0].mxu0
        %2483 = vmatprep.mubr.bf16.mxu0 %v2214
        %2484 = vmatmul.mubr.bf16.gmra.mrb[0].mxu0 %v2213
        %v2485 = vpop.f32.mrb[0].mxu0
        %v2486 = vadd.f32 0.0, %v2485
        %v2487 = vpop.f32.mrb[0].mxu0
        %v2488 = vpop.f32.mrb[0].mxu0
        %v2489 = vadd.f32 0.0, %v2488
        %v2490 = vpop.f32.mrb[0].mxu0
        %2491 = vmatprep.mubr.bf16.mxu0 %v2216
        %2492 = vmatmul.mubr.bf16.gmra.mrb[0].mxu0 %v2215
        %v2493 = vpop.f32.mrb[0].mxu0
        %v2494 = vadd.f32 0.0, %v2493
        %v2495 = vpop.f32.mrb[0].mxu0
        %v2496 = vpop.f32.mrb[0].mxu0
        %v2497 = vadd.f32 0.0, %v2496
        %v2498 = vpop.f32.mrb[0].mxu0
        %2499 = vmatprep.mubr.bf16.mxu0 %v2218
        %2500 = vmatmul.mubr.bf16.gmra.mrb[0].mxu0 %v2217
        %v2501 = vpop.f32.mrb[0].mxu0
        %v2502 = vadd.f32 0.0, %v2501
        %v2503 = vpop.f32.mrb[0].mxu0
        %v2504 = vpop.f32.mrb[0].mxu0
        %v2505 = vadd.f32 0.0, %v2504
        %v2506 = vpop.f32.mrb[0].mxu0
        %2507 = vdwg.mxu0
        %v2540 = vunpack.c.l.b16 %v2267
        %v2541 = vunpack.c.l.b16 %v2268
        %v2542 = vunpack.c.l.b16 %v2269
        %v2543 = vunpack.c.l.b16 %v2270
        %v2544 = vunpack.c.l.b16 %v2271
        %v2545 = vunpack.c.l.b16 %v2272
        %v2546 = vunpack.c.l.b16 %v2273
        %v2547 = vunpack.c.l.b16 %v2274
        %v2548 = vunpack.c.l.b16 %v2275
        %v2549 = vunpack.c.l.b16 %v2276
        %v2550 = vunpack.c.l.b16 %v2277
        %v2551 = vunpack.c.l.b16 %v2278
        %v2552 = vunpack.c.l.b16 %v2279
        %v2553 = vunpack.c.l.b16 %v2280
        %v2554 = vunpack.c.l.b16 %v2281
        %v2555 = vunpack.c.l.b16 %v2282
        %v2556 = vunpack.c.l.b16 %v2283
        %v2557 = vunpack.c.l.b16 %v2284
        %v2558 = vunpack.c.l.b16 %v2285
        %v2559 = vunpack.c.l.b16 %v2286
        %v2560 = vunpack.c.l.b16 %v2287
        %v2561 = vunpack.c.l.b16 %v2288
        %v2562 = vunpack.c.l.b16 %v2289
        %v2563 = vunpack.c.l.b16 %v2290
        %v2564 = vunpack.c.l.b16 %v2291
        %v2565 = vunpack.c.l.b16 %v2292
        %v2566 = vunpack.c.l.b16 %v2293
        %v2567 = vunpack.c.l.b16 %v2294
        %v2568 = vunpack.c.l.b16 %v2295
        %v2569 = vunpack.c.l.b16 %v2296
        %v2570 = vunpack.c.l.b16 %v2297
        %v2571 = vunpack.c.l.b16 %v2298
        %v2572 = vpack.c.b16 %v2541, %v2540
        %v2573 = vpack.c.b16 %v2543, %v2542
        %v2574 = vpack.c.b16 %v2545, %v2544
        %v2575 = vpack.c.b16 %v2547, %v2546
        %v2576 = vpack.c.b16 %v2549, %v2548
        %v2577 = vpack.c.b16 %v2551, %v2550
        %v2578 = vpack.c.b16 %v2553, %v2552
        %v2579 = vpack.c.b16 %v2555, %v2554
        %v2580 = vpack.c.b16 %v2557, %v2556
        %v2581 = vpack.c.b16 %v2559, %v2558
        %v2582 = vpack.c.b16 %v2561, %v2560
        %v2583 = vpack.c.b16 %v2563, %v2562
        %v2584 = vpack.c.b16 %v2565, %v2564
        %v2585 = vpack.c.b16 %v2567, %v2566
        %v2586 = vpack.c.b16 %v2569, %v2568
        %v2587 = vpack.c.b16 %v2571, %v2570
        %2604 = vmatprep.subr.bf16.mxu0 0
        %2605 = vmatpush1.bf16.msra.mxu0 %v2572
        %2606 = vmatprep.subr.bf16.mxu0 0
        %2607 = vmatpush1.bf16.msra.mxu0 %v2573
        %2608 = vmatprep.subr.bf16.mxu0 0
        %2609 = vmatpush1.bf16.msra.mxu0 %v2574
        %2610 = vmatprep.subr.bf16.mxu0 0
        %2611 = vmatpush1.bf16.msra.mxu0 %v2575
        %2612 = vmatprep.subr.bf16.mxu0 0
        %2613 = vmatpush1.bf16.msra.mxu0 %v2576
        %2614 = vmatprep.subr.bf16.mxu0 0
        %2615 = vmatpush1.bf16.msra.mxu0 %v2577
        %2616 = vmatprep.subr.bf16.mxu0 0
        %2617 = vmatpush1.bf16.msra.mxu0 %v2578
        %2618 = vmatprep.subr.bf16.mxu0 0
        %2619 = vmatpush1.bf16.msra.mxu0 %v2579
        %2620 = vmatprep.subr.bf16.mxu0 0
        %2621 = vmatpush1.bf16.msra.mxu0 %v2580
        %2622 = vmatprep.subr.bf16.mxu0 0
        %2623 = vmatpush1.bf16.msra.mxu0 %v2581
        %2624 = vmatprep.subr.bf16.mxu0 0
        %2625 = vmatpush1.bf16.msra.mxu0 %v2582
        %2626 = vmatprep.subr.bf16.mxu0 0
        %2627 = vmatpush1.bf16.msra.mxu0 %v2583
        %2628 = vmatprep.subr.bf16.mxu0 0
        %2629 = vmatpush1.bf16.msra.mxu0 %v2584
        %2630 = vmatprep.subr.bf16.mxu0 0
        %2631 = vmatpush1.bf16.msra.mxu0 %v2585
        %2632 = vmatprep.subr.bf16.mxu0 0
        %2633 = vmatpush1.bf16.msra.mxu0 %v2586
        %2634 = vmatprep.subr.bf16.mxu0 0
        %2635 = vmatpush1.bf16.msra.mxu0 %v2587
        %2636 = vmatprep.mubr.bf16.mxu0 %v2220
        %2637 = vmatmul.mubr.bf16.gmra.mrb[0].mxu0 %v2219
        %v2638 = vpop.f32.mrb[0].mxu0
        %v2639 = vadd.f32 0.0, %v2638
        %v2640 = vpop.f32.mrb[0].mxu0
        %v2641 = vpop.f32.mrb[0].mxu0
        %v2642 = vadd.f32 0.0, %v2641
        %v2643 = vpop.f32.mrb[0].mxu0
        %2644 = vmatprep.mubr.bf16.mxu0 %v2222
        %2645 = vmatmul.mubr.bf16.gmra.mrb[0].mxu0 %v2221
        %v2646 = vpop.f32.mrb[0].mxu0
        %v2647 = vadd.f32 0.0, %v2646
        %v2648 = vpop.f32.mrb[0].mxu0
        %v2649 = vpop.f32.mrb[0].mxu0
        %v2650 = vadd.f32 0.0, %v2649
        %v2651 = vpop.f32.mrb[0].mxu0
        %2652 = vmatprep.mubr.bf16.mxu0 %v2224
        %2653 = vmatmul.mubr.bf16.gmra.mrb[0].mxu0 %v2223
        %v2654 = vpop.f32.mrb[0].mxu0
        %v2655 = vadd.f32 0.0, %v2654
        %v2656 = vpop.f32.mrb[0].mxu0
        %v2657 = vpop.f32.mrb[0].mxu0
        %v2658 = vadd.f32 0.0, %v2657
        %v2659 = vpop.f32.mrb[0].mxu0
        %2660 = vmatprep.mubr.bf16.mxu0 %v2226
        %2661 = vmatmul.mubr.bf16.gmra.mrb[0].mxu0 %v2225
        %v2662 = vpop.f32.mrb[0].mxu0
        %v2663 = vadd.f32 0.0, %v2662
        %v2664 = vpop.f32.mrb[0].mxu0
        %v2665 = vpop.f32.mrb[0].mxu0
        %v2666 = vadd.f32 0.0, %v2665
        %v2667 = vpop.f32.mrb[0].mxu0
        %2668 = vmatprep.mubr.bf16.mxu0 %v2228
        %2669 = vmatmul.mubr.bf16.gmra.mrb[0].mxu0 %v2227
        %v2670 = vpop.f32.mrb[0].mxu0
        %v2671 = vadd.f32 0.0, %v2670
        %v2672 = vpop.f32.mrb[0].mxu0
        %v2673 = vpop.f32.mrb[0].mxu0
        %v2674 = vadd.f32 0.0, %v2673
        %v2675 = vpop.f32.mrb[0].mxu0
        %2676 = vmatprep.mubr.bf16.mxu0 %v2230
        %2677 = vmatmul.mubr.bf16.gmra.mrb[0].mxu0 %v2229
        %v2678 = vpop.f32.mrb[0].mxu0
        %v2679 = vadd.f32 0.0, %v2678
        %v2680 = vpop.f32.mrb[0].mxu0
        %v2681 = vpop.f32.mrb[0].mxu0
        %v2682 = vadd.f32 0.0, %v2681
        %v2683 = vpop.f32.mrb[0].mxu0
        %2684 = vmatprep.mubr.bf16.mxu0 %v2232
        %2685 = vmatmul.mubr.bf16.gmra.mrb[0].mxu0 %v2231
        %v2686 = vpop.f32.mrb[0].mxu0
        %v2687 = vadd.f32 0.0, %v2686
        %v2688 = vpop.f32.mrb[0].mxu0
        %v2689 = vpop.f32.mrb[0].mxu0
        %v2690 = vadd.f32 0.0, %v2689
        %v2691 = vpop.f32.mrb[0].mxu0
        %2692 = vmatprep.mubr.bf16.mxu0 %v2234
        %2693 = vmatmul.mubr.bf16.gmra.mrb[0].mxu0 %v2233
        %v2694 = vpop.f32.mrb[0].mxu0
        %v2695 = vadd.f32 0.0, %v2694
        %v2696 = vpop.f32.mrb[0].mxu0
        %v2697 = vpop.f32.mrb[0].mxu0
        %v2698 = vadd.f32 0.0, %v2697
        %v2699 = vpop.f32.mrb[0].mxu0
        %2700 = vdwg.mxu0
        %v2701 = vsub.f32 %v2446, %v2639
        %v2702 = vsub.f32 %v2449, %v2642
        %v2703 = vsub.f32 %v2454, %v2647
        %v2704 = vsub.f32 %v2457, %v2650
        %v2705 = vsub.f32 %v2462, %v2655
        %v2706 = vsub.f32 %v2465, %v2658
        %v2707 = vsub.f32 %v2470, %v2663
        %v2708 = vsub.f32 %v2473, %v2666
        %v2709 = vsub.f32 %v2478, %v2671
        %v2710 = vsub.f32 %v2481, %v2674
        %v2711 = vsub.f32 %v2486, %v2679
        %v2712 = vsub.f32 %v2489, %v2682
        %v2713 = vsub.f32 %v2494, %v2687
        %v2714 = vsub.f32 %v2497, %v2690
        %v2715 = vsub.f32 %v2502, %v2695
        %v2716 = vsub.f32 %v2505, %v2698
        %v2717 = vadd.f32 %v2299, %v2701
        %v2718 = vadd.f32 %v2300, %v2702
        %v2719 = vadd.f32 %v2301, %v2703
        %v2720 = vadd.f32 %v2302, %v2704
        %v2721 = vadd.f32 %v2303, %v2705
        %v2722 = vadd.f32 %v2304, %v2706
        %v2723 = vadd.f32 %v2305, %v2707
        %v2724 = vadd.f32 %v2306, %v2708
        %v2725 = vadd.f32 %v2307, %v2709
        %v2726 = vadd.f32 %v2308, %v2710
        %v2727 = vadd.f32 %v2309, %v2711
        %v2728 = vadd.f32 %v2310, %v2712
        %v2729 = vadd.f32 %v2311, %v2713
        %v2730 = vadd.f32 %v2312, %v2714
        %v2731 = vadd.f32 %v2313, %v2715
        %v2732 = vadd.f32 %v2314, %v2716
        %2733 = vst.msk [vmem:[%s10] sm:$0xff] %vm776, %v2717
        %2734 = vst.msk [vmem:[%s10 + $0x8] sm:$0xff] %vm776, %v2718
        %2735 = vst.msk [vmem:[%s10 + $0x10] sm:$0xff] %vm776, %v2719
        %2736 = vst.msk [vmem:[%s10 + $0x18] sm:$0xff] %vm776, %v2720
        %2737 = vst.msk [vmem:[%s10 + $0x20] sm:$0xff] %vm776, %v2721
        %2738 = vst.msk [vmem:[%s10 + $0x28] sm:$0xff] %vm776, %v2722
        %2739 = vst.msk [vmem:[%s10 + $0x30] sm:$0xff] %vm776, %v2723
        %2740 = vst.msk [vmem:[%s10 + $0x38] sm:$0xff] %vm776, %v2724
        %2741 = vst.msk [vmem:[%s10 + $0x40] sm:$0xff] %vm776, %v2725
        %2742 = vst.msk [vmem:[%s10 + $0x48] sm:$0xff] %vm776, %v2726
        %2743 = vst.msk [vmem:[%s10 + $0x50] sm:$0xff] %vm776, %v2727
        %2744 = vst.msk [vmem:[%s10 + $0x58] sm:$0xff] %vm776, %v2728
        %2745 = vst.msk [vmem:[%s10 + $0x60] sm:$0xff] %vm776, %v2729
        %2746 = vst.msk [vmem:[%s10 + $0x68] sm:$0xff] %vm776, %v2730
        %2747 = vst.msk [vmem:[%s10 + $0x70] sm:$0xff] %vm776, %v2731
        %2748 = vst.msk [vmem:[%s10 + $0x78] sm:$0xff] %vm776, %v2732
        %v2749 = vld [vmem:[%s11] sm:$0xff]
        %v2750 = vld [vmem:[%s11 + $0x8] sm:$0xff]
        %v2751 = vld [vmem:[%s11 + $0x10] sm:$0xff]
        %v2752 = vld [vmem:[%s11 + $0x18] sm:$0xff]
        %v2753 = vld [vmem:[%s11 + $0x20] sm:$0xff]
        %v2754 = vld [vmem:[%s11 + $0x28] sm:$0xff]
        %v2755 = vld [vmem:[%s11 + $0x30] sm:$0xff]
        %v2756 = vld [vmem:[%s11 + $0x38] sm:$0xff]
        %v2757 = vld [vmem:[%s11 + $0x40] sm:$0xff]
        %v2758 = vld [vmem:[%s11 + $0x48] sm:$0xff]
        %v2759 = vld [vmem:[%s11 + $0x50] sm:$0xff]
        %v2760 = vld [vmem:[%s11 + $0x58] sm:$0xff]
        %v2761 = vld [vmem:[%s11 + $0x60] sm:$0xff]
        %v2762 = vld [vmem:[%s11 + $0x68] sm:$0xff]
        %v2763 = vld [vmem:[%s11 + $0x70] sm:$0xff]
        %v2764 = vld [vmem:[%s11 + $0x78] sm:$0xff]
        %2765 = vmatprep.subr.bf16.mxu0 0
        %2766 = vmatpush1.bf16.msra.mxu0 %v2379
        %2767 = vmatprep.subr.bf16.mxu0 0
        %2768 = vmatpush1.bf16.msra.mxu0 %v2380
        %2769 = vmatprep.subr.bf16.mxu0 0
        %2770 = vmatpush1.bf16.msra.mxu0 %v2381
        %2771 = vmatprep.subr.bf16.mxu0 0
        %2772 = vmatpush1.bf16.msra.mxu0 %v2382
        %2773 = vmatprep.subr.bf16.mxu0 0
        %2774 = vmatpush1.bf16.msra.mxu0 %v2383
        %2775 = vmatprep.subr.bf16.mxu0 0
        %2776 = vmatpush1.bf16.msra.mxu0 %v2384
        %2777 = vmatprep.subr.bf16.mxu0 0
        %2778 = vmatpush1.bf16.msra.mxu0 %v2385
        %2779 = vmatprep.subr.bf16.mxu0 0
        %2780 = vmatpush1.bf16.msra.mxu0 %v2386
        %2781 = vmatprep.subr.bf16.mxu0 0
        %2782 = vmatpush1.bf16.msra.mxu0 %v2387
        %2783 = vmatprep.subr.bf16.mxu0 0
        %2784 = vmatpush1.bf16.msra.mxu0 %v2388
        %2785 = vmatprep.subr.bf16.mxu0 0
        %2786 = vmatpush1.bf16.msra.mxu0 %v2389
        %2787 = vmatprep.subr.bf16.mxu0 0
        %2788 = vmatpush1.bf16.msra.mxu0 %v2390
        %2789 = vmatprep.subr.bf16.mxu0 0
        %2790 = vmatpush1.bf16.msra.mxu0 %v2391
        %2791 = vmatprep.subr.bf16.mxu0 0
        %2792 = vmatpush1.bf16.msra.mxu0 %v2392
        %2793 = vmatprep.subr.bf16.mxu0 0
        %2794 = vmatpush1.bf16.msra.mxu0 %v2393
        %2795 = vmatprep.subr.bf16.mxu0 0
        %2796 = vmatpush1.bf16.msra.mxu0 %v2394
        %2797 = vmatprep.mubr.bf16.mxu0 %v2220
        %2798 = vmatmul.mubr.bf16.gmra.mrb[0].mxu0 %v2219
        %v2799 = vpop.f32.mrb[0].mxu0
        %v2800 = vadd.f32 0.0, %v2799
        %v2801 = vpop.f32.mrb[0].mxu0
        %v2802 = vpop.f32.mrb[0].mxu0
        %v2803 = vadd.f32 0.0, %v2802
        %v2804 = vpop.f32.mrb[0].mxu0
        %2805 = vmatprep.mubr.bf16.mxu0 %v2222
        %2806 = vmatmul.mubr.bf16.gmra.mrb[0].mxu0 %v2221
        %v2807 = vpop.f32.mrb[0].mxu0
        %v2808 = vadd.f32 0.0, %v2807
        %v2809 = vpop.f32.mrb[0].mxu0
        %v2810 = vpop.f32.mrb[0].mxu0
        %v2811 = vadd.f32 0.0, %v2810
        %v2812 = vpop.f32.mrb[0].mxu0
        %2813 = vmatprep.mubr.bf16.mxu0 %v2224
        %2814 = vmatmul.mubr.bf16.gmra.mrb[0].mxu0 %v2223
        %v2815 = vpop.f32.mrb[0].mxu0
        %v2816 = vadd.f32 0.0, %v2815
        %v2817 = vpop.f32.mrb[0].mxu0
        %v2818 = vpop.f32.mrb[0].mxu0
        %v2819 = vadd.f32 0.0, %v2818
        %v2820 = vpop.f32.mrb[0].mxu0
        %2821 = vmatprep.mubr.bf16.mxu0 %v2226
        %2822 = vmatmul.mubr.bf16.gmra.mrb[0].mxu0 %v2225
        %v2823 = vpop.f32.mrb[0].mxu0
        %v2824 = vadd.f32 0.0, %v2823
        %v2825 = vpop.f32.mrb[0].mxu0
        %v2826 = vpop.f32.mrb[0].mxu0
        %v2827 = vadd.f32 0.0, %v2826
        %v2828 = vpop.f32.mrb[0].mxu0
        %2829 = vmatprep.mubr.bf16.mxu0 %v2228
        %2830 = vmatmul.mubr.bf16.gmra.mrb[0].mxu0 %v2227
        %v2831 = vpop.f32.mrb[0].mxu0
        %v2832 = vadd.f32 0.0, %v2831
        %v2833 = vpop.f32.mrb[0].mxu0
        %v2834 = vpop.f32.mrb[0].mxu0
        %v2835 = vadd.f32 0.0, %v2834
        %v2836 = vpop.f32.mrb[0].mxu0
        %2837 = vmatprep.mubr.bf16.mxu0 %v2230
        %2838 = vmatmul.mubr.bf16.gmra.mrb[0].mxu0 %v2229
        %v2839 = vpop.f32.mrb[0].mxu0
        %v2840 = vadd.f32 0.0, %v2839
        %v2841 = vpop.f32.mrb[0].mxu0
        %v2842 = vpop.f32.mrb[0].mxu0
        %v2843 = vadd.f32 0.0, %v2842
        %v2844 = vpop.f32.mrb[0].mxu0
        %2845 = vmatprep.mubr.bf16.mxu0 %v2232
        %2846 = vmatmul.mubr.bf16.gmra.mrb[0].mxu0 %v2231
        %v2847 = vpop.f32.mrb[0].mxu0
        %v2848 = vadd.f32 0.0, %v2847
        %v2849 = vpop.f32.mrb[0].mxu0
        %v2850 = vpop.f32.mrb[0].mxu0
        %v2851 = vadd.f32 0.0, %v2850
        %v2852 = vpop.f32.mrb[0].mxu0
        %2853 = vmatprep.mubr.bf16.mxu0 %v2234
        %2854 = vmatmul.mubr.bf16.gmra.mrb[0].mxu0 %v2233
        %v2855 = vpop.f32.mrb[0].mxu0
        %v2856 = vadd.f32 0.0, %v2855
        %v2857 = vpop.f32.mrb[0].mxu0
        %v2858 = vpop.f32.mrb[0].mxu0
        %v2859 = vadd.f32 0.0, %v2858
        %v2860 = vpop.f32.mrb[0].mxu0
        %2861 = vdwg.mxu0
        %2862 = vmatprep.subr.bf16.mxu0 0
        %2863 = vmatpush1.bf16.msra.mxu0 %v2572
        %2864 = vmatprep.subr.bf16.mxu0 0
        %2865 = vmatpush1.bf16.msra.mxu0 %v2573
        %2866 = vmatprep.subr.bf16.mxu0 0
        %2867 = vmatpush1.bf16.msra.mxu0 %v2574
        %2868 = vmatprep.subr.bf16.mxu0 0
        %2869 = vmatpush1.bf16.msra.mxu0 %v2575
        %2870 = vmatprep.subr.bf16.mxu0 0
        %2871 = vmatpush1.bf16.msra.mxu0 %v2576
        %2872 = vmatprep.subr.bf16.mxu0 0
        %2873 = vmatpush1.bf16.msra.mxu0 %v2577
        %2874 = vmatprep.subr.bf16.mxu0 0
        %2875 = vmatpush1.bf16.msra.mxu0 %v2578
        %2876 = vmatprep.subr.bf16.mxu0 0
        %2877 = vmatpush1.bf16.msra.mxu0 %v2579
        %2878 = vmatprep.subr.bf16.mxu0 0
        %2879 = vmatpush1.bf16.msra.mxu0 %v2580
        %2880 = vmatprep.subr.bf16.mxu0 0
        %2881 = vmatpush1.bf16.msra.mxu0 %v2581
        %2882 = vmatprep.subr.bf16.mxu0 0
        %2883 = vmatpush1.bf16.msra.mxu0 %v2582
        %2884 = vmatprep.subr.bf16.mxu0 0
        %2885 = vmatpush1.bf16.msra.mxu0 %v2583
        %2886 = vmatprep.subr.bf16.mxu0 0
        %2887 = vmatpush1.bf16.msra.mxu0 %v2584
        %2888 = vmatprep.subr.bf16.mxu0 0
        %2889 = vmatpush1.bf16.msra.mxu0 %v2585
        %2890 = vmatprep.subr.bf16.mxu0 0
        %2891 = vmatpush1.bf16.msra.mxu0 %v2586
        %2892 = vmatprep.subr.bf16.mxu0 0
        %2893 = vmatpush1.bf16.msra.mxu0 %v2587
        %2894 = vmatprep.mubr.bf16.mxu0 %v2204
        %2895 = vmatmul.mubr.bf16.gmra.mrb[0].mxu0 %v2203
        %v2896 = vpop.f32.mrb[0].mxu0
        %v2897 = vadd.f32 %v2800, %v2896
        %v2898 = vpop.f32.mrb[0].mxu0
        %v2899 = vpop.f32.mrb[0].mxu0
        %v2900 = vadd.f32 %v2803, %v2899
        %v2901 = vpop.f32.mrb[0].mxu0
        %2902 = vmatprep.mubr.bf16.mxu0 %v2206
        %2903 = vmatmul.mubr.bf16.gmra.mrb[0].mxu0 %v2205
        %v2904 = vpop.f32.mrb[0].mxu0
        %v2905 = vadd.f32 %v2808, %v2904
        %v2906 = vpop.f32.mrb[0].mxu0
        %v2907 = vpop.f32.mrb[0].mxu0
        %v2908 = vadd.f32 %v2811, %v2907
        %v2909 = vpop.f32.mrb[0].mxu0
        %2910 = vmatprep.mubr.bf16.mxu0 %v2208
        %2911 = vmatmul.mubr.bf16.gmra.mrb[0].mxu0 %v2207
        %v2912 = vpop.f32.mrb[0].mxu0
        %v2913 = vadd.f32 %v2816, %v2912
        %v2914 = vpop.f32.mrb[0].mxu0
        %v2915 = vpop.f32.mrb[0].mxu0
        %v2916 = vadd.f32 %v2819, %v2915
        %v2917 = vpop.f32.mrb[0].mxu0
        %2918 = vmatprep.mubr.bf16.mxu0 %v2210
        %2919 = vmatmul.mubr.bf16.gmra.mrb[0].mxu0 %v2209
        %v2920 = vpop.f32.mrb[0].mxu0
        %v2921 = vadd.f32 %v2824, %v2920
        %v2922 = vpop.f32.mrb[0].mxu0
        %v2923 = vpop.f32.mrb[0].mxu0
        %v2924 = vadd.f32 %v2827, %v2923
        %v2925 = vpop.f32.mrb[0].mxu0
        %2926 = vmatprep.mubr.bf16.mxu0 %v2212
        %2927 = vmatmul.mubr.bf16.gmra.mrb[0].mxu0 %v2211
        %v2928 = vpop.f32.mrb[0].mxu0
        %v2929 = vadd.f32 %v2832, %v2928
        %v2930 = vpop.f32.mrb[0].mxu0
        %v2931 = vpop.f32.mrb[0].mxu0
        %v2932 = vadd.f32 %v2835, %v2931
        %v2933 = vpop.f32.mrb[0].mxu0
        %2934 = vmatprep.mubr.bf16.mxu0 %v2214
        %2935 = vmatmul.mubr.bf16.gmra.mrb[0].mxu0 %v2213
        %v2936 = vpop.f32.mrb[0].mxu0
        %v2937 = vadd.f32 %v2840, %v2936
        %v2938 = vpop.f32.mrb[0].mxu0
        %v2939 = vpop.f32.mrb[0].mxu0
        %v2940 = vadd.f32 %v2843, %v2939
        %v2941 = vpop.f32.mrb[0].mxu0
        %2942 = vmatprep.mubr.bf16.mxu0 %v2216
        %2943 = vmatmul.mubr.bf16.gmra.mrb[0].mxu0 %v2215
        %v2944 = vpop.f32.mrb[0].mxu0
        %v2945 = vadd.f32 %v2848, %v2944
        %v2946 = vpop.f32.mrb[0].mxu0
        %v2947 = vpop.f32.mrb[0].mxu0
        %v2948 = vadd.f32 %v2851, %v2947
        %v2949 = vpop.f32.mrb[0].mxu0
        %2950 = vmatprep.mubr.bf16.mxu0 %v2218
        %2951 = vmatmul.mubr.bf16.gmra.mrb[0].mxu0 %v2217
        %v2952 = vpop.f32.mrb[0].mxu0
        %v2953 = vadd.f32 %v2856, %v2952
        %v2954 = vpop.f32.mrb[0].mxu0
        %v2955 = vpop.f32.mrb[0].mxu0
        %v2956 = vadd.f32 %v2859, %v2955
        %v2957 = vpop.f32.mrb[0].mxu0
        %2958 = vdwg.mxu0
        %v2959 = vadd.f32 %v2749, %v2897
        %v2960 = vadd.f32 %v2750, %v2900
        %v2961 = vadd.f32 %v2751, %v2905
        %v2962 = vadd.f32 %v2752, %v2908
        %v2963 = vadd.f32 %v2753, %v2913
        %v2964 = vadd.f32 %v2754, %v2916
        %v2965 = vadd.f32 %v2755, %v2921
        %v2966 = vadd.f32 %v2756, %v2924
        %v2967 = vadd.f32 %v2757, %v2929
        %v2968 = vadd.f32 %v2758, %v2932
        %v2969 = vadd.f32 %v2759, %v2937
        %v2970 = vadd.f32 %v2760, %v2940
        %v2971 = vadd.f32 %v2761, %v2945
        %v2972 = vadd.f32 %v2762, %v2948
        %v2973 = vadd.f32 %v2763, %v2953
        %v2974 = vadd.f32 %v2764, %v2956
        %2975 = vst.msk [vmem:[%s11] sm:$0xff] %vm776, %v2959
        %2976 = vst.msk [vmem:[%s11 + $0x8] sm:$0xff] %vm776, %v2960
        %2977 = vst.msk [vmem:[%s11 + $0x10] sm:$0xff] %vm776, %v2961
        %2978 = vst.msk [vmem:[%s11 + $0x18] sm:$0xff] %vm776, %v2962
        %2979 = vst.msk [vmem:[%s11 + $0x20] sm:$0xff] %vm776, %v2963
        %2980 = vst.msk [vmem:[%s11 + $0x28] sm:$0xff] %vm776, %v2964
        %2981 = vst.msk [vmem:[%s11 + $0x30] sm:$0xff] %vm776, %v2965
        %2982 = vst.msk [vmem:[%s11 + $0x38] sm:$0xff] %vm776, %v2966
        %2983 = vst.msk [vmem:[%s11 + $0x40] sm:$0xff] %vm776, %v2967
        %2984 = vst.msk [vmem:[%s11 + $0x48] sm:$0xff] %vm776, %v2968
        %2985 = vst.msk [vmem:[%s11 + $0x50] sm:$0xff] %vm776, %v2969
        %2986 = vst.msk [vmem:[%s11 + $0x58] sm:$0xff] %vm776, %v2970
        %2987 = vst.msk [vmem:[%s11 + $0x60] sm:$0xff] %vm776, %v2971
        %2988 = vst.msk [vmem:[%s11 + $0x68] sm:$0xff] %vm776, %v2972
        %2989 = vst.msk [vmem:[%s11 + $0x70] sm:$0xff] %vm776, %v2973
        %2990 = vst.msk [vmem:[%s11 + $0x78] sm:$0xff] %vm776, %v2974
        // Predicated region
        $region187: #{p2pcse_dc_gradient.1} parent=165 // pred_check
          %p2991 = pneg %p286
        $region188: #{p2pcse_dc_gradient.1} parent=165 // pred_check_branch
          %2993 = sbr.rel (%p2991) target = $region190
        $region189: #{p2pcse_dc_gradient.1} parent=165 // pred_region
          _
        $region190: #{p2pcse_dc_gradient.1} parent=165 // pred_fallthru
          _
        // Predicated region
        $region191: #{p2pcse_dc_gradient.1} parent=165 // pred_check
          %p2994 = pneg %p307
        $region192: #{p2pcse_dc_gradient.1} parent=165 // pred_check_branch
          %2996 = sbr.rel (%p2994) target = $region194
        $region193: #{p2pcse_dc_gradient.1} parent=165 // pred_region
          _
        $region194: #{p2pcse_dc_gradient.1} parent=165 // pred_fallthru
          _
        // Predicated region
        $region195: #{p2pcse_dc_gradient.1} parent=165 // pred_check
          %p2997 = pneg %p286
        $region196: #{p2pcse_dc_gradient.1} parent=165 // pred_check_branch
          %2999 = sbr.rel (%p2997) target = $region198
        $region197: #{p2pcse_dc_gradient.1} parent=165 // pred_region
          _
        $region198: #{p2pcse_dc_gradient.1} parent=165 // pred_fallthru
          _
        // Predicated region
        $region199: #{p2pcse_dc_gradient.1} parent=165 // pred_check
          %p3000 = pneg %p307
        $region200: #{p2pcse_dc_gradient.1} parent=165 // pred_check_branch
          %3002 = sbr.rel (%p3000) target = $region202
        $region201: #{p2pcse_dc_gradient.1} parent=165 // pred_region
          _
        $region202: #{p2pcse_dc_gradient.1} parent=165 // pred_fallthru
          _
      $region166: #{p2pcse_dc_gradient.1} parent=5 // pred_fallthru
        _
      %p3003 = scmp.le.s32.totalorder 2, %s18
      // Predicated region
      $region203: #{p2pcse_dc_gradient.1} parent=5 // pred_check
        %p3004 = pneg %p3003
      $region204: #{p2pcse_dc_gradient.1} parent=5 // pred_check_branch
        %3006 = sbr.rel (%p3004) target = $region206
      $region205: #{p2pcse_dc_gradient.1} parent=5 // pred_region
        %s3007 = ssub.s32 %s18, 2
      $region206: #{p2pcse_dc_gradient.1} parent=5 // pred_fallthru
        _
    $region6: #{p2pcse_dc_gradient.1} parent=1 // loop_footer
      %s22 = sadd.s32 1, %s18
    $region7: #{p2pcse_dc_gradient.1} parent=1 // loop_footer_branch
      %17 = sbr.rel target = $region3
    $region8: #{p2pcse_dc_gradient.1} parent=1 // loop_exit
      _

</llo_original>
